<compile_context>
chip_gen: v7x
topology: tpu7x:2x2x1
jax: 0.10.0
libtpu: 0.0.40
codegen_flags: <defaults>
</compile_context>

<pallas_src>
import functools

import jax
import jax.numpy as jnp
from jax import lax
from jax.experimental import pallas as pl
from jax.experimental.pallas import tpu as pltpu


def _round_up(v, m):
    return (v + m - 1) // m * m


# ----------------------------------------------------------------------------
# Fused kernel: per-step input projection + LSTM recurrence + ReLU/Linear
# epilogue (scalar-weighted slab FMAs).
# ----------------------------------------------------------------------------
def _make_stgcn_kernel(F, T_in, T_out, Npad):
    Hp = 3 * Npad  # lane-padded hidden size; every gate/r-slab is 128-aligned

    def kernel(x_ref, wx_ref, wh_ref, b_ref, wlin_ref, blin_ref, o_ref):
        Bt = o_ref.shape[0]

        wx = wx_ref[...]                 # (IN, 4*Hp)  bf16, resident
        wh = wh_ref[...]                 # (Hp, 4*Hp)  bf16, resident
        b = b_ref[...]                   # (1, 4*Hp)   f32 (bias_ih + bias_hh)

        def sig(v):                      # sigmoid == 0.5*(tanh(v/2)+1): 1 EUP op
            return 0.5 * jnp.tanh(0.5 * v) + 0.5

        h = jnp.zeros((Bt, Hp), jnp.float32)
        c = jnp.zeros((Bt, Hp), jnp.float32)
        accs = [jnp.zeros((Bt, Npad), jnp.float32) for _ in range(T_out)]

        # F == T_in is small & static -> fully unrolled; only h @ Wh sits on
        # the serial chain, the x projection and epilogue hide under it.
        for t in range(F):
            gates = (jnp.dot(x_ref[t], wx, preferred_element_type=jnp.float32)
                     + jnp.dot(h.astype(jnp.bfloat16), wh,
                               preferred_element_type=jnp.float32)
                     + b)                                   # (Bt, 4*Hp) f32
            i_g = sig(gates[:, 0 * Hp:1 * Hp])
            f_g = sig(gates[:, 1 * Hp:2 * Hp])
            g_g = jnp.tanh(gates[:, 2 * Hp:3 * Hp])
            o_g = sig(gates[:, 3 * Hp:4 * Hp])
            c = f_g * c + i_g * g_g
            h = jnp.tanh(o_g * jnp.tanh(c))   # extra tanh, fed back next step

            # Fused ReLU + Linear: the (B,3N,F)->(B,N,3T_in) reshape is
            # absorbed by the r-major hidden layout, so each (t, r, j)
            # contribution is one scalar-weighted VPU FMA on a lane-aligned
            # (Bt, Npad) slab.
            relu_h = jnp.maximum(h, 0.0)
            for r in range(3):
                slab = relu_h[:, r * Npad:(r + 1) * Npad]
                for j in range(T_out):
                    w = wlin_ref[(r * T_in + t) * T_out + j]   # SMEM scalar
                    accs[j] = accs[j] + slab * w

        for j in range(T_out):           # lane-dense, aligned, unmasked stores
            o_ref[:, j * Npad:(j + 1) * Npad] = accs[j] + blin_ref[j]

    return kernel


# ----------------------------------------------------------------------------
# Wrapper
# ----------------------------------------------------------------------------
@functools.partial(jax.jit, static_argnames=("timesteps_output",))
def stgcn_forward(A_hat, X, params, *, timesteps_output):
    del A_hat  # unused in the original forward pass as well
    B, N, T_in, F = X.shape
    assert F == T_in, "module requires num_features == timesteps_input"
    IN = N * T_in           # LSTM input size
    H = 3 * N               # LSTM hidden size
    T_out = timesteps_output

    (wxi, wxf, wxg, wxo,
     whi, whf, whg, who,
     bi, bf, bg, bo,
     w_lin, b_lin) = params

    f32, bf16 = jnp.float32, jnp.bfloat16

    Npad = _round_up(N, 128)     # lane-pad each r block of the hidden state
    Hp = 3 * Npad
    OUTW = T_out * Npad          # lane-dense output width (multiple of 128)

    # Hidden re-ordering: old index h = 3n + r  ->  new index r*Npad + n.
    # Padded positions carry zero weights/bias, so they stay inert.
    old = jnp.arange(H)
    new_idx = (old % 3) * Npad + (old // 3)

    def remap_cols(w):                               # (.., H) -> (.., Hp)
        out = jnp.zeros(w.shape[:-1] + (Hp,), f32)
        return out.at[:, new_idx].set(w.astype(f32))

    def remap_rows_cols(w):                          # (H, H) -> (Hp, Hp)
        wc = remap_cols(w)
        out = jnp.zeros((Hp, Hp), f32)
        return out.at[new_idx, :].set(wc)

    # Concatenated gate weights/bias (gate order i, f, g, o); bf16 MXU operands.
    wx_cat = jnp.concatenate(
        [remap_cols(w) for w in (wxi, wxf, wxg, wxo)], axis=1).astype(bf16)
    wh_cat = jnp.concatenate(
        [remap_rows_cols(w) for w in (whi, whf, whg, who)], axis=1).astype(bf16)
    b_cat = jnp.concatenate(
        [remap_cols(w) for w in (bi, bf, bg, bo)], axis=1)        # (1,4Hp) f32

    # Linear weights/bias as SMEM scalars for the slab-FMA epilogue.
    wlin_flat = w_lin.astype(f32).reshape(-1)        # (3*T_in*T_out,)
    blin_flat = b_lin.astype(f32).reshape(-1)        # (T_out,)

    # Batch tiling: multiple of 8 sublanes; ~256 fills MXU rows on v6e/v7x.
    Bp0 = max(8, _round_up(B, 8))
    Bt = Bp0 if Bp0 <= 256 else 256
    Bp = _round_up(Bp0, Bt)

    # out1 = X.reshape(B, N*T, F).permute(2, 0, 1) -> (F, B, IN); pad batch.
    # (Separate XLA relayout of X; fine while X is small.)
    x_seq = jnp.transpose(X.reshape(B, IN, F), (2, 0, 1))
    x_seq = jnp.pad(x_seq, ((0, 0), (0, Bp - B), (0, 0))).astype(bf16)

    kernel = _make_stgcn_kernel(F, T_in, T_out, Npad)

    # Explicit VMEM budget (bf16 weights resident; x/out pipelined per tile).
    vmem_need = (2 * (F * Bt * IN * 2 + Bt * OUTW * 4)
                 + 2 * (IN * 4 * Hp * 2 + Hp * 4 * Hp * 2 + 4 * Hp * 4))
    vmem_limit = int(min(max(vmem_need + (4 << 20), 16 << 20), 56 << 20))

    res = pl.pallas_call(
        kernel,
        out_shape=jax.ShapeDtypeStruct((Bp, OUTW), jnp.float32),
        grid=(Bp // Bt,),
        in_specs=[
            pl.BlockSpec((F, Bt, IN), lambda i: (0, i, 0)),     # x, batch-tiled
            pl.BlockSpec((IN, 4 * Hp), lambda i: (0, 0)),       # Wx_cat (resident)
            pl.BlockSpec((Hp, 4 * Hp), lambda i: (0, 0)),       # Wh_cat (resident)
            pl.BlockSpec((1, 4 * Hp), lambda i: (0, 0)),        # bias ih+hh
            pl.BlockSpec(memory_space=pltpu.MemorySpace.SMEM),  # Linear weights
            pl.BlockSpec(memory_space=pltpu.MemorySpace.SMEM),  # Linear bias
        ],
        out_specs=pl.BlockSpec((Bt, OUTW), lambda i: (i, 0)),
        compiler_params=pltpu.CompilerParams(
            dimension_semantics=("parallel",),
            vmem_limit_bytes=vmem_limit),
    )(x_seq, wx_cat, wh_cat, b_cat, wlin_flat, blin_flat)

    # (Bp, T_out*Npad) -> (B, N, T_out)
    out = res[:B].reshape(B, T_out, Npad)[:, :, :N]
    return jnp.transpose(out, (0, 2, 1))


# ----------------------------------------------------------------------------
# Pure-JAX reference (mirrors the PyTorch forward) for a correctness check.
# ----------------------------------------------------------------------------
def stgcn_reference(A_hat, X, params, *, timesteps_output):
    del A_hat
    B, N, T_in, F = X.shape
    IN, H = N * T_in, 3 * N
    (wxi, wxf, wxg, wxo, whi, whf, whg, who,
     bi, bf, bg, bo, w_lin, b_lin) = params

    x_seq = jnp.transpose(X.reshape(B, IN, F), (2, 0, 1))

    def step(carry, x):
        h, c = carry
        i_g = jax.nn.sigmoid(x @ wxi + h @ whi + bi)
        f_g = jax.nn.sigmoid(x @ wxf + h @ whf + bf)
        g_g = jnp.tanh(x @ wxg + h @ whg + bg)
        o_g = jax.nn.sigmoid(x @ wxo + h @ who + bo)
        c_new = f_g * c + i_g * g_g
        h_new = jnp.tanh(o_g * jnp.tanh(c_new))
        return (h_new, c_new), h_new

    h0 = jnp.zeros((B, H), jnp.float32)
    c0 = jnp.zeros((B, H), jnp.float32)
    _, hs = lax.scan(step, (h0, c0), x_seq)          # (F, B, H)
    out2 = jnp.transpose(hs, (1, 2, 0)).reshape(B, N, 3 * T_in)
    return jnp.maximum(out2, 0.0) @ w_lin + b_lin[0]


def init_params(key, num_nodes, features, timesteps_input, timesteps_output):
    N, T_in, T_out = num_nodes, timesteps_input, timesteps_output
    IN, H = N * features, 3 * N
    k_lstm = 1.0 / jnp.sqrt(H)
    k_lin = 1.0 / jnp.sqrt(3.0 * T_in)
    keys = jax.random.split(key, 16)

    def u(k, shape, bound):
        return jax.random.uniform(k, shape, jnp.float32, -bound, bound)

    wxi, wxf, wxg, wxo = (u(keys[i], (IN, H), k_lstm) for i in range(4))
    whi, whf, whg, who = (u(keys[4 + i], (H, H), k_lstm) for i in range(4))
    # combined bias_ih + bias_hh of the torch LSTMCell, per gate
    bi, bf, bg, bo = (u(keys[8 + i], (1, H), 2.0 * k_lstm) for i in range(4))
    w_lin = u(keys[12], (3 * T_in, T_out), k_lin)     # Linear weight, transposed
    b_lin = u(keys[13], (1, T_out), k_lin)
    return (wxi, wxf, wxg, wxo, whi, whf, whg, who,
            bi, bf, bg, bo, w_lin, b_lin)


if __name__ == "__main__":
    # Small shapes.  The module requires features == timesteps_input.
    B, N = 2, 8
    T_in = 4
    features = T_in
    T_out = 3

    key = jax.random.PRNGKey(0)
    k_x, k_a, k_p = jax.random.split(key, 3)
    X = jax.random.normal(k_x, (B, N, T_in, features), jnp.float32)
    A_hat = jax.random.normal(k_a, (N, N), jnp.float32)  # unused by forward
    params = init_params(k_p, N, features, T_in, T_out)

    out = stgcn_forward(A_hat, X, params, timesteps_output=T_out)
    out = jax.block_until_ready(out)

    ref = stgcn_reference(A_hat, X, params, timesteps_output=T_out)
    assert out.shape == (B, N, T_out), out.shape
    # bf16 MXU operands (f32 accumulation / state) -> slightly looser tolerance.
    assert jnp.allclose(out, ref, atol=5e-2, rtol=5e-2), float(
        jnp.max(jnp.abs(out - ref)))

    print("KERNEL_OK")
</pallas_src>

<mosaic_0001>
module attributes {stable_mosaic.version = 11 : i64} {
  func.func @kernel(%arg0: i32, %arg1: memref<4x8x32xbf16, #tpu.memory_space<vmem>>, %arg2: memref<32x1536xbf16, #tpu.memory_space<vmem>>, %arg3: memref<384x1536xbf16, #tpu.memory_space<vmem>>, %arg4: memref<1x1536xf32, #tpu.memory_space<vmem>>, %arg5: memref<36xf32, #tpu.memory_space<smem>>, %arg6: memref<3xf32, #tpu.memory_space<smem>>, %arg7: memref<8x384xf32, #tpu.memory_space<vmem>>) attributes {dimension_semantics = [#tpu.dimension_semantics<parallel>], iteration_bounds = array<i64: 1>, scalar_prefetch = 0 : i64, scratch_operands = 0 : i64, tpu.core_type = #tpu.core_type<tc>, window_params = [{transform_indices = @transform_0, window_bounds = array<i64: 4, 8, 32>}, {pipeline_mode = #tpu.pipeline_mode<synchronous>, transform_indices = @transform_1, window_bounds = array<i64: 32, 1536>}, {pipeline_mode = #tpu.pipeline_mode<synchronous>, transform_indices = @transform_2, window_bounds = array<i64: 384, 1536>}, {pipeline_mode = #tpu.pipeline_mode<synchronous>, transform_indices = @transform_3, window_bounds = array<i64: 1, 1536>}, {transform_indices = @transform_4, window_bounds = array<i64: 36>}, {transform_indices = @transform_5, window_bounds = array<i64: 3>}, {transform_indices = @transform_6, window_bounds = array<i64: 8, 384>}]} {
    %c0 = arith.constant 0 : index
    %c0_0 = arith.constant 0 : index
    %0 = vector.load %arg2[%c0, %c0_0] : memref<32x1536xbf16, #tpu.memory_space<vmem>>, vector<32x1536xbf16>
    %c0_1 = arith.constant 0 : index
    %c0_2 = arith.constant 0 : index
    %1 = vector.load %arg3[%c0_1, %c0_2] : memref<384x1536xbf16, #tpu.memory_space<vmem>>, vector<384x1536xbf16>
    %c0_3 = arith.constant 0 : index
    %c0_4 = arith.constant 0 : index
    %2 = vector.load %arg4[%c0_3, %c0_4] : memref<1x1536xf32, #tpu.memory_space<vmem>>, vector<1x1536xf32>
    %cst = arith.constant 0.000000e+00 : f32
    %3 = vector.broadcast %cst : f32 to vector<8x384xf32>
    %cst_5 = arith.constant 0.000000e+00 : f32
    %4 = vector.broadcast %cst_5 : f32 to vector<8x384xf32>
    %cst_6 = arith.constant 0.000000e+00 : f32
    %5 = vector.broadcast %cst_6 : f32 to vector<8x128xf32>
    %cst_7 = arith.constant 0.000000e+00 : f32
    %6 = vector.broadcast %cst_7 : f32 to vector<8x128xf32>
    %cst_8 = arith.constant 0.000000e+00 : f32
    %7 = vector.broadcast %cst_8 : f32 to vector<8x128xf32>
    %c0_9 = arith.constant 0 : index
    %c0_10 = arith.constant 0 : index
    %c0_11 = arith.constant 0 : index
    %8 = vector.load %arg1[%c0_9, %c0_10, %c0_11] : memref<4x8x32xbf16, #tpu.memory_space<vmem>>, vector<1x8x32xbf16>
    %9 = vector.shape_cast %8 : vector<1x8x32xbf16> to vector<8x32xbf16>
    %cst_12 = arith.constant dense<0.000000e+00> : vector<8x1536xf32>
    %10 = tpu.matmul %9, %0, %cst_12 {dimension_numbers = #tpu.dot_dimension_numbers<[1], [0], [0], [1], [0, 0, 1, 1], [], []>} : vector<8x32xbf16>, vector<32x1536xbf16>, vector<8x1536xf32> -> vector<8x1536xf32>
    %11 = arith.truncf %3 : vector<8x384xf32> to vector<8x384xbf16>
    %cst_13 = arith.constant dense<0.000000e+00> : vector<8x1536xf32>
    %12 = tpu.matmul %11, %1, %cst_13 {dimension_numbers = #tpu.dot_dimension_numbers<[1], [0], [0], [1], [0, 0, 1, 1], [], []>} : vector<8x384xbf16>, vector<384x1536xbf16>, vector<8x1536xf32> -> vector<8x1536xf32>
    %13 = arith.addf %10, %12 : vector<8x1536xf32>
    %14 = vector.broadcast %2 : vector<1x1536xf32> to vector<8x1536xf32>
    %15 = arith.addf %13, %14 : vector<8x1536xf32>
    %16 = vector.extract_strided_slice %15 {offsets = [0, 0], sizes = [8, 384], strides = [1, 1]} : vector<8x1536xf32> to vector<8x384xf32>
    %cst_14 = arith.constant 5.000000e-01 : f32
    %17 = vector.broadcast %cst_14 : f32 to vector<8x384xf32>
    %18 = arith.mulf %17, %16 : vector<8x384xf32>
    %19 = math.tanh %18 : vector<8x384xf32>
    %cst_15 = arith.constant 5.000000e-01 : f32
    %20 = vector.broadcast %cst_15 : f32 to vector<8x384xf32>
    %21 = arith.mulf %20, %19 : vector<8x384xf32>
    %cst_16 = arith.constant 5.000000e-01 : f32
    %22 = vector.broadcast %cst_16 : f32 to vector<8x384xf32>
    %23 = arith.addf %21, %22 : vector<8x384xf32>
    %24 = vector.extract_strided_slice %15 {offsets = [0, 384], sizes = [8, 384], strides = [1, 1]} : vector<8x1536xf32> to vector<8x384xf32>
    %cst_17 = arith.constant 5.000000e-01 : f32
    %25 = vector.broadcast %cst_17 : f32 to vector<8x384xf32>
    %26 = arith.mulf %25, %24 : vector<8x384xf32>
    %27 = math.tanh %26 : vector<8x384xf32>
    %cst_18 = arith.constant 5.000000e-01 : f32
    %28 = vector.broadcast %cst_18 : f32 to vector<8x384xf32>
    %29 = arith.mulf %28, %27 : vector<8x384xf32>
    %cst_19 = arith.constant 5.000000e-01 : f32
    %30 = vector.broadcast %cst_19 : f32 to vector<8x384xf32>
    %31 = arith.addf %29, %30 : vector<8x384xf32>
    %32 = vector.extract_strided_slice %15 {offsets = [0, 768], sizes = [8, 384], strides = [1, 1]} : vector<8x1536xf32> to vector<8x384xf32>
    %33 = math.tanh %32 : vector<8x384xf32>
    %34 = vector.extract_strided_slice %15 {offsets = [0, 1152], sizes = [8, 384], strides = [1, 1]} : vector<8x1536xf32> to vector<8x384xf32>
    %cst_20 = arith.constant 5.000000e-01 : f32
    %35 = vector.broadcast %cst_20 : f32 to vector<8x384xf32>
    %36 = arith.mulf %35, %34 : vector<8x384xf32>
    %37 = math.tanh %36 : vector<8x384xf32>
    %cst_21 = arith.constant 5.000000e-01 : f32
    %38 = vector.broadcast %cst_21 : f32 to vector<8x384xf32>
    %39 = arith.mulf %38, %37 : vector<8x384xf32>
    %cst_22 = arith.constant 5.000000e-01 : f32
    %40 = vector.broadcast %cst_22 : f32 to vector<8x384xf32>
    %41 = arith.addf %39, %40 : vector<8x384xf32>
    %42 = arith.mulf %31, %4 : vector<8x384xf32>
    %43 = arith.mulf %23, %33 : vector<8x384xf32>
    %44 = arith.addf %42, %43 : vector<8x384xf32>
    %45 = math.tanh %44 : vector<8x384xf32>
    %46 = arith.mulf %41, %45 : vector<8x384xf32>
    %47 = math.tanh %46 : vector<8x384xf32>
    %cst_23 = arith.constant 0.000000e+00 : f32
    %48 = vector.broadcast %cst_23 : f32 to vector<8x384xf32>
    %49 = arith.maximumf %47, %48 : vector<8x384xf32>
    %50 = vector.extract_strided_slice %49 {offsets = [0, 0], sizes = [8, 128], strides = [1, 1]} : vector<8x384xf32> to vector<8x128xf32>
    %c0_24 = arith.constant 0 : index
    %51 = memref.load %arg5[%c0_24] : memref<36xf32, #tpu.memory_space<smem>>
    %52 = vector.broadcast %51 : f32 to vector<8x128xf32>
    %53 = arith.mulf %50, %52 : vector<8x128xf32>
    %54 = arith.addf %5, %53 : vector<8x128xf32>
    %c1 = arith.constant 1 : index
    %55 = memref.load %arg5[%c1] : memref<36xf32, #tpu.memory_space<smem>>
    %56 = vector.broadcast %55 : f32 to vector<8x128xf32>
    %57 = arith.mulf %50, %56 : vector<8x128xf32>
    %58 = arith.addf %6, %57 : vector<8x128xf32>
    %c2 = arith.constant 2 : index
    %59 = memref.load %arg5[%c2] : memref<36xf32, #tpu.memory_space<smem>>
    %60 = vector.broadcast %59 : f32 to vector<8x128xf32>
    %61 = arith.mulf %50, %60 : vector<8x128xf32>
    %62 = arith.addf %7, %61 : vector<8x128xf32>
    %63 = vector.extract_strided_slice %49 {offsets = [0, 128], sizes = [8, 128], strides = [1, 1]} : vector<8x384xf32> to vector<8x128xf32>
    %c12 = arith.constant 12 : index
    %64 = memref.load %arg5[%c12] : memref<36xf32, #tpu.memory_space<smem>>
    %65 = vector.broadcast %64 : f32 to vector<8x128xf32>
    %66 = arith.mulf %63, %65 : vector<8x128xf32>
    %67 = arith.addf %54, %66 : vector<8x128xf32>
    %c13 = arith.constant 13 : index
    %68 = memref.load %arg5[%c13] : memref<36xf32, #tpu.memory_space<smem>>
    %69 = vector.broadcast %68 : f32 to vector<8x128xf32>
    %70 = arith.mulf %63, %69 : vector<8x128xf32>
    %71 = arith.addf %58, %70 : vector<8x128xf32>
    %c14 = arith.constant 14 : index
    %72 = memref.load %arg5[%c14] : memref<36xf32, #tpu.memory_space<smem>>
    %73 = vector.broadcast %72 : f32 to vector<8x128xf32>
    %74 = arith.mulf %63, %73 : vector<8x128xf32>
    %75 = arith.addf %62, %74 : vector<8x128xf32>
    %76 = vector.extract_strided_slice %49 {offsets = [0, 256], sizes = [8, 128], strides = [1, 1]} : vector<8x384xf32> to vector<8x128xf32>
    %c24 = arith.constant 24 : index
    %77 = memref.load %arg5[%c24] : memref<36xf32, #tpu.memory_space<smem>>
    %78 = vector.broadcast %77 : f32 to vector<8x128xf32>
    %79 = arith.mulf %76, %78 : vector<8x128xf32>
    %80 = arith.addf %67, %79 : vector<8x128xf32>
    %c25 = arith.constant 25 : index
    %81 = memref.load %arg5[%c25] : memref<36xf32, #tpu.memory_space<smem>>
    %82 = vector.broadcast %81 : f32 to vector<8x128xf32>
    %83 = arith.mulf %76, %82 : vector<8x128xf32>
    %84 = arith.addf %71, %83 : vector<8x128xf32>
    %c26 = arith.constant 26 : index
    %85 = memref.load %arg5[%c26] : memref<36xf32, #tpu.memory_space<smem>>
    %86 = vector.broadcast %85 : f32 to vector<8x128xf32>
    %87 = arith.mulf %76, %86 : vector<8x128xf32>
    %88 = arith.addf %75, %87 : vector<8x128xf32>
    %c1_25 = arith.constant 1 : index
    %c0_26 = arith.constant 0 : index
    %c0_27 = arith.constant 0 : index
    %89 = vector.load %arg1[%c1_25, %c0_26, %c0_27] : memref<4x8x32xbf16, #tpu.memory_space<vmem>>, vector<1x8x32xbf16>
    %90 = vector.shape_cast %89 : vector<1x8x32xbf16> to vector<8x32xbf16>
    %cst_28 = arith.constant dense<0.000000e+00> : vector<8x1536xf32>
    %91 = tpu.matmul %90, %0, %cst_28 {dimension_numbers = #tpu.dot_dimension_numbers<[1], [0], [0], [1], [0, 0, 1, 1], [], []>} : vector<8x32xbf16>, vector<32x1536xbf16>, vector<8x1536xf32> -> vector<8x1536xf32>
    %92 = arith.truncf %47 : vector<8x384xf32> to vector<8x384xbf16>
    %cst_29 = arith.constant dense<0.000000e+00> : vector<8x1536xf32>
    %93 = tpu.matmul %92, %1, %cst_29 {dimension_numbers = #tpu.dot_dimension_numbers<[1], [0], [0], [1], [0, 0, 1, 1], [], []>} : vector<8x384xbf16>, vector<384x1536xbf16>, vector<8x1536xf32> -> vector<8x1536xf32>
    %94 = arith.addf %91, %93 : vector<8x1536xf32>
    %95 = vector.broadcast %2 : vector<1x1536xf32> to vector<8x1536xf32>
    %96 = arith.addf %94, %95 : vector<8x1536xf32>
    %97 = vector.extract_strided_slice %96 {offsets = [0, 0], sizes = [8, 384], strides = [1, 1]} : vector<8x1536xf32> to vector<8x384xf32>
    %cst_30 = arith.constant 5.000000e-01 : f32
    %98 = vector.broadcast %cst_30 : f32 to vector<8x384xf32>
    %99 = arith.mulf %98, %97 : vector<8x384xf32>
    %100 = math.tanh %99 : vector<8x384xf32>
    %cst_31 = arith.constant 5.000000e-01 : f32
    %101 = vector.broadcast %cst_31 : f32 to vector<8x384xf32>
    %102 = arith.mulf %101, %100 : vector<8x384xf32>
    %cst_32 = arith.constant 5.000000e-01 : f32
    %103 = vector.broadcast %cst_32 : f32 to vector<8x384xf32>
    %104 = arith.addf %102, %103 : vector<8x384xf32>
    %105 = vector.extract_strided_slice %96 {offsets = [0, 384], sizes = [8, 384], strides = [1, 1]} : vector<8x1536xf32> to vector<8x384xf32>
    %cst_33 = arith.constant 5.000000e-01 : f32
    %106 = vector.broadcast %cst_33 : f32 to vector<8x384xf32>
    %107 = arith.mulf %106, %105 : vector<8x384xf32>
    %108 = math.tanh %107 : vector<8x384xf32>
    %cst_34 = arith.constant 5.000000e-01 : f32
    %109 = vector.broadcast %cst_34 : f32 to vector<8x384xf32>
    %110 = arith.mulf %109, %108 : vector<8x384xf32>
    %cst_35 = arith.constant 5.000000e-01 : f32
    %111 = vector.broadcast %cst_35 : f32 to vector<8x384xf32>
    %112 = arith.addf %110, %111 : vector<8x384xf32>
    %113 = vector.extract_strided_slice %96 {offsets = [0, 768], sizes = [8, 384], strides = [1, 1]} : vector<8x1536xf32> to vector<8x384xf32>
    %114 = math.tanh %113 : vector<8x384xf32>
    %115 = vector.extract_strided_slice %96 {offsets = [0, 1152], sizes = [8, 384], strides = [1, 1]} : vector<8x1536xf32> to vector<8x384xf32>
    %cst_36 = arith.constant 5.000000e-01 : f32
    %116 = vector.broadcast %cst_36 : f32 to vector<8x384xf32>
    %117 = arith.mulf %116, %115 : vector<8x384xf32>
    %118 = math.tanh %117 : vector<8x384xf32>
    %cst_37 = arith.constant 5.000000e-01 : f32
    %119 = vector.broadcast %cst_37 : f32 to vector<8x384xf32>
    %120 = arith.mulf %119, %118 : vector<8x384xf32>
    %cst_38 = arith.constant 5.000000e-01 : f32
    %121 = vector.broadcast %cst_38 : f32 to vector<8x384xf32>
    %122 = arith.addf %120, %121 : vector<8x384xf32>
    %123 = arith.mulf %112, %44 : vector<8x384xf32>
    %124 = arith.mulf %104, %114 : vector<8x384xf32>
    %125 = arith.addf %123, %124 : vector<8x384xf32>
    %126 = math.tanh %125 : vector<8x384xf32>
    %127 = arith.mulf %122, %126 : vector<8x384xf32>
    %128 = math.tanh %127 : vector<8x384xf32>
    %cst_39 = arith.constant 0.000000e+00 : f32
    %129 = vector.broadcast %cst_39 : f32 to vector<8x384xf32>
    %130 = arith.maximumf %128, %129 : vector<8x384xf32>
    %131 = vector.extract_strided_slice %130 {offsets = [0, 0], sizes = [8, 128], strides = [1, 1]} : vector<8x384xf32> to vector<8x128xf32>
    %c3 = arith.constant 3 : index
    %132 = memref.load %arg5[%c3] : memref<36xf32, #tpu.memory_space<smem>>
    %133 = vector.broadcast %132 : f32 to vector<8x128xf32>
    %134 = arith.mulf %131, %133 : vector<8x128xf32>
    %135 = arith.addf %80, %134 : vector<8x128xf32>
    %c4 = arith.constant 4 : index
    %136 = memref.load %arg5[%c4] : memref<36xf32, #tpu.memory_space<smem>>
    %137 = vector.broadcast %136 : f32 to vector<8x128xf32>
    %138 = arith.mulf %131, %137 : vector<8x128xf32>
    %139 = arith.addf %84, %138 : vector<8x128xf32>
    %c5 = arith.constant 5 : index
    %140 = memref.load %arg5[%c5] : memref<36xf32, #tpu.memory_space<smem>>
    %141 = vector.broadcast %140 : f32 to vector<8x128xf32>
    %142 = arith.mulf %131, %141 : vector<8x128xf32>
    %143 = arith.addf %88, %142 : vector<8x128xf32>
    %144 = vector.extract_strided_slice %130 {offsets = [0, 128], sizes = [8, 128], strides = [1, 1]} : vector<8x384xf32> to vector<8x128xf32>
    %c15 = arith.constant 15 : index
    %145 = memref.load %arg5[%c15] : memref<36xf32, #tpu.memory_space<smem>>
    %146 = vector.broadcast %145 : f32 to vector<8x128xf32>
    %147 = arith.mulf %144, %146 : vector<8x128xf32>
    %148 = arith.addf %135, %147 : vector<8x128xf32>
    %c16 = arith.constant 16 : index
    %149 = memref.load %arg5[%c16] : memref<36xf32, #tpu.memory_space<smem>>
    %150 = vector.broadcast %149 : f32 to vector<8x128xf32>
    %151 = arith.mulf %144, %150 : vector<8x128xf32>
    %152 = arith.addf %139, %151 : vector<8x128xf32>
    %c17 = arith.constant 17 : index
    %153 = memref.load %arg5[%c17] : memref<36xf32, #tpu.memory_space<smem>>
    %154 = vector.broadcast %153 : f32 to vector<8x128xf32>
    %155 = arith.mulf %144, %154 : vector<8x128xf32>
    %156 = arith.addf %143, %155 : vector<8x128xf32>
    %157 = vector.extract_strided_slice %130 {offsets = [0, 256], sizes = [8, 128], strides = [1, 1]} : vector<8x384xf32> to vector<8x128xf32>
    %c27 = arith.constant 27 : index
    %158 = memref.load %arg5[%c27] : memref<36xf32, #tpu.memory_space<smem>>
    %159 = vector.broadcast %158 : f32 to vector<8x128xf32>
    %160 = arith.mulf %157, %159 : vector<8x128xf32>
    %161 = arith.addf %148, %160 : vector<8x128xf32>
    %c28 = arith.constant 28 : index
    %162 = memref.load %arg5[%c28] : memref<36xf32, #tpu.memory_space<smem>>
    %163 = vector.broadcast %162 : f32 to vector<8x128xf32>
    %164 = arith.mulf %157, %163 : vector<8x128xf32>
    %165 = arith.addf %152, %164 : vector<8x128xf32>
    %c29 = arith.constant 29 : index
    %166 = memref.load %arg5[%c29] : memref<36xf32, #tpu.memory_space<smem>>
    %167 = vector.broadcast %166 : f32 to vector<8x128xf32>
    %168 = arith.mulf %157, %167 : vector<8x128xf32>
    %169 = arith.addf %156, %168 : vector<8x128xf32>
    %c2_40 = arith.constant 2 : index
    %c0_41 = arith.constant 0 : index
    %c0_42 = arith.constant 0 : index
    %170 = vector.load %arg1[%c2_40, %c0_41, %c0_42] : memref<4x8x32xbf16, #tpu.memory_space<vmem>>, vector<1x8x32xbf16>
    %171 = vector.shape_cast %170 : vector<1x8x32xbf16> to vector<8x32xbf16>
    %cst_43 = arith.constant dense<0.000000e+00> : vector<8x1536xf32>
    %172 = tpu.matmul %171, %0, %cst_43 {dimension_numbers = #tpu.dot_dimension_numbers<[1], [0], [0], [1], [0, 0, 1, 1], [], []>} : vector<8x32xbf16>, vector<32x1536xbf16>, vector<8x1536xf32> -> vector<8x1536xf32>
    %173 = arith.truncf %128 : vector<8x384xf32> to vector<8x384xbf16>
    %cst_44 = arith.constant dense<0.000000e+00> : vector<8x1536xf32>
    %174 = tpu.matmul %173, %1, %cst_44 {dimension_numbers = #tpu.dot_dimension_numbers<[1], [0], [0], [1], [0, 0, 1, 1], [], []>} : vector<8x384xbf16>, vector<384x1536xbf16>, vector<8x1536xf32> -> vector<8x1536xf32>
    %175 = arith.addf %172, %174 : vector<8x1536xf32>
    %176 = vector.broadcast %2 : vector<1x1536xf32> to vector<8x1536xf32>
    %177 = arith.addf %175, %176 : vector<8x1536xf32>
    %178 = vector.extract_strided_slice %177 {offsets = [0, 0], sizes = [8, 384], strides = [1, 1]} : vector<8x1536xf32> to vector<8x384xf32>
    %cst_45 = arith.constant 5.000000e-01 : f32
    %179 = vector.broadcast %cst_45 : f32 to vector<8x384xf32>
    %180 = arith.mulf %179, %178 : vector<8x384xf32>
    %181 = math.tanh %180 : vector<8x384xf32>
    %cst_46 = arith.constant 5.000000e-01 : f32
    %182 = vector.broadcast %cst_46 : f32 to vector<8x384xf32>
    %183 = arith.mulf %182, %181 : vector<8x384xf32>
    %cst_47 = arith.constant 5.000000e-01 : f32
    %184 = vector.broadcast %cst_47 : f32 to vector<8x384xf32>
    %185 = arith.addf %183, %184 : vector<8x384xf32>
    %186 = vector.extract_strided_slice %177 {offsets = [0, 384], sizes = [8, 384], strides = [1, 1]} : vector<8x1536xf32> to vector<8x384xf32>
    %cst_48 = arith.constant 5.000000e-01 : f32
    %187 = vector.broadcast %cst_48 : f32 to vector<8x384xf32>
    %188 = arith.mulf %187, %186 : vector<8x384xf32>
    %189 = math.tanh %188 : vector<8x384xf32>
    %cst_49 = arith.constant 5.000000e-01 : f32
    %190 = vector.broadcast %cst_49 : f32 to vector<8x384xf32>
    %191 = arith.mulf %190, %189 : vector<8x384xf32>
    %cst_50 = arith.constant 5.000000e-01 : f32
    %192 = vector.broadcast %cst_50 : f32 to vector<8x384xf32>
    %193 = arith.addf %191, %192 : vector<8x384xf32>
    %194 = vector.extract_strided_slice %177 {offsets = [0, 768], sizes = [8, 384], strides = [1, 1]} : vector<8x1536xf32> to vector<8x384xf32>
    %195 = math.tanh %194 : vector<8x384xf32>
    %196 = vector.extract_strided_slice %177 {offsets = [0, 1152], sizes = [8, 384], strides = [1, 1]} : vector<8x1536xf32> to vector<8x384xf32>
    %cst_51 = arith.constant 5.000000e-01 : f32
    %197 = vector.broadcast %cst_51 : f32 to vector<8x384xf32>
    %198 = arith.mulf %197, %196 : vector<8x384xf32>
    %199 = math.tanh %198 : vector<8x384xf32>
    %cst_52 = arith.constant 5.000000e-01 : f32
    %200 = vector.broadcast %cst_52 : f32 to vector<8x384xf32>
    %201 = arith.mulf %200, %199 : vector<8x384xf32>
    %cst_53 = arith.constant 5.000000e-01 : f32
    %202 = vector.broadcast %cst_53 : f32 to vector<8x384xf32>
    %203 = arith.addf %201, %202 : vector<8x384xf32>
    %204 = arith.mulf %193, %125 : vector<8x384xf32>
    %205 = arith.mulf %185, %195 : vector<8x384xf32>
    %206 = arith.addf %204, %205 : vector<8x384xf32>
    %207 = math.tanh %206 : vector<8x384xf32>
    %208 = arith.mulf %203, %207 : vector<8x384xf32>
    %209 = math.tanh %208 : vector<8x384xf32>
    %cst_54 = arith.constant 0.000000e+00 : f32
    %210 = vector.broadcast %cst_54 : f32 to vector<8x384xf32>
    %211 = arith.maximumf %209, %210 : vector<8x384xf32>
    %212 = vector.extract_strided_slice %211 {offsets = [0, 0], sizes = [8, 128], strides = [1, 1]} : vector<8x384xf32> to vector<8x128xf32>
    %c6 = arith.constant 6 : index
    %213 = memref.load %arg5[%c6] : memref<36xf32, #tpu.memory_space<smem>>
    %214 = vector.broadcast %213 : f32 to vector<8x128xf32>
    %215 = arith.mulf %212, %214 : vector<8x128xf32>
    %216 = arith.addf %161, %215 : vector<8x128xf32>
    %c7 = arith.constant 7 : index
    %217 = memref.load %arg5[%c7] : memref<36xf32, #tpu.memory_space<smem>>
    %218 = vector.broadcast %217 : f32 to vector<8x128xf32>
    %219 = arith.mulf %212, %218 : vector<8x128xf32>
    %220 = arith.addf %165, %219 : vector<8x128xf32>
    %c8 = arith.constant 8 : index
    %221 = memref.load %arg5[%c8] : memref<36xf32, #tpu.memory_space<smem>>
    %222 = vector.broadcast %221 : f32 to vector<8x128xf32>
    %223 = arith.mulf %212, %222 : vector<8x128xf32>
    %224 = arith.addf %169, %223 : vector<8x128xf32>
    %225 = vector.extract_strided_slice %211 {offsets = [0, 128], sizes = [8, 128], strides = [1, 1]} : vector<8x384xf32> to vector<8x128xf32>
    %c18 = arith.constant 18 : index
    %226 = memref.load %arg5[%c18] : memref<36xf32, #tpu.memory_space<smem>>
    %227 = vector.broadcast %226 : f32 to vector<8x128xf32>
    %228 = arith.mulf %225, %227 : vector<8x128xf32>
    %229 = arith.addf %216, %228 : vector<8x128xf32>
    %c19 = arith.constant 19 : index
    %230 = memref.load %arg5[%c19] : memref<36xf32, #tpu.memory_space<smem>>
    %231 = vector.broadcast %230 : f32 to vector<8x128xf32>
    %232 = arith.mulf %225, %231 : vector<8x128xf32>
    %233 = arith.addf %220, %232 : vector<8x128xf32>
    %c20 = arith.constant 20 : index
    %234 = memref.load %arg5[%c20] : memref<36xf32, #tpu.memory_space<smem>>
    %235 = vector.broadcast %234 : f32 to vector<8x128xf32>
    %236 = arith.mulf %225, %235 : vector<8x128xf32>
    %237 = arith.addf %224, %236 : vector<8x128xf32>
    %238 = vector.extract_strided_slice %211 {offsets = [0, 256], sizes = [8, 128], strides = [1, 1]} : vector<8x384xf32> to vector<8x128xf32>
    %c30 = arith.constant 30 : index
    %239 = memref.load %arg5[%c30] : memref<36xf32, #tpu.memory_space<smem>>
    %240 = vector.broadcast %239 : f32 to vector<8x128xf32>
    %241 = arith.mulf %238, %240 : vector<8x128xf32>
    %242 = arith.addf %229, %241 : vector<8x128xf32>
    %c31 = arith.constant 31 : index
    %243 = memref.load %arg5[%c31] : memref<36xf32, #tpu.memory_space<smem>>
    %244 = vector.broadcast %243 : f32 to vector<8x128xf32>
    %245 = arith.mulf %238, %244 : vector<8x128xf32>
    %246 = arith.addf %233, %245 : vector<8x128xf32>
    %c32 = arith.constant 32 : index
    %247 = memref.load %arg5[%c32] : memref<36xf32, #tpu.memory_space<smem>>
    %248 = vector.broadcast %247 : f32 to vector<8x128xf32>
    %249 = arith.mulf %238, %248 : vector<8x128xf32>
    %250 = arith.addf %237, %249 : vector<8x128xf32>
    %c3_55 = arith.constant 3 : index
    %c0_56 = arith.constant 0 : index
    %c0_57 = arith.constant 0 : index
    %251 = vector.load %arg1[%c3_55, %c0_56, %c0_57] : memref<4x8x32xbf16, #tpu.memory_space<vmem>>, vector<1x8x32xbf16>
    %252 = vector.shape_cast %251 : vector<1x8x32xbf16> to vector<8x32xbf16>
    %cst_58 = arith.constant dense<0.000000e+00> : vector<8x1536xf32>
    %253 = tpu.matmul %252, %0, %cst_58 {dimension_numbers = #tpu.dot_dimension_numbers<[1], [0], [0], [1], [0, 0, 1, 1], [], []>} : vector<8x32xbf16>, vector<32x1536xbf16>, vector<8x1536xf32> -> vector<8x1536xf32>
    %254 = arith.truncf %209 : vector<8x384xf32> to vector<8x384xbf16>
    %cst_59 = arith.constant dense<0.000000e+00> : vector<8x1536xf32>
    %255 = tpu.matmul %254, %1, %cst_59 {dimension_numbers = #tpu.dot_dimension_numbers<[1], [0], [0], [1], [0, 0, 1, 1], [], []>} : vector<8x384xbf16>, vector<384x1536xbf16>, vector<8x1536xf32> -> vector<8x1536xf32>
    %256 = arith.addf %253, %255 : vector<8x1536xf32>
    %257 = vector.broadcast %2 : vector<1x1536xf32> to vector<8x1536xf32>
    %258 = arith.addf %256, %257 : vector<8x1536xf32>
    %259 = vector.extract_strided_slice %258 {offsets = [0, 0], sizes = [8, 384], strides = [1, 1]} : vector<8x1536xf32> to vector<8x384xf32>
    %cst_60 = arith.constant 5.000000e-01 : f32
    %260 = vector.broadcast %cst_60 : f32 to vector<8x384xf32>
    %261 = arith.mulf %260, %259 : vector<8x384xf32>
    %262 = math.tanh %261 : vector<8x384xf32>
    %cst_61 = arith.constant 5.000000e-01 : f32
    %263 = vector.broadcast %cst_61 : f32 to vector<8x384xf32>
    %264 = arith.mulf %263, %262 : vector<8x384xf32>
    %cst_62 = arith.constant 5.000000e-01 : f32
    %265 = vector.broadcast %cst_62 : f32 to vector<8x384xf32>
    %266 = arith.addf %264, %265 : vector<8x384xf32>
    %267 = vector.extract_strided_slice %258 {offsets = [0, 384], sizes = [8, 384], strides = [1, 1]} : vector<8x1536xf32> to vector<8x384xf32>
    %cst_63 = arith.constant 5.000000e-01 : f32
    %268 = vector.broadcast %cst_63 : f32 to vector<8x384xf32>
    %269 = arith.mulf %268, %267 : vector<8x384xf32>
    %270 = math.tanh %269 : vector<8x384xf32>
    %cst_64 = arith.constant 5.000000e-01 : f32
    %271 = vector.broadcast %cst_64 : f32 to vector<8x384xf32>
    %272 = arith.mulf %271, %270 : vector<8x384xf32>
    %cst_65 = arith.constant 5.000000e-01 : f32
    %273 = vector.broadcast %cst_65 : f32 to vector<8x384xf32>
    %274 = arith.addf %272, %273 : vector<8x384xf32>
    %275 = vector.extract_strided_slice %258 {offsets = [0, 768], sizes = [8, 384], strides = [1, 1]} : vector<8x1536xf32> to vector<8x384xf32>
    %276 = math.tanh %275 : vector<8x384xf32>
    %277 = vector.extract_strided_slice %258 {offsets = [0, 1152], sizes = [8, 384], strides = [1, 1]} : vector<8x1536xf32> to vector<8x384xf32>
    %cst_66 = arith.constant 5.000000e-01 : f32
    %278 = vector.broadcast %cst_66 : f32 to vector<8x384xf32>
    %279 = arith.mulf %278, %277 : vector<8x384xf32>
    %280 = math.tanh %279 : vector<8x384xf32>
    %cst_67 = arith.constant 5.000000e-01 : f32
    %281 = vector.broadcast %cst_67 : f32 to vector<8x384xf32>
    %282 = arith.mulf %281, %280 : vector<8x384xf32>
    %cst_68 = arith.constant 5.000000e-01 : f32
    %283 = vector.broadcast %cst_68 : f32 to vector<8x384xf32>
    %284 = arith.addf %282, %283 : vector<8x384xf32>
    %285 = arith.mulf %274, %206 : vector<8x384xf32>
    %286 = arith.mulf %266, %276 : vector<8x384xf32>
    %287 = arith.addf %285, %286 : vector<8x384xf32>
    %288 = math.tanh %287 : vector<8x384xf32>
    %289 = arith.mulf %284, %288 : vector<8x384xf32>
    %290 = math.tanh %289 : vector<8x384xf32>
    %cst_69 = arith.constant 0.000000e+00 : f32
    %291 = vector.broadcast %cst_69 : f32 to vector<8x384xf32>
    %292 = arith.maximumf %290, %291 : vector<8x384xf32>
    %293 = vector.extract_strided_slice %292 {offsets = [0, 0], sizes = [8, 128], strides = [1, 1]} : vector<8x384xf32> to vector<8x128xf32>
    %c9 = arith.constant 9 : index
    %294 = memref.load %arg5[%c9] : memref<36xf32, #tpu.memory_space<smem>>
    %295 = vector.broadcast %294 : f32 to vector<8x128xf32>
    %296 = arith.mulf %293, %295 : vector<8x128xf32>
    %297 = arith.addf %242, %296 : vector<8x128xf32>
    %c10 = arith.constant 10 : index
    %298 = memref.load %arg5[%c10] : memref<36xf32, #tpu.memory_space<smem>>
    %299 = vector.broadcast %298 : f32 to vector<8x128xf32>
    %300 = arith.mulf %293, %299 : vector<8x128xf32>
    %301 = arith.addf %246, %300 : vector<8x128xf32>
    %c11 = arith.constant 11 : index
    %302 = memref.load %arg5[%c11] : memref<36xf32, #tpu.memory_space<smem>>
    %303 = vector.broadcast %302 : f32 to vector<8x128xf32>
    %304 = arith.mulf %293, %303 : vector<8x128xf32>
    %305 = arith.addf %250, %304 : vector<8x128xf32>
    %306 = vector.extract_strided_slice %292 {offsets = [0, 128], sizes = [8, 128], strides = [1, 1]} : vector<8x384xf32> to vector<8x128xf32>
    %c21 = arith.constant 21 : index
    %307 = memref.load %arg5[%c21] : memref<36xf32, #tpu.memory_space<smem>>
    %308 = vector.broadcast %307 : f32 to vector<8x128xf32>
    %309 = arith.mulf %306, %308 : vector<8x128xf32>
    %310 = arith.addf %297, %309 : vector<8x128xf32>
    %c22 = arith.constant 22 : index
    %311 = memref.load %arg5[%c22] : memref<36xf32, #tpu.memory_space<smem>>
    %312 = vector.broadcast %311 : f32 to vector<8x128xf32>
    %313 = arith.mulf %306, %312 : vector<8x128xf32>
    %314 = arith.addf %301, %313 : vector<8x128xf32>
    %c23 = arith.constant 23 : index
    %315 = memref.load %arg5[%c23] : memref<36xf32, #tpu.memory_space<smem>>
    %316 = vector.broadcast %315 : f32 to vector<8x128xf32>
    %317 = arith.mulf %306, %316 : vector<8x128xf32>
    %318 = arith.addf %305, %317 : vector<8x128xf32>
    %319 = vector.extract_strided_slice %292 {offsets = [0, 256], sizes = [8, 128], strides = [1, 1]} : vector<8x384xf32> to vector<8x128xf32>
    %c33 = arith.constant 33 : index
    %320 = memref.load %arg5[%c33] : memref<36xf32, #tpu.memory_space<smem>>
    %321 = vector.broadcast %320 : f32 to vector<8x128xf32>
    %322 = arith.mulf %319, %321 : vector<8x128xf32>
    %323 = arith.addf %310, %322 : vector<8x128xf32>
    %c34 = arith.constant 34 : index
    %324 = memref.load %arg5[%c34] : memref<36xf32, #tpu.memory_space<smem>>
    %325 = vector.broadcast %324 : f32 to vector<8x128xf32>
    %326 = arith.mulf %319, %325 : vector<8x128xf32>
    %327 = arith.addf %314, %326 : vector<8x128xf32>
    %c35 = arith.constant 35 : index
    %328 = memref.load %arg5[%c35] : memref<36xf32, #tpu.memory_space<smem>>
    %329 = vector.broadcast %328 : f32 to vector<8x128xf32>
    %330 = arith.mulf %319, %329 : vector<8x128xf32>
    %331 = arith.addf %318, %330 : vector<8x128xf32>
    %c0_70 = arith.constant 0 : index
    %332 = memref.load %arg6[%c0_70] : memref<3xf32, #tpu.memory_space<smem>>
    %333 = vector.broadcast %332 : f32 to vector<8x128xf32>
    %334 = arith.addf %323, %333 : vector<8x128xf32>
    %c0_71 = arith.constant 0 : index
    %c0_72 = arith.constant 0 : index
    %335 = vector.load %arg7[%c0_71, %c0_72] : memref<8x384xf32, #tpu.memory_space<vmem>>, vector<8x128xf32>
    tpu.vector_store %arg7[%c0_71, %c0_72], %334 {strides = array<i32>} : memref<8x384xf32, #tpu.memory_space<vmem>>, vector<8x128xf32>,
    %c1_73 = arith.constant 1 : index
    %336 = memref.load %arg6[%c1_73] : memref<3xf32, #tpu.memory_space<smem>>
    %337 = vector.broadcast %336 : f32 to vector<8x128xf32>
    %338 = arith.addf %327, %337 : vector<8x128xf32>
    %c0_74 = arith.constant 0 : index
    %c128 = arith.constant 128 : index
    %339 = vector.load %arg7[%c0_74, %c128] : memref<8x384xf32, #tpu.memory_space<vmem>>, vector<8x128xf32>
    tpu.vector_store %arg7[%c0_74, %c128], %338 {strides = array<i32>} : memref<8x384xf32, #tpu.memory_space<vmem>>, vector<8x128xf32>,
    %c2_75 = arith.constant 2 : index
    %340 = memref.load %arg6[%c2_75] : memref<3xf32, #tpu.memory_space<smem>>
    %341 = vector.broadcast %340 : f32 to vector<8x128xf32>
    %342 = arith.addf %331, %341 : vector<8x128xf32>
    %c0_76 = arith.constant 0 : index
    %c256 = arith.constant 256 : index
    %343 = vector.load %arg7[%c0_76, %c256] : memref<8x384xf32, #tpu.memory_space<vmem>>, vector<8x128xf32>
    tpu.vector_store %arg7[%c0_76, %c256], %342 {strides = array<i32>} : memref<8x384xf32, #tpu.memory_space<vmem>>, vector<8x128xf32>,
    return
  }
  func.func @transform_0(%arg0: i32) -> (i32, i32, i32) {
    %c0_i32 = arith.constant 0 : i32
    %c0_i32_0 = arith.constant 0 : i32
    %c0_i32_1 = arith.constant 0 : i32
    return %c0_i32, %arg0, %c0_i32_0 : i32, i32, i32
  }
  func.func @transform_1(%arg0: i32) -> (i32, i32) {
    %c0_i32 = arith.constant 0 : i32
    %c0_i32_0 = arith.constant 0 : i32
    %c0_i32_1 = arith.constant 0 : i32
    return %c0_i32, %c0_i32_0 : i32, i32
  }
  func.func @transform_2(%arg0: i32) -> (i32, i32) {
    %c0_i32 = arith.constant 0 : i32
    %c0_i32_0 = arith.constant 0 : i32
    %c0_i32_1 = arith.constant 0 : i32
    return %c0_i32, %c0_i32_0 : i32, i32
  }
  func.func @transform_3(%arg0: i32) -> (i32, i32) {
    %c0_i32 = arith.constant 0 : i32
    %c0_i32_0 = arith.constant 0 : i32
    %c0_i32_1 = arith.constant 0 : i32
    return %c0_i32, %c0_i32_0 : i32, i32
  }
  func.func @transform_4(%arg0: i32) -> i32 {
    %c0_i32 = arith.constant 0 : i32
    %c0_i32_0 = arith.constant 0 : i32
    return %c0_i32 : i32
  }
  func.func @transform_5(%arg0: i32) -> i32 {
    %c0_i32 = arith.constant 0 : i32
    %c0_i32_0 = arith.constant 0 : i32
    return %c0_i32 : i32
  }
  func.func @transform_6(%arg0: i32) -> (i32, i32) {
    %c0_i32 = arith.constant 0 : i32
    %c0_i32_0 = arith.constant 0 : i32
    return %arg0, %c0_i32 : i32, i32
  }
}

</mosaic_0001>

<llo_original>
// kernel: stgcn_forward.1
$region0: #{stgcn_forward.1}
  #allocation0 [shape = 'u32[]', space=smem, size = 0x4, offset = 0x4, fixed_abs, tag = 'smem constant byte address 0x4 - core index']
  #allocation1 [shape = 'u32[144,128]{1,0:T(1,128)}', space=vmem, size = 0x12000, scoped, tag = 'internal scratch']
  %s0 = inlined_call_operand.vmem [shape: bf16[4,8,32], index: 0, kind: input, shape index: {}]
  %s1 = inlined_call_operand.vmem [shape: bf16[32,1536], index: 1, kind: input, shape index: {}]
  %s2 = inlined_call_operand.vmem [shape: bf16[384,1536], index: 2, kind: input, shape index: {}]
  %s3 = inlined_call_operand.vmem [shape: f32[1,1536], index: 3, kind: input, shape index: {}]
  %s4 = inlined_call_operand.vmem [shape: f32[36], index: 4, kind: input, shape index: {}]
  %s5 = inlined_call_operand.vmem [shape: f32[3], index: 5, kind: input, shape index: {}]
  %s6 = inlined_call_operand.vmem [shape: f32[8,384], index: 6, kind: output, shape index: {}]
  %s7 = sld [smem:[#allocation0]]
  $region42: #{stgcn_forward.1} parent=0
    _
  %s9 = ssub.s32 1, %s7
  %s10 = scalar_select 0, %s9, %s7
  $region1: #{stgcn_forward.1} parent=0
    #allocation2 [shape = 'u8[512]{0}', space=smem, size = 0x200, scoped, tag = 'input window, operand 4, single buffered']
    #allocation3 [shape = 's32[1]{0}', space=sflag, size = 0x4, scoped, tag = 'scoped memory for stgcn_forward.1']
    #allocation4 [shape = 'u8[512]{0}', space=smem, size = 0x200, scoped, tag = 'input window, operand 5, single buffered']
    #allocation5 [shape = 's32[1]{0}', space=sflag, size = 0x4, scoped, tag = 'scoped memory for stgcn_forward.1']
    %11 = vsyncpa [#allocation3], 0
    %12 = vsyncpa [#allocation5], 0
    // Predicated region
    $region2: #{stgcn_forward.1} parent=1 // pred_check
      _
    $region3: #{stgcn_forward.1} parent=1 // pred_check_branch
      %14 = sbr.rel (0) target = $region5
    $region4: #{stgcn_forward.1} parent=1 // pred_region
      _
    $region5: #{stgcn_forward.1} parent=1 // pred_fallthru
      _
    // Predicated region
    $region6: #{stgcn_forward.1} parent=1 // pred_check
      _
    $region7: #{stgcn_forward.1} parent=1 // pred_check_branch
      %16 = sbr.rel (0) target = $region9
    $region8: #{stgcn_forward.1} parent=1 // pred_region
      _
    $region9: #{stgcn_forward.1} parent=1 // pred_fallthru
      _
    // Predicated region
    $region10: #{stgcn_forward.1} parent=1 // pred_check
      _
    $region11: #{stgcn_forward.1} parent=1 // pred_check_branch
      %18 = sbr.rel (0) target = $region13
    $region12: #{stgcn_forward.1} parent=1 // pred_region
      _
    $region13: #{stgcn_forward.1} parent=1 // pred_fallthru
      _
    // Predicated region
    $region14: #{stgcn_forward.1} parent=1 // pred_check
      _
    $region15: #{stgcn_forward.1} parent=1 // pred_check_branch
      %20 = sbr.rel (0) target = $region17
    $region16: #{stgcn_forward.1} parent=1 // pred_region
      _
    $region17: #{stgcn_forward.1} parent=1 // pred_fallthru
      _
    // Predicated region
    $region18: #{stgcn_forward.1} parent=1 // pred_check
      _
    $region19: #{stgcn_forward.1} parent=1 // pred_check_branch
      %22 = sbr.rel (0) target = $region21
    $region20: #{stgcn_forward.1} parent=1 // pred_region
      %s24 = ssub.s32 16, 16
      %25 = vsyncadd [#allocation3], %s24
      %s27 = sshll.u32 %s4, 4
      %s28 = int_to_ptr.vmem [resolvable:$true] %s27
      %30 = dma.vmem_to_smem %s28, 16, [#allocation2], [#allocation3]
    $region21: #{stgcn_forward.1} parent=1 // pred_fallthru
      _
    // Predicated region
    $region22: #{stgcn_forward.1} parent=1 // pred_check
      _
    $region23: #{stgcn_forward.1} parent=1 // pred_check_branch
      %32 = sbr.rel (0) target = $region25
    $region24: #{stgcn_forward.1} parent=1 // pred_region
      %s34 = ssub.s32 16, 16
      %35 = vsyncadd [#allocation5], %s34
      %s37 = sshll.u32 %s5, 4
      %s38 = int_to_ptr.vmem [resolvable:$true] %s37
      %40 = dma.vmem_to_smem %s38, 16, [#allocation4], [#allocation5]
    $region25: #{stgcn_forward.1} parent=1 // pred_fallthru
      _
    // Predicated region
    $region26: #{stgcn_forward.1} parent=1 // pred_check
      _
    $region27: #{stgcn_forward.1} parent=1 // pred_check_branch
      %42 = sbr.rel (0) target = $region29
    $region28: #{stgcn_forward.1} parent=1 // pred_region
      %43 = dma.done [#allocation3], 16
    $region29: #{stgcn_forward.1} parent=1 // pred_fallthru
      _
    // Predicated region
    $region30: #{stgcn_forward.1} parent=1 // pred_check
      _
    $region31: #{stgcn_forward.1} parent=1 // pred_check_branch
      %45 = sbr.rel (0) target = $region33
    $region32: #{stgcn_forward.1} parent=1 // pred_region
      %46 = dma.done [#allocation5], 16
    $region33: #{stgcn_forward.1} parent=1 // pred_fallthru
      _
    %47 = sfence
    %v49 = vld [vmem:[%s1] sm:$0xff]
    %v50 = vld [vmem:[%s1 + $0x8] sm:$0xff]
    %v51 = vld [vmem:[%s1 + $0x10] sm:$0xff]
    %v52 = vld [vmem:[%s1 + $0x18] sm:$0xff]
    %v53 = vld [vmem:[%s1 + $0x20] sm:$0xff]
    %v54 = vld [vmem:[%s1 + $0x28] sm:$0xff]
    %v55 = vld [vmem:[%s1 + $0x30] sm:$0xff]
    %v56 = vld [vmem:[%s1 + $0x38] sm:$0xff]
    %v57 = vld [vmem:[%s1 + $0x40] sm:$0xff]
    %v58 = vld [vmem:[%s1 + $0x48] sm:$0xff]
    %v59 = vld [vmem:[%s1 + $0x50] sm:$0xff]
    %v60 = vld [vmem:[%s1 + $0x58] sm:$0xff]
    %v61 = vld [vmem:[%s1 + $0x60] sm:$0xff]
    %v62 = vld [vmem:[%s1 + $0x68] sm:$0xff]
    %v63 = vld [vmem:[%s1 + $0x70] sm:$0xff]
    %v64 = vld [vmem:[%s1 + $0x78] sm:$0xff]
    %v65 = vld [vmem:[%s1 + $0x80] sm:$0xff]
    %v66 = vld [vmem:[%s1 + $0x88] sm:$0xff]
    %v67 = vld [vmem:[%s1 + $0x90] sm:$0xff]
    %v68 = vld [vmem:[%s1 + $0x98] sm:$0xff]
    %v69 = vld [vmem:[%s1 + $0xa0] sm:$0xff]
    %v70 = vld [vmem:[%s1 + $0xa8] sm:$0xff]
    %v71 = vld [vmem:[%s1 + $0xb0] sm:$0xff]
    %v72 = vld [vmem:[%s1 + $0xb8] sm:$0xff]
    %v73 = vld [vmem:[%s2] sm:$0xff]
    %v74 = vld [vmem:[%s2 + $0x8] sm:$0xff]
    %v75 = vld [vmem:[%s2 + $0x10] sm:$0xff]
    %v76 = vld [vmem:[%s2 + $0x18] sm:$0xff]
    %v77 = vld [vmem:[%s2 + $0x20] sm:$0xff]
    %v78 = vld [vmem:[%s2 + $0x28] sm:$0xff]
    %v79 = vld [vmem:[%s2 + $0x30] sm:$0xff]
    %v80 = vld [vmem:[%s2 + $0x38] sm:$0xff]
    %v81 = vld [vmem:[%s2 + $0x40] sm:$0xff]
    %v82 = vld [vmem:[%s2 + $0x48] sm:$0xff]
    %v83 = vld [vmem:[%s2 + $0x50] sm:$0xff]
    %v84 = vld [vmem:[%s2 + $0x58] sm:$0xff]
    %v85 = vld [vmem:[%s2 + $0x60] sm:$0xff]
    %v86 = vld [vmem:[%s2 + $0x68] sm:$0xff]
    %v87 = vld [vmem:[%s2 + $0x70] sm:$0xff]
    %v88 = vld [vmem:[%s2 + $0x78] sm:$0xff]
    %v89 = vld [vmem:[%s2 + $0x80] sm:$0xff]
    %v90 = vld [vmem:[%s2 + $0x88] sm:$0xff]
    %v91 = vld [vmem:[%s2 + $0x90] sm:$0xff]
    %v92 = vld [vmem:[%s2 + $0x98] sm:$0xff]
    %v93 = vld [vmem:[%s2 + $0xa0] sm:$0xff]
    %v94 = vld [vmem:[%s2 + $0xa8] sm:$0xff]
    %v95 = vld [vmem:[%s2 + $0xb0] sm:$0xff]
    %v96 = vld [vmem:[%s2 + $0xb8] sm:$0xff]
    %v97 = vld [vmem:[%s2 + $0xc0] sm:$0xff]
    %v98 = vld [vmem:[%s2 + $0xc8] sm:$0xff]
    %v99 = vld [vmem:[%s2 + $0xd0] sm:$0xff]
    %v100 = vld [vmem:[%s2 + $0xd8] sm:$0xff]
    %v101 = vld [vmem:[%s2 + $0xe0] sm:$0xff]
    %v102 = vld [vmem:[%s2 + $0xe8] sm:$0xff]
    %v103 = vld [vmem:[%s2 + $0xf0] sm:$0xff]
    %v104 = vld [vmem:[%s2 + $0xf8] sm:$0xff]
    %v105 = vld [vmem:[%s2 + $0x100] sm:$0xff]
    %v106 = vld [vmem:[%s2 + $0x108] sm:$0xff]
    %v107 = vld [vmem:[%s2 + $0x110] sm:$0xff]
    %v108 = vld [vmem:[%s2 + $0x118] sm:$0xff]
    %v109 = vld [vmem:[%s2 + $0x120] sm:$0xff]
    %v110 = vld [vmem:[%s2 + $0x128] sm:$0xff]
    %v111 = vld [vmem:[%s2 + $0x130] sm:$0xff]
    %v112 = vld [vmem:[%s2 + $0x138] sm:$0xff]
    %v113 = vld [vmem:[%s2 + $0x140] sm:$0xff]
    %v114 = vld [vmem:[%s2 + $0x148] sm:$0xff]
    %v115 = vld [vmem:[%s2 + $0x150] sm:$0xff]
    %v116 = vld [vmem:[%s2 + $0x158] sm:$0xff]
    %v117 = vld [vmem:[%s2 + $0x160] sm:$0xff]
    %v118 = vld [vmem:[%s2 + $0x168] sm:$0xff]
    %v119 = vld [vmem:[%s2 + $0x170] sm:$0xff]
    %v120 = vld [vmem:[%s2 + $0x178] sm:$0xff]
    %v121 = vld [vmem:[%s2 + $0x180] sm:$0xff]
    %v122 = vld [vmem:[%s2 + $0x188] sm:$0xff]
    %v123 = vld [vmem:[%s2 + $0x190] sm:$0xff]
    %v124 = vld [vmem:[%s2 + $0x198] sm:$0xff]
    %v125 = vld [vmem:[%s2 + $0x1a0] sm:$0xff]
    %v126 = vld [vmem:[%s2 + $0x1a8] sm:$0xff]
    %v127 = vld [vmem:[%s2 + $0x1b0] sm:$0xff]
    %v128 = vld [vmem:[%s2 + $0x1b8] sm:$0xff]
    %v129 = vld [vmem:[%s2 + $0x1c0] sm:$0xff]
    %v130 = vld [vmem:[%s2 + $0x1c8] sm:$0xff]
    %v131 = vld [vmem:[%s2 + $0x1d0] sm:$0xff]
    %v132 = vld [vmem:[%s2 + $0x1d8] sm:$0xff]
    %v133 = vld [vmem:[%s2 + $0x1e0] sm:$0xff]
    %v134 = vld [vmem:[%s2 + $0x1e8] sm:$0xff]
    %v135 = vld [vmem:[%s2 + $0x1f0] sm:$0xff]
    %v136 = vld [vmem:[%s2 + $0x1f8] sm:$0xff]
    %v137 = vld [vmem:[%s2 + $0x200] sm:$0xff]
    %v138 = vld [vmem:[%s2 + $0x208] sm:$0xff]
    %v139 = vld [vmem:[%s2 + $0x210] sm:$0xff]
    %v140 = vld [vmem:[%s2 + $0x218] sm:$0xff]
    %v141 = vld [vmem:[%s2 + $0x220] sm:$0xff]
    %v142 = vld [vmem:[%s2 + $0x228] sm:$0xff]
    %v143 = vld [vmem:[%s2 + $0x230] sm:$0xff]
    %v144 = vld [vmem:[%s2 + $0x238] sm:$0xff]
    %v145 = vld [vmem:[%s2 + $0x240] sm:$0xff]
    %v146 = vld [vmem:[%s2 + $0x248] sm:$0xff]
    %v147 = vld [vmem:[%s2 + $0x250] sm:$0xff]
    %v148 = vld [vmem:[%s2 + $0x258] sm:$0xff]
    %v149 = vld [vmem:[%s2 + $0x260] sm:$0xff]
    %v150 = vld [vmem:[%s2 + $0x268] sm:$0xff]
    %v151 = vld [vmem:[%s2 + $0x270] sm:$0xff]
    %v152 = vld [vmem:[%s2 + $0x278] sm:$0xff]
    %v153 = vld [vmem:[%s2 + $0x280] sm:$0xff]
    %v154 = vld [vmem:[%s2 + $0x288] sm:$0xff]
    %v155 = vld [vmem:[%s2 + $0x290] sm:$0xff]
    %v156 = vld [vmem:[%s2 + $0x298] sm:$0xff]
    %v157 = vld [vmem:[%s2 + $0x2a0] sm:$0xff]
    %v158 = vld [vmem:[%s2 + $0x2a8] sm:$0xff]
    %v159 = vld [vmem:[%s2 + $0x2b0] sm:$0xff]
    %v160 = vld [vmem:[%s2 + $0x2b8] sm:$0xff]
    %v161 = vld [vmem:[%s2 + $0x2c0] sm:$0xff]
    %v162 = vld [vmem:[%s2 + $0x2c8] sm:$0xff]
    %v163 = vld [vmem:[%s2 + $0x2d0] sm:$0xff]
    %v164 = vld [vmem:[%s2 + $0x2d8] sm:$0xff]
    %v165 = vld [vmem:[%s2 + $0x2e0] sm:$0xff]
    %v166 = vld [vmem:[%s2 + $0x2e8] sm:$0xff]
    %v167 = vld [vmem:[%s2 + $0x2f0] sm:$0xff]
    %v168 = vld [vmem:[%s2 + $0x2f8] sm:$0xff]
    %v169 = vld [vmem:[%s2 + $0x300] sm:$0xff]
    %v170 = vld [vmem:[%s2 + $0x308] sm:$0xff]
    %v171 = vld [vmem:[%s2 + $0x310] sm:$0xff]
    %v172 = vld [vmem:[%s2 + $0x318] sm:$0xff]
    %v173 = vld [vmem:[%s2 + $0x320] sm:$0xff]
    %v174 = vld [vmem:[%s2 + $0x328] sm:$0xff]
    %v175 = vld [vmem:[%s2 + $0x330] sm:$0xff]
    %v176 = vld [vmem:[%s2 + $0x338] sm:$0xff]
    %v177 = vld [vmem:[%s2 + $0x340] sm:$0xff]
    %v178 = vld [vmem:[%s2 + $0x348] sm:$0xff]
    %v179 = vld [vmem:[%s2 + $0x350] sm:$0xff]
    %v180 = vld [vmem:[%s2 + $0x358] sm:$0xff]
    %v181 = vld [vmem:[%s2 + $0x360] sm:$0xff]
    %v182 = vld [vmem:[%s2 + $0x368] sm:$0xff]
    %v183 = vld [vmem:[%s2 + $0x370] sm:$0xff]
    %v184 = vld [vmem:[%s2 + $0x378] sm:$0xff]
    %v185 = vld [vmem:[%s2 + $0x380] sm:$0xff]
    %v186 = vld [vmem:[%s2 + $0x388] sm:$0xff]
    %v187 = vld [vmem:[%s2 + $0x390] sm:$0xff]
    %v188 = vld [vmem:[%s2 + $0x398] sm:$0xff]
    %v189 = vld [vmem:[%s2 + $0x3a0] sm:$0xff]
    %v190 = vld [vmem:[%s2 + $0x3a8] sm:$0xff]
    %v191 = vld [vmem:[%s2 + $0x3b0] sm:$0xff]
    %v192 = vld [vmem:[%s2 + $0x3b8] sm:$0xff]
    %v193 = vld [vmem:[%s2 + $0x3c0] sm:$0xff]
    %v194 = vld [vmem:[%s2 + $0x3c8] sm:$0xff]
    %v195 = vld [vmem:[%s2 + $0x3d0] sm:$0xff]
    %v196 = vld [vmem:[%s2 + $0x3d8] sm:$0xff]
    %v197 = vld [vmem:[%s2 + $0x3e0] sm:$0xff]
    %v198 = vld [vmem:[%s2 + $0x3e8] sm:$0xff]
    %v199 = vld [vmem:[%s2 + $0x3f0] sm:$0xff]
    %v200 = vld [vmem:[%s2 + $0x3f8] sm:$0xff]
    %v201 = vld [vmem:[%s2 + $0x400] sm:$0xff]
    %v202 = vld [vmem:[%s2 + $0x408] sm:$0xff]
    %v203 = vld [vmem:[%s2 + $0x410] sm:$0xff]
    %v204 = vld [vmem:[%s2 + $0x418] sm:$0xff]
    %v205 = vld [vmem:[%s2 + $0x420] sm:$0xff]
    %v206 = vld [vmem:[%s2 + $0x428] sm:$0xff]
    %v207 = vld [vmem:[%s2 + $0x430] sm:$0xff]
    %v208 = vld [vmem:[%s2 + $0x438] sm:$0xff]
    %v209 = vld [vmem:[%s2 + $0x440] sm:$0xff]
    %v210 = vld [vmem:[%s2 + $0x448] sm:$0xff]
    %v211 = vld [vmem:[%s2 + $0x450] sm:$0xff]
    %v212 = vld [vmem:[%s2 + $0x458] sm:$0xff]
    %v213 = vld [vmem:[%s2 + $0x460] sm:$0xff]
    %v214 = vld [vmem:[%s2 + $0x468] sm:$0xff]
    %v215 = vld [vmem:[%s2 + $0x470] sm:$0xff]
    %v216 = vld [vmem:[%s2 + $0x478] sm:$0xff]
    %v217 = vld [vmem:[%s2 + $0x480] sm:$0xff]
    %v218 = vld [vmem:[%s2 + $0x488] sm:$0xff]
    %v219 = vld [vmem:[%s2 + $0x490] sm:$0xff]
    %v220 = vld [vmem:[%s2 + $0x498] sm:$0xff]
    %v221 = vld [vmem:[%s2 + $0x4a0] sm:$0xff]
    %v222 = vld [vmem:[%s2 + $0x4a8] sm:$0xff]
    %v223 = vld [vmem:[%s2 + $0x4b0] sm:$0xff]
    %v224 = vld [vmem:[%s2 + $0x4b8] sm:$0xff]
    %v225 = vld [vmem:[%s2 + $0x4c0] sm:$0xff]
    %v226 = vld [vmem:[%s2 + $0x4c8] sm:$0xff]
    %v227 = vld [vmem:[%s2 + $0x4d0] sm:$0xff]
    %v228 = vld [vmem:[%s2 + $0x4d8] sm:$0xff]
    %v229 = vld [vmem:[%s2 + $0x4e0] sm:$0xff]
    %v230 = vld [vmem:[%s2 + $0x4e8] sm:$0xff]
    %v231 = vld [vmem:[%s2 + $0x4f0] sm:$0xff]
    %v232 = vld [vmem:[%s2 + $0x4f8] sm:$0xff]
    %v233 = vld [vmem:[%s2 + $0x500] sm:$0xff]
    %v234 = vld [vmem:[%s2 + $0x508] sm:$0xff]
    %v235 = vld [vmem:[%s2 + $0x510] sm:$0xff]
    %v236 = vld [vmem:[%s2 + $0x518] sm:$0xff]
    %v237 = vld [vmem:[%s2 + $0x520] sm:$0xff]
    %v238 = vld [vmem:[%s2 + $0x528] sm:$0xff]
    %v239 = vld [vmem:[%s2 + $0x530] sm:$0xff]
    %v240 = vld [vmem:[%s2 + $0x538] sm:$0xff]
    %v241 = vld [vmem:[%s2 + $0x540] sm:$0xff]
    %v242 = vld [vmem:[%s2 + $0x548] sm:$0xff]
    %v243 = vld [vmem:[%s2 + $0x550] sm:$0xff]
    %v244 = vld [vmem:[%s2 + $0x558] sm:$0xff]
    %v245 = vld [vmem:[%s2 + $0x560] sm:$0xff]
    %v246 = vld [vmem:[%s2 + $0x568] sm:$0xff]
    %v247 = vld [vmem:[%s2 + $0x570] sm:$0xff]
    %v248 = vld [vmem:[%s2 + $0x578] sm:$0xff]
    %v249 = vld [vmem:[%s2 + $0x580] sm:$0xff]
    %v250 = vld [vmem:[%s2 + $0x588] sm:$0xff]
    %v251 = vld [vmem:[%s2 + $0x590] sm:$0xff]
    %v252 = vld [vmem:[%s2 + $0x598] sm:$0xff]
    %v253 = vld [vmem:[%s2 + $0x5a0] sm:$0xff]
    %v254 = vld [vmem:[%s2 + $0x5a8] sm:$0xff]
    %v255 = vld [vmem:[%s2 + $0x5b0] sm:$0xff]
    %v256 = vld [vmem:[%s2 + $0x5b8] sm:$0xff]
    %v257 = vld [vmem:[%s2 + $0x5c0] sm:$0xff]
    %v258 = vld [vmem:[%s2 + $0x5c8] sm:$0xff]
    %v259 = vld [vmem:[%s2 + $0x5d0] sm:$0xff]
    %v260 = vld [vmem:[%s2 + $0x5d8] sm:$0xff]
    %v261 = vld [vmem:[%s2 + $0x5e0] sm:$0xff]
    %v262 = vld [vmem:[%s2 + $0x5e8] sm:$0xff]
    %v263 = vld [vmem:[%s2 + $0x5f0] sm:$0xff]
    %v264 = vld [vmem:[%s2 + $0x5f8] sm:$0xff]
    %v265 = vld [vmem:[%s2 + $0x600] sm:$0xff]
    %v266 = vld [vmem:[%s2 + $0x608] sm:$0xff]
    %v267 = vld [vmem:[%s2 + $0x610] sm:$0xff]
    %v268 = vld [vmem:[%s2 + $0x618] sm:$0xff]
    %v269 = vld [vmem:[%s2 + $0x620] sm:$0xff]
    %v270 = vld [vmem:[%s2 + $0x628] sm:$0xff]
    %v271 = vld [vmem:[%s2 + $0x630] sm:$0xff]
    %v272 = vld [vmem:[%s2 + $0x638] sm:$0xff]
    %v273 = vld [vmem:[%s2 + $0x640] sm:$0xff]
    %v274 = vld [vmem:[%s2 + $0x648] sm:$0xff]
    %v275 = vld [vmem:[%s2 + $0x650] sm:$0xff]
    %v276 = vld [vmem:[%s2 + $0x658] sm:$0xff]
    %v277 = vld [vmem:[%s2 + $0x660] sm:$0xff]
    %v278 = vld [vmem:[%s2 + $0x668] sm:$0xff]
    %v279 = vld [vmem:[%s2 + $0x670] sm:$0xff]
    %v280 = vld [vmem:[%s2 + $0x678] sm:$0xff]
    %v281 = vld [vmem:[%s2 + $0x680] sm:$0xff]
    %v282 = vld [vmem:[%s2 + $0x688] sm:$0xff]
    %v283 = vld [vmem:[%s2 + $0x690] sm:$0xff]
    %v284 = vld [vmem:[%s2 + $0x698] sm:$0xff]
    %v285 = vld [vmem:[%s2 + $0x6a0] sm:$0xff]
    %v286 = vld [vmem:[%s2 + $0x6a8] sm:$0xff]
    %v287 = vld [vmem:[%s2 + $0x6b0] sm:$0xff]
    %v288 = vld [vmem:[%s2 + $0x6b8] sm:$0xff]
    %v289 = vld [vmem:[%s2 + $0x6c0] sm:$0xff]
    %v290 = vld [vmem:[%s2 + $0x6c8] sm:$0xff]
    %v291 = vld [vmem:[%s2 + $0x6d0] sm:$0xff]
    %v292 = vld [vmem:[%s2 + $0x6d8] sm:$0xff]
    %v293 = vld [vmem:[%s2 + $0x6e0] sm:$0xff]
    %v294 = vld [vmem:[%s2 + $0x6e8] sm:$0xff]
    %v295 = vld [vmem:[%s2 + $0x6f0] sm:$0xff]
    %v296 = vld [vmem:[%s2 + $0x6f8] sm:$0xff]
    %v297 = vld [vmem:[%s2 + $0x700] sm:$0xff]
    %v298 = vld [vmem:[%s2 + $0x708] sm:$0xff]
    %v299 = vld [vmem:[%s2 + $0x710] sm:$0xff]
    %v300 = vld [vmem:[%s2 + $0x718] sm:$0xff]
    %v301 = vld [vmem:[%s2 + $0x720] sm:$0xff]
    %v302 = vld [vmem:[%s2 + $0x728] sm:$0xff]
    %v303 = vld [vmem:[%s2 + $0x730] sm:$0xff]
    %v304 = vld [vmem:[%s2 + $0x738] sm:$0xff]
    %v305 = vld [vmem:[%s2 + $0x740] sm:$0xff]
    %v306 = vld [vmem:[%s2 + $0x748] sm:$0xff]
    %v307 = vld [vmem:[%s2 + $0x750] sm:$0xff]
    %v308 = vld [vmem:[%s2 + $0x758] sm:$0xff]
    %v309 = vld [vmem:[%s2 + $0x760] sm:$0xff]
    %v310 = vld [vmem:[%s2 + $0x768] sm:$0xff]
    %v311 = vld [vmem:[%s2 + $0x770] sm:$0xff]
    %v312 = vld [vmem:[%s2 + $0x778] sm:$0xff]
    %v313 = vld [vmem:[%s2 + $0x780] sm:$0xff]
    %v314 = vld [vmem:[%s2 + $0x788] sm:$0xff]
    %v315 = vld [vmem:[%s2 + $0x790] sm:$0xff]
    %v316 = vld [vmem:[%s2 + $0x798] sm:$0xff]
    %v317 = vld [vmem:[%s2 + $0x7a0] sm:$0xff]
    %v318 = vld [vmem:[%s2 + $0x7a8] sm:$0xff]
    %v319 = vld [vmem:[%s2 + $0x7b0] sm:$0xff]
    %v320 = vld [vmem:[%s2 + $0x7b8] sm:$0xff]
    %v321 = vld [vmem:[%s2 + $0x7c0] sm:$0xff]
    %v322 = vld [vmem:[%s2 + $0x7c8] sm:$0xff]
    %v323 = vld [vmem:[%s2 + $0x7d0] sm:$0xff]
    %v324 = vld [vmem:[%s2 + $0x7d8] sm:$0xff]
    %v325 = vld [vmem:[%s2 + $0x7e0] sm:$0xff]
    %v326 = vld [vmem:[%s2 + $0x7e8] sm:$0xff]
    %v327 = vld [vmem:[%s2 + $0x7f0] sm:$0xff]
    %v328 = vld [vmem:[%s2 + $0x7f8] sm:$0xff]
    %v329 = vld [vmem:[%s2 + $0x800] sm:$0xff]
    %v330 = vld [vmem:[%s2 + $0x808] sm:$0xff]
    %v331 = vld [vmem:[%s2 + $0x810] sm:$0xff]
    %v332 = vld [vmem:[%s2 + $0x818] sm:$0xff]
    %v333 = vld [vmem:[%s2 + $0x820] sm:$0xff]
    %v334 = vld [vmem:[%s2 + $0x828] sm:$0xff]
    %v335 = vld [vmem:[%s2 + $0x830] sm:$0xff]
    %v336 = vld [vmem:[%s2 + $0x838] sm:$0xff]
    %v337 = vld [vmem:[%s2 + $0x840] sm:$0xff]
    %v338 = vld [vmem:[%s2 + $0x848] sm:$0xff]
    %v339 = vld [vmem:[%s2 + $0x850] sm:$0xff]
    %v340 = vld [vmem:[%s2 + $0x858] sm:$0xff]
    %v341 = vld [vmem:[%s2 + $0x860] sm:$0xff]
    %v342 = vld [vmem:[%s2 + $0x868] sm:$0xff]
    %v343 = vld [vmem:[%s2 + $0x870] sm:$0xff]
    %v344 = vld [vmem:[%s2 + $0x878] sm:$0xff]
    %v345 = vld [vmem:[%s2 + $0x880] sm:$0xff]
    %v346 = vld [vmem:[%s2 + $0x888] sm:$0xff]
    %v347 = vld [vmem:[%s2 + $0x890] sm:$0xff]
    %v348 = vld [vmem:[%s2 + $0x898] sm:$0xff]
    %v349 = vld [vmem:[%s2 + $0x8a0] sm:$0xff]
    %v350 = vld [vmem:[%s2 + $0x8a8] sm:$0xff]
    %v351 = vld [vmem:[%s2 + $0x8b0] sm:$0xff]
    %v352 = vld [vmem:[%s2 + $0x8b8] sm:$0xff]
    %v353 = vld [vmem:[%s2 + $0x8c0] sm:$0xff]
    %v354 = vld [vmem:[%s2 + $0x8c8] sm:$0xff]
    %v355 = vld [vmem:[%s2 + $0x8d0] sm:$0xff]
    %v356 = vld [vmem:[%s2 + $0x8d8] sm:$0xff]
    %v357 = vld [vmem:[%s2 + $0x8e0] sm:$0xff]
    %v358 = vld [vmem:[%s2 + $0x8e8] sm:$0xff]
    %v359 = vld [vmem:[%s2 + $0x8f0] sm:$0xff]
    %v360 = vld [vmem:[%s2 + $0x8f8] sm:$0xff]
    %v361 = vld [vmem:[%s3] sm:$0xff]
    %v362 = vld [vmem:[%s3 + $0x8] sm:$0xf]
    %v363 = vld [vmem:[%s0] sm:$0xf]
    %v652 = vunpack.c.l.b16 %v73
    %v653 = vunpack.c.h.b16 %v73
    %v654 = vunpack.c.l.b16 %v74
    %v655 = vunpack.c.h.b16 %v74
    %v656 = vunpack.c.l.b16 %v75
    %v657 = vunpack.c.h.b16 %v75
    %v658 = vunpack.c.l.b16 %v76
    %v659 = vunpack.c.h.b16 %v76
    %v660 = vunpack.c.l.b16 %v77
    %v661 = vunpack.c.h.b16 %v77
    %v662 = vunpack.c.l.b16 %v78
    %v663 = vunpack.c.h.b16 %v78
    %v664 = vunpack.c.l.b16 %v79
    %v665 = vunpack.c.h.b16 %v79
    %v666 = vunpack.c.l.b16 %v80
    %v667 = vunpack.c.h.b16 %v80
    %v668 = vunpack.c.l.b16 %v81
    %v669 = vunpack.c.h.b16 %v81
    %v670 = vunpack.c.l.b16 %v82
    %v671 = vunpack.c.h.b16 %v82
    %v672 = vunpack.c.l.b16 %v83
    %v673 = vunpack.c.h.b16 %v83
    %v674 = vunpack.c.l.b16 %v84
    %v675 = vunpack.c.h.b16 %v84
    %v676 = vunpack.c.l.b16 %v85
    %v677 = vunpack.c.h.b16 %v85
    %v678 = vunpack.c.l.b16 %v86
    %v679 = vunpack.c.h.b16 %v86
    %v680 = vunpack.c.l.b16 %v87
    %v681 = vunpack.c.h.b16 %v87
    %v682 = vunpack.c.l.b16 %v88
    %v683 = vunpack.c.h.b16 %v88
    %v684 = vunpack.c.l.b16 %v89
    %v685 = vunpack.c.h.b16 %v89
    %v686 = vunpack.c.l.b16 %v90
    %v687 = vunpack.c.h.b16 %v90
    %v688 = vunpack.c.l.b16 %v91
    %v689 = vunpack.c.h.b16 %v91
    %v690 = vunpack.c.l.b16 %v92
    %v691 = vunpack.c.h.b16 %v92
    %v692 = vunpack.c.l.b16 %v93
    %v693 = vunpack.c.h.b16 %v93
    %v694 = vunpack.c.l.b16 %v94
    %v695 = vunpack.c.h.b16 %v94
    %v696 = vunpack.c.l.b16 %v95
    %v697 = vunpack.c.h.b16 %v95
    %v698 = vunpack.c.l.b16 %v96
    %v699 = vunpack.c.h.b16 %v96
    %v700 = vunpack.c.l.b16 %v97
    %v701 = vunpack.c.h.b16 %v97
    %v702 = vunpack.c.l.b16 %v98
    %v703 = vunpack.c.h.b16 %v98
    %v704 = vunpack.c.l.b16 %v99
    %v705 = vunpack.c.h.b16 %v99
    %v706 = vunpack.c.l.b16 %v100
    %v707 = vunpack.c.h.b16 %v100
    %v708 = vunpack.c.l.b16 %v101
    %v709 = vunpack.c.h.b16 %v101
    %v710 = vunpack.c.l.b16 %v102
    %v711 = vunpack.c.h.b16 %v102
    %v712 = vunpack.c.l.b16 %v103
    %v713 = vunpack.c.h.b16 %v103
    %v714 = vunpack.c.l.b16 %v104
    %v715 = vunpack.c.h.b16 %v104
    %v716 = vunpack.c.l.b16 %v105
    %v717 = vunpack.c.h.b16 %v105
    %v718 = vunpack.c.l.b16 %v106
    %v719 = vunpack.c.h.b16 %v106
    %v720 = vunpack.c.l.b16 %v107
    %v721 = vunpack.c.h.b16 %v107
    %v722 = vunpack.c.l.b16 %v108
    %v723 = vunpack.c.h.b16 %v108
    %v724 = vunpack.c.l.b16 %v109
    %v725 = vunpack.c.h.b16 %v109
    %v726 = vunpack.c.l.b16 %v110
    %v727 = vunpack.c.h.b16 %v110
    %v728 = vunpack.c.l.b16 %v111
    %v729 = vunpack.c.h.b16 %v111
    %v730 = vunpack.c.l.b16 %v112
    %v731 = vunpack.c.h.b16 %v112
    %v732 = vunpack.c.l.b16 %v113
    %v733 = vunpack.c.h.b16 %v113
    %v734 = vunpack.c.l.b16 %v114
    %v735 = vunpack.c.h.b16 %v114
    %v736 = vunpack.c.l.b16 %v115
    %v737 = vunpack.c.h.b16 %v115
    %v738 = vunpack.c.l.b16 %v116
    %v739 = vunpack.c.h.b16 %v116
    %v740 = vunpack.c.l.b16 %v117
    %v741 = vunpack.c.h.b16 %v117
    %v742 = vunpack.c.l.b16 %v118
    %v743 = vunpack.c.h.b16 %v118
    %v744 = vunpack.c.l.b16 %v119
    %v745 = vunpack.c.h.b16 %v119
    %v746 = vunpack.c.l.b16 %v120
    %v747 = vunpack.c.h.b16 %v120
    %v748 = vunpack.c.l.b16 %v121
    %v749 = vunpack.c.h.b16 %v121
    %v750 = vunpack.c.l.b16 %v122
    %v751 = vunpack.c.h.b16 %v122
    %v752 = vunpack.c.l.b16 %v123
    %v753 = vunpack.c.h.b16 %v123
    %v754 = vunpack.c.l.b16 %v124
    %v755 = vunpack.c.h.b16 %v124
    %v756 = vunpack.c.l.b16 %v125
    %v757 = vunpack.c.h.b16 %v125
    %v758 = vunpack.c.l.b16 %v126
    %v759 = vunpack.c.h.b16 %v126
    %v760 = vunpack.c.l.b16 %v127
    %v761 = vunpack.c.h.b16 %v127
    %v762 = vunpack.c.l.b16 %v128
    %v763 = vunpack.c.h.b16 %v128
    %v764 = vunpack.c.l.b16 %v129
    %v765 = vunpack.c.h.b16 %v129
    %v766 = vunpack.c.l.b16 %v130
    %v767 = vunpack.c.h.b16 %v130
    %v768 = vunpack.c.l.b16 %v131
    %v769 = vunpack.c.h.b16 %v131
    %v770 = vunpack.c.l.b16 %v132
    %v771 = vunpack.c.h.b16 %v132
    %v772 = vunpack.c.l.b16 %v133
    %v773 = vunpack.c.h.b16 %v133
    %v774 = vunpack.c.l.b16 %v134
    %v775 = vunpack.c.h.b16 %v134
    %v776 = vunpack.c.l.b16 %v135
    %v777 = vunpack.c.h.b16 %v135
    %v778 = vunpack.c.l.b16 %v136
    %v779 = vunpack.c.h.b16 %v136
    %v780 = vunpack.c.l.b16 %v137
    %v781 = vunpack.c.h.b16 %v137
    %v782 = vunpack.c.l.b16 %v138
    %v783 = vunpack.c.h.b16 %v138
    %v784 = vunpack.c.l.b16 %v139
    %v785 = vunpack.c.h.b16 %v139
    %v786 = vunpack.c.l.b16 %v140
    %v787 = vunpack.c.h.b16 %v140
    %v788 = vunpack.c.l.b16 %v141
    %v789 = vunpack.c.h.b16 %v141
    %v790 = vunpack.c.l.b16 %v142
    %v791 = vunpack.c.h.b16 %v142
    %v792 = vunpack.c.l.b16 %v143
    %v793 = vunpack.c.h.b16 %v143
    %v794 = vunpack.c.l.b16 %v144
    %v795 = vunpack.c.h.b16 %v144
    %v796 = vunpack.c.l.b16 %v145
    %v797 = vunpack.c.h.b16 %v145
    %v798 = vunpack.c.l.b16 %v146
    %v799 = vunpack.c.h.b16 %v146
    %v800 = vunpack.c.l.b16 %v147
    %v801 = vunpack.c.h.b16 %v147
    %v802 = vunpack.c.l.b16 %v148
    %v803 = vunpack.c.h.b16 %v148
    %v804 = vunpack.c.l.b16 %v149
    %v805 = vunpack.c.h.b16 %v149
    %v806 = vunpack.c.l.b16 %v150
    %v807 = vunpack.c.h.b16 %v150
    %v808 = vunpack.c.l.b16 %v151
    %v809 = vunpack.c.h.b16 %v151
    %v810 = vunpack.c.l.b16 %v152
    %v811 = vunpack.c.h.b16 %v152
    %v812 = vunpack.c.l.b16 %v153
    %v813 = vunpack.c.h.b16 %v153
    %v814 = vunpack.c.l.b16 %v154
    %v815 = vunpack.c.h.b16 %v154
    %v816 = vunpack.c.l.b16 %v155
    %v817 = vunpack.c.h.b16 %v155
    %v818 = vunpack.c.l.b16 %v156
    %v819 = vunpack.c.h.b16 %v156
    %v820 = vunpack.c.l.b16 %v157
    %v821 = vunpack.c.h.b16 %v157
    %v822 = vunpack.c.l.b16 %v158
    %v823 = vunpack.c.h.b16 %v158
    %v824 = vunpack.c.l.b16 %v159
    %v825 = vunpack.c.h.b16 %v159
    %v826 = vunpack.c.l.b16 %v160
    %v827 = vunpack.c.h.b16 %v160
    %v828 = vunpack.c.l.b16 %v161
    %v829 = vunpack.c.h.b16 %v161
    %v830 = vunpack.c.l.b16 %v162
    %v831 = vunpack.c.h.b16 %v162
    %v832 = vunpack.c.l.b16 %v163
    %v833 = vunpack.c.h.b16 %v163
    %v834 = vunpack.c.l.b16 %v164
    %v835 = vunpack.c.h.b16 %v164
    %v836 = vunpack.c.l.b16 %v165
    %v837 = vunpack.c.h.b16 %v165
    %v838 = vunpack.c.l.b16 %v166
    %v839 = vunpack.c.h.b16 %v166
    %v840 = vunpack.c.l.b16 %v167
    %v841 = vunpack.c.h.b16 %v167
    %v842 = vunpack.c.l.b16 %v168
    %v843 = vunpack.c.h.b16 %v168
    %v844 = vunpack.c.l.b16 %v169
    %v845 = vunpack.c.h.b16 %v169
    %v846 = vunpack.c.l.b16 %v170
    %v847 = vunpack.c.h.b16 %v170
    %v848 = vunpack.c.l.b16 %v171
    %v849 = vunpack.c.h.b16 %v171
    %v850 = vunpack.c.l.b16 %v172
    %v851 = vunpack.c.h.b16 %v172
    %v852 = vunpack.c.l.b16 %v173
    %v853 = vunpack.c.h.b16 %v173
    %v854 = vunpack.c.l.b16 %v174
    %v855 = vunpack.c.h.b16 %v174
    %v856 = vunpack.c.l.b16 %v175
    %v857 = vunpack.c.h.b16 %v175
    %v858 = vunpack.c.l.b16 %v176
    %v859 = vunpack.c.h.b16 %v176
    %v860 = vunpack.c.l.b16 %v177
    %v861 = vunpack.c.h.b16 %v177
    %v862 = vunpack.c.l.b16 %v178
    %v863 = vunpack.c.h.b16 %v178
    %v864 = vunpack.c.l.b16 %v179
    %v865 = vunpack.c.h.b16 %v179
    %v866 = vunpack.c.l.b16 %v180
    %v867 = vunpack.c.h.b16 %v180
    %v868 = vunpack.c.l.b16 %v181
    %v869 = vunpack.c.h.b16 %v181
    %v870 = vunpack.c.l.b16 %v182
    %v871 = vunpack.c.h.b16 %v182
    %v872 = vunpack.c.l.b16 %v183
    %v873 = vunpack.c.h.b16 %v183
    %v874 = vunpack.c.l.b16 %v184
    %v875 = vunpack.c.h.b16 %v184
    %v876 = vunpack.c.l.b16 %v185
    %v877 = vunpack.c.h.b16 %v185
    %v878 = vunpack.c.l.b16 %v186
    %v879 = vunpack.c.h.b16 %v186
    %v880 = vunpack.c.l.b16 %v187
    %v881 = vunpack.c.h.b16 %v187
    %v882 = vunpack.c.l.b16 %v188
    %v883 = vunpack.c.h.b16 %v188
    %v884 = vunpack.c.l.b16 %v189
    %v885 = vunpack.c.h.b16 %v189
    %v886 = vunpack.c.l.b16 %v190
    %v887 = vunpack.c.h.b16 %v190
    %v888 = vunpack.c.l.b16 %v191
    %v889 = vunpack.c.h.b16 %v191
    %v890 = vunpack.c.l.b16 %v192
    %v891 = vunpack.c.h.b16 %v192
    %v892 = vunpack.c.l.b16 %v193
    %v893 = vunpack.c.h.b16 %v193
    %v894 = vunpack.c.l.b16 %v194
    %v895 = vunpack.c.h.b16 %v194
    %v896 = vunpack.c.l.b16 %v195
    %v897 = vunpack.c.h.b16 %v195
    %v898 = vunpack.c.l.b16 %v196
    %v899 = vunpack.c.h.b16 %v196
    %v900 = vunpack.c.l.b16 %v197
    %v901 = vunpack.c.h.b16 %v197
    %v902 = vunpack.c.l.b16 %v198
    %v903 = vunpack.c.h.b16 %v198
    %v904 = vunpack.c.l.b16 %v199
    %v905 = vunpack.c.h.b16 %v199
    %v906 = vunpack.c.l.b16 %v200
    %v907 = vunpack.c.h.b16 %v200
    %v908 = vunpack.c.l.b16 %v201
    %v909 = vunpack.c.h.b16 %v201
    %v910 = vunpack.c.l.b16 %v202
    %v911 = vunpack.c.h.b16 %v202
    %v912 = vunpack.c.l.b16 %v203
    %v913 = vunpack.c.h.b16 %v203
    %v914 = vunpack.c.l.b16 %v204
    %v915 = vunpack.c.h.b16 %v204
    %v916 = vunpack.c.l.b16 %v205
    %v917 = vunpack.c.h.b16 %v205
    %v918 = vunpack.c.l.b16 %v206
    %v919 = vunpack.c.h.b16 %v206
    %v920 = vunpack.c.l.b16 %v207
    %v921 = vunpack.c.h.b16 %v207
    %v922 = vunpack.c.l.b16 %v208
    %v923 = vunpack.c.h.b16 %v208
    %v924 = vunpack.c.l.b16 %v209
    %v925 = vunpack.c.h.b16 %v209
    %v926 = vunpack.c.l.b16 %v210
    %v927 = vunpack.c.h.b16 %v210
    %v928 = vunpack.c.l.b16 %v211
    %v929 = vunpack.c.h.b16 %v211
    %v930 = vunpack.c.l.b16 %v212
    %v931 = vunpack.c.h.b16 %v212
    %v932 = vunpack.c.l.b16 %v213
    %v933 = vunpack.c.h.b16 %v213
    %v934 = vunpack.c.l.b16 %v214
    %v935 = vunpack.c.h.b16 %v214
    %v936 = vunpack.c.l.b16 %v215
    %v937 = vunpack.c.h.b16 %v215
    %v938 = vunpack.c.l.b16 %v216
    %v939 = vunpack.c.h.b16 %v216
    %v940 = vunpack.c.l.b16 %v217
    %v941 = vunpack.c.h.b16 %v217
    %v942 = vunpack.c.l.b16 %v218
    %v943 = vunpack.c.h.b16 %v218
    %v944 = vunpack.c.l.b16 %v219
    %v945 = vunpack.c.h.b16 %v219
    %v946 = vunpack.c.l.b16 %v220
    %v947 = vunpack.c.h.b16 %v220
    %v948 = vunpack.c.l.b16 %v221
    %v949 = vunpack.c.h.b16 %v221
    %v950 = vunpack.c.l.b16 %v222
    %v951 = vunpack.c.h.b16 %v222
    %v952 = vunpack.c.l.b16 %v223
    %v953 = vunpack.c.h.b16 %v223
    %v954 = vunpack.c.l.b16 %v224
    %v955 = vunpack.c.h.b16 %v224
    %v956 = vunpack.c.l.b16 %v225
    %v957 = vunpack.c.h.b16 %v225
    %v958 = vunpack.c.l.b16 %v226
    %v959 = vunpack.c.h.b16 %v226
    %v960 = vunpack.c.l.b16 %v227
    %v961 = vunpack.c.h.b16 %v227
    %v962 = vunpack.c.l.b16 %v228
    %v963 = vunpack.c.h.b16 %v228
    %v964 = vunpack.c.l.b16 %v229
    %v965 = vunpack.c.h.b16 %v229
    %v966 = vunpack.c.l.b16 %v230
    %v967 = vunpack.c.h.b16 %v230
    %v968 = vunpack.c.l.b16 %v231
    %v969 = vunpack.c.h.b16 %v231
    %v970 = vunpack.c.l.b16 %v232
    %v971 = vunpack.c.h.b16 %v232
    %v972 = vunpack.c.l.b16 %v233
    %v973 = vunpack.c.h.b16 %v233
    %v974 = vunpack.c.l.b16 %v234
    %v975 = vunpack.c.h.b16 %v234
    %v976 = vunpack.c.l.b16 %v235
    %v977 = vunpack.c.h.b16 %v235
    %v978 = vunpack.c.l.b16 %v236
    %v979 = vunpack.c.h.b16 %v236
    %v980 = vunpack.c.l.b16 %v237
    %v981 = vunpack.c.h.b16 %v237
    %v982 = vunpack.c.l.b16 %v238
    %v983 = vunpack.c.h.b16 %v238
    %v984 = vunpack.c.l.b16 %v239
    %v985 = vunpack.c.h.b16 %v239
    %v986 = vunpack.c.l.b16 %v240
    %v987 = vunpack.c.h.b16 %v240
    %v988 = vunpack.c.l.b16 %v241
    %v989 = vunpack.c.h.b16 %v241
    %v990 = vunpack.c.l.b16 %v242
    %v991 = vunpack.c.h.b16 %v242
    %v992 = vunpack.c.l.b16 %v243
    %v993 = vunpack.c.h.b16 %v243
    %v994 = vunpack.c.l.b16 %v244
    %v995 = vunpack.c.h.b16 %v244
    %v996 = vunpack.c.l.b16 %v245
    %v997 = vunpack.c.h.b16 %v245
    %v998 = vunpack.c.l.b16 %v246
    %v999 = vunpack.c.h.b16 %v246
    %v1000 = vunpack.c.l.b16 %v247
    %v1001 = vunpack.c.h.b16 %v247
    %v1002 = vunpack.c.l.b16 %v248
    %v1003 = vunpack.c.h.b16 %v248
    %v1004 = vunpack.c.l.b16 %v249
    %v1005 = vunpack.c.h.b16 %v249
    %v1006 = vunpack.c.l.b16 %v250
    %v1007 = vunpack.c.h.b16 %v250
    %v1008 = vunpack.c.l.b16 %v251
    %v1009 = vunpack.c.h.b16 %v251
    %v1010 = vunpack.c.l.b16 %v252
    %v1011 = vunpack.c.h.b16 %v252
    %v1012 = vunpack.c.l.b16 %v253
    %v1013 = vunpack.c.h.b16 %v253
    %v1014 = vunpack.c.l.b16 %v254
    %v1015 = vunpack.c.h.b16 %v254
    %v1016 = vunpack.c.l.b16 %v255
    %v1017 = vunpack.c.h.b16 %v255
    %v1018 = vunpack.c.l.b16 %v256
    %v1019 = vunpack.c.h.b16 %v256
    %v1020 = vunpack.c.l.b16 %v257
    %v1021 = vunpack.c.h.b16 %v257
    %v1022 = vunpack.c.l.b16 %v258
    %v1023 = vunpack.c.h.b16 %v258
    %v1024 = vunpack.c.l.b16 %v259
    %v1025 = vunpack.c.h.b16 %v259
    %v1026 = vunpack.c.l.b16 %v260
    %v1027 = vunpack.c.h.b16 %v260
    %v1028 = vunpack.c.l.b16 %v261
    %v1029 = vunpack.c.h.b16 %v261
    %v1030 = vunpack.c.l.b16 %v262
    %v1031 = vunpack.c.h.b16 %v262
    %v1032 = vunpack.c.l.b16 %v263
    %v1033 = vunpack.c.h.b16 %v263
    %v1034 = vunpack.c.l.b16 %v264
    %v1035 = vunpack.c.h.b16 %v264
    %v1036 = vunpack.c.l.b16 %v265
    %v1037 = vunpack.c.h.b16 %v265
    %v1038 = vunpack.c.l.b16 %v266
    %v1039 = vunpack.c.h.b16 %v266
    %v1040 = vunpack.c.l.b16 %v267
    %v1041 = vunpack.c.h.b16 %v267
    %v1042 = vunpack.c.l.b16 %v268
    %v1043 = vunpack.c.h.b16 %v268
    %v1044 = vunpack.c.l.b16 %v269
    %v1045 = vunpack.c.h.b16 %v269
    %v1046 = vunpack.c.l.b16 %v270
    %v1047 = vunpack.c.h.b16 %v270
    %v1048 = vunpack.c.l.b16 %v271
    %v1049 = vunpack.c.h.b16 %v271
    %v1050 = vunpack.c.l.b16 %v272
    %v1051 = vunpack.c.h.b16 %v272
    %v1052 = vunpack.c.l.b16 %v273
    %v1053 = vunpack.c.h.b16 %v273
    %v1054 = vunpack.c.l.b16 %v274
    %v1055 = vunpack.c.h.b16 %v274
    %v1056 = vunpack.c.l.b16 %v275
    %v1057 = vunpack.c.h.b16 %v275
    %v1058 = vunpack.c.l.b16 %v276
    %v1059 = vunpack.c.h.b16 %v276
    %v1060 = vunpack.c.l.b16 %v277
    %v1061 = vunpack.c.h.b16 %v277
    %v1062 = vunpack.c.l.b16 %v278
    %v1063 = vunpack.c.h.b16 %v278
    %v1064 = vunpack.c.l.b16 %v279
    %v1065 = vunpack.c.h.b16 %v279
    %v1066 = vunpack.c.l.b16 %v280
    %v1067 = vunpack.c.h.b16 %v280
    %v1068 = vunpack.c.l.b16 %v281
    %v1069 = vunpack.c.h.b16 %v281
    %v1070 = vunpack.c.l.b16 %v282
    %v1071 = vunpack.c.h.b16 %v282
    %v1072 = vunpack.c.l.b16 %v283
    %v1073 = vunpack.c.h.b16 %v283
    %v1074 = vunpack.c.l.b16 %v284
    %v1075 = vunpack.c.h.b16 %v284
    %v1076 = vunpack.c.l.b16 %v285
    %v1077 = vunpack.c.h.b16 %v285
    %v1078 = vunpack.c.l.b16 %v286
    %v1079 = vunpack.c.h.b16 %v286
    %v1080 = vunpack.c.l.b16 %v287
    %v1081 = vunpack.c.h.b16 %v287
    %v1082 = vunpack.c.l.b16 %v288
    %v1083 = vunpack.c.h.b16 %v288
    %v1084 = vunpack.c.l.b16 %v289
    %v1085 = vunpack.c.h.b16 %v289
    %v1086 = vunpack.c.l.b16 %v290
    %v1087 = vunpack.c.h.b16 %v290
    %v1088 = vunpack.c.l.b16 %v291
    %v1089 = vunpack.c.h.b16 %v291
    %v1090 = vunpack.c.l.b16 %v292
    %v1091 = vunpack.c.h.b16 %v292
    %v1092 = vunpack.c.l.b16 %v293
    %v1093 = vunpack.c.h.b16 %v293
    %v1094 = vunpack.c.l.b16 %v294
    %v1095 = vunpack.c.h.b16 %v294
    %v1096 = vunpack.c.l.b16 %v295
    %v1097 = vunpack.c.h.b16 %v295
    %v1098 = vunpack.c.l.b16 %v296
    %v1099 = vunpack.c.h.b16 %v296
    %v1100 = vunpack.c.l.b16 %v297
    %v1101 = vunpack.c.h.b16 %v297
    %v1102 = vunpack.c.l.b16 %v298
    %v1103 = vunpack.c.h.b16 %v298
    %v1104 = vunpack.c.l.b16 %v299
    %v1105 = vunpack.c.h.b16 %v299
    %v1106 = vunpack.c.l.b16 %v300
    %v1107 = vunpack.c.h.b16 %v300
    %v1108 = vunpack.c.l.b16 %v301
    %v1109 = vunpack.c.h.b16 %v301
    %v1110 = vunpack.c.l.b16 %v302
    %v1111 = vunpack.c.h.b16 %v302
    %v1112 = vunpack.c.l.b16 %v303
    %v1113 = vunpack.c.h.b16 %v303
    %v1114 = vunpack.c.l.b16 %v304
    %v1115 = vunpack.c.h.b16 %v304
    %v1116 = vunpack.c.l.b16 %v305
    %v1117 = vunpack.c.h.b16 %v305
    %v1118 = vunpack.c.l.b16 %v306
    %v1119 = vunpack.c.h.b16 %v306
    %v1120 = vunpack.c.l.b16 %v307
    %v1121 = vunpack.c.h.b16 %v307
    %v1122 = vunpack.c.l.b16 %v308
    %v1123 = vunpack.c.h.b16 %v308
    %v1124 = vunpack.c.l.b16 %v309
    %v1125 = vunpack.c.h.b16 %v309
    %v1126 = vunpack.c.l.b16 %v310
    %v1127 = vunpack.c.h.b16 %v310
    %v1128 = vunpack.c.l.b16 %v311
    %v1129 = vunpack.c.h.b16 %v311
    %v1130 = vunpack.c.l.b16 %v312
    %v1131 = vunpack.c.h.b16 %v312
    %v1132 = vunpack.c.l.b16 %v313
    %v1133 = vunpack.c.h.b16 %v313
    %v1134 = vunpack.c.l.b16 %v314
    %v1135 = vunpack.c.h.b16 %v314
    %v1136 = vunpack.c.l.b16 %v315
    %v1137 = vunpack.c.h.b16 %v315
    %v1138 = vunpack.c.l.b16 %v316
    %v1139 = vunpack.c.h.b16 %v316
    %v1140 = vunpack.c.l.b16 %v317
    %v1141 = vunpack.c.h.b16 %v317
    %v1142 = vunpack.c.l.b16 %v318
    %v1143 = vunpack.c.h.b16 %v318
    %v1144 = vunpack.c.l.b16 %v319
    %v1145 = vunpack.c.h.b16 %v319
    %v1146 = vunpack.c.l.b16 %v320
    %v1147 = vunpack.c.h.b16 %v320
    %v1148 = vunpack.c.l.b16 %v321
    %v1149 = vunpack.c.h.b16 %v321
    %v1150 = vunpack.c.l.b16 %v322
    %v1151 = vunpack.c.h.b16 %v322
    %v1152 = vunpack.c.l.b16 %v323
    %v1153 = vunpack.c.h.b16 %v323
    %v1154 = vunpack.c.l.b16 %v324
    %v1155 = vunpack.c.h.b16 %v324
    %v1156 = vunpack.c.l.b16 %v325
    %v1157 = vunpack.c.h.b16 %v325
    %v1158 = vunpack.c.l.b16 %v326
    %v1159 = vunpack.c.h.b16 %v326
    %v1160 = vunpack.c.l.b16 %v327
    %v1161 = vunpack.c.h.b16 %v327
    %v1162 = vunpack.c.l.b16 %v328
    %v1163 = vunpack.c.h.b16 %v328
    %v1164 = vunpack.c.l.b16 %v329
    %v1165 = vunpack.c.h.b16 %v329
    %v1166 = vunpack.c.l.b16 %v330
    %v1167 = vunpack.c.h.b16 %v330
    %v1168 = vunpack.c.l.b16 %v331
    %v1169 = vunpack.c.h.b16 %v331
    %v1170 = vunpack.c.l.b16 %v332
    %v1171 = vunpack.c.h.b16 %v332
    %v1172 = vunpack.c.l.b16 %v333
    %v1173 = vunpack.c.h.b16 %v333
    %v1174 = vunpack.c.l.b16 %v334
    %v1175 = vunpack.c.h.b16 %v334
    %v1176 = vunpack.c.l.b16 %v335
    %v1177 = vunpack.c.h.b16 %v335
    %v1178 = vunpack.c.l.b16 %v336
    %v1179 = vunpack.c.h.b16 %v336
    %v1180 = vunpack.c.l.b16 %v337
    %v1181 = vunpack.c.h.b16 %v337
    %v1182 = vunpack.c.l.b16 %v338
    %v1183 = vunpack.c.h.b16 %v338
    %v1184 = vunpack.c.l.b16 %v339
    %v1185 = vunpack.c.h.b16 %v339
    %v1186 = vunpack.c.l.b16 %v340
    %v1187 = vunpack.c.h.b16 %v340
    %v1188 = vunpack.c.l.b16 %v341
    %v1189 = vunpack.c.h.b16 %v341
    %v1190 = vunpack.c.l.b16 %v342
    %v1191 = vunpack.c.h.b16 %v342
    %v1192 = vunpack.c.l.b16 %v343
    %v1193 = vunpack.c.h.b16 %v343
    %v1194 = vunpack.c.l.b16 %v344
    %v1195 = vunpack.c.h.b16 %v344
    %v1196 = vunpack.c.l.b16 %v345
    %v1197 = vunpack.c.h.b16 %v345
    %v1198 = vunpack.c.l.b16 %v346
    %v1199 = vunpack.c.h.b16 %v346
    %v1200 = vunpack.c.l.b16 %v347
    %v1201 = vunpack.c.h.b16 %v347
    %v1202 = vunpack.c.l.b16 %v348
    %v1203 = vunpack.c.h.b16 %v348
    %v1204 = vunpack.c.l.b16 %v349
    %v1205 = vunpack.c.h.b16 %v349
    %v1206 = vunpack.c.l.b16 %v350
    %v1207 = vunpack.c.h.b16 %v350
    %v1208 = vunpack.c.l.b16 %v351
    %v1209 = vunpack.c.h.b16 %v351
    %v1210 = vunpack.c.l.b16 %v352
    %v1211 = vunpack.c.h.b16 %v352
    %v1212 = vunpack.c.l.b16 %v353
    %v1213 = vunpack.c.h.b16 %v353
    %v1214 = vunpack.c.l.b16 %v354
    %v1215 = vunpack.c.h.b16 %v354
    %v1216 = vunpack.c.l.b16 %v355
    %v1217 = vunpack.c.h.b16 %v355
    %v1218 = vunpack.c.l.b16 %v356
    %v1219 = vunpack.c.h.b16 %v356
    %v1220 = vunpack.c.l.b16 %v357
    %v1221 = vunpack.c.h.b16 %v357
    %v1222 = vunpack.c.l.b16 %v358
    %v1223 = vunpack.c.h.b16 %v358
    %v1224 = vunpack.c.l.b16 %v359
    %v1225 = vunpack.c.h.b16 %v359
    %v1226 = vunpack.c.l.b16 %v360
    %v1227 = vunpack.c.h.b16 %v360
    %v1228 = vpack.c.b16 %v664, %v652
    %v1229 = vpack.c.b16 %v665, %v653
    %v1230 = vpack.c.b16 %v666, %v654
    %v1231 = vpack.c.b16 %v667, %v655
    %v1232 = vpack.c.b16 %v668, %v656
    %v1233 = vpack.c.b16 %v669, %v657
    %v1234 = vpack.c.b16 %v670, %v658
    %v1235 = vpack.c.b16 %v671, %v659
    %v1236 = vpack.c.b16 %v672, %v660
    %v1237 = vpack.c.b16 %v673, %v661
    %v1238 = vpack.c.b16 %v674, %v662
    %v1239 = vpack.c.b16 %v675, %v663
    %v1240 = vpack.c.b16 %v688, %v676
    %v1241 = vpack.c.b16 %v689, %v677
    %v1242 = vpack.c.b16 %v690, %v678
    %v1243 = vpack.c.b16 %v691, %v679
    %v1244 = vpack.c.b16 %v692, %v680
    %v1245 = vpack.c.b16 %v693, %v681
    %v1246 = vpack.c.b16 %v694, %v682
    %v1247 = vpack.c.b16 %v695, %v683
    %v1248 = vpack.c.b16 %v696, %v684
    %v1249 = vpack.c.b16 %v697, %v685
    %v1250 = vpack.c.b16 %v698, %v686
    %v1251 = vpack.c.b16 %v699, %v687
    %v1252 = vpack.c.b16 %v712, %v700
    %v1253 = vpack.c.b16 %v713, %v701
    %v1254 = vpack.c.b16 %v714, %v702
    %v1255 = vpack.c.b16 %v715, %v703
    %v1256 = vpack.c.b16 %v716, %v704
    %v1257 = vpack.c.b16 %v717, %v705
    %v1258 = vpack.c.b16 %v718, %v706
    %v1259 = vpack.c.b16 %v719, %v707
    %v1260 = vpack.c.b16 %v720, %v708
    %v1261 = vpack.c.b16 %v721, %v709
    %v1262 = vpack.c.b16 %v722, %v710
    %v1263 = vpack.c.b16 %v723, %v711
    %v1264 = vpack.c.b16 %v736, %v724
    %v1265 = vpack.c.b16 %v737, %v725
    %v1266 = vpack.c.b16 %v738, %v726
    %v1267 = vpack.c.b16 %v739, %v727
    %v1268 = vpack.c.b16 %v740, %v728
    %v1269 = vpack.c.b16 %v741, %v729
    %v1270 = vpack.c.b16 %v742, %v730
    %v1271 = vpack.c.b16 %v743, %v731
    %v1272 = vpack.c.b16 %v744, %v732
    %v1273 = vpack.c.b16 %v745, %v733
    %v1274 = vpack.c.b16 %v746, %v734
    %v1275 = vpack.c.b16 %v747, %v735
    %v1276 = vpack.c.b16 %v760, %v748
    %v1277 = vpack.c.b16 %v761, %v749
    %v1278 = vpack.c.b16 %v762, %v750
    %v1279 = vpack.c.b16 %v763, %v751
    %v1280 = vpack.c.b16 %v764, %v752
    %v1281 = vpack.c.b16 %v765, %v753
    %v1282 = vpack.c.b16 %v766, %v754
    %v1283 = vpack.c.b16 %v767, %v755
    %v1284 = vpack.c.b16 %v768, %v756
    %v1285 = vpack.c.b16 %v769, %v757
    %v1286 = vpack.c.b16 %v770, %v758
    %v1287 = vpack.c.b16 %v771, %v759
    %v1288 = vpack.c.b16 %v784, %v772
    %v1289 = vpack.c.b16 %v785, %v773
    %v1290 = vpack.c.b16 %v786, %v774
    %v1291 = vpack.c.b16 %v787, %v775
    %v1292 = vpack.c.b16 %v788, %v776
    %v1293 = vpack.c.b16 %v789, %v777
    %v1294 = vpack.c.b16 %v790, %v778
    %v1295 = vpack.c.b16 %v791, %v779
    %v1296 = vpack.c.b16 %v792, %v780
    %v1297 = vpack.c.b16 %v793, %v781
    %v1298 = vpack.c.b16 %v794, %v782
    %v1299 = vpack.c.b16 %v795, %v783
    %v1300 = vpack.c.b16 %v808, %v796
    %v1301 = vpack.c.b16 %v809, %v797
    %v1302 = vpack.c.b16 %v810, %v798
    %v1303 = vpack.c.b16 %v811, %v799
    %v1304 = vpack.c.b16 %v812, %v800
    %v1305 = vpack.c.b16 %v813, %v801
    %v1306 = vpack.c.b16 %v814, %v802
    %v1307 = vpack.c.b16 %v815, %v803
    %v1308 = vpack.c.b16 %v816, %v804
    %v1309 = vpack.c.b16 %v817, %v805
    %v1310 = vpack.c.b16 %v818, %v806
    %v1311 = vpack.c.b16 %v819, %v807
    %v1312 = vpack.c.b16 %v832, %v820
    %v1313 = vpack.c.b16 %v833, %v821
    %v1314 = vpack.c.b16 %v834, %v822
    %v1315 = vpack.c.b16 %v835, %v823
    %v1316 = vpack.c.b16 %v836, %v824
    %v1317 = vpack.c.b16 %v837, %v825
    %v1318 = vpack.c.b16 %v838, %v826
    %v1319 = vpack.c.b16 %v839, %v827
    %v1320 = vpack.c.b16 %v840, %v828
    %v1321 = vpack.c.b16 %v841, %v829
    %v1322 = vpack.c.b16 %v842, %v830
    %v1323 = vpack.c.b16 %v843, %v831
    %v1324 = vpack.c.b16 %v856, %v844
    %v1325 = vpack.c.b16 %v857, %v845
    %v1326 = vpack.c.b16 %v858, %v846
    %v1327 = vpack.c.b16 %v859, %v847
    %v1328 = vpack.c.b16 %v860, %v848
    %v1329 = vpack.c.b16 %v861, %v849
    %v1330 = vpack.c.b16 %v862, %v850
    %v1331 = vpack.c.b16 %v863, %v851
    %v1332 = vpack.c.b16 %v864, %v852
    %v1333 = vpack.c.b16 %v865, %v853
    %v1334 = vpack.c.b16 %v866, %v854
    %v1335 = vpack.c.b16 %v867, %v855
    %v1336 = vpack.c.b16 %v880, %v868
    %v1337 = vpack.c.b16 %v881, %v869
    %v1338 = vpack.c.b16 %v882, %v870
    %v1339 = vpack.c.b16 %v883, %v871
    %v1340 = vpack.c.b16 %v884, %v872
    %v1341 = vpack.c.b16 %v885, %v873
    %v1342 = vpack.c.b16 %v886, %v874
    %v1343 = vpack.c.b16 %v887, %v875
    %v1344 = vpack.c.b16 %v888, %v876
    %v1345 = vpack.c.b16 %v889, %v877
    %v1346 = vpack.c.b16 %v890, %v878
    %v1347 = vpack.c.b16 %v891, %v879
    %v1348 = vpack.c.b16 %v904, %v892
    %v1349 = vpack.c.b16 %v905, %v893
    %v1350 = vpack.c.b16 %v906, %v894
    %v1351 = vpack.c.b16 %v907, %v895
    %v1352 = vpack.c.b16 %v908, %v896
    %v1353 = vpack.c.b16 %v909, %v897
    %v1354 = vpack.c.b16 %v910, %v898
    %v1355 = vpack.c.b16 %v911, %v899
    %v1356 = vpack.c.b16 %v912, %v900
    %v1357 = vpack.c.b16 %v913, %v901
    %v1358 = vpack.c.b16 %v914, %v902
    %v1359 = vpack.c.b16 %v915, %v903
    %v1360 = vpack.c.b16 %v928, %v916
    %v1361 = vpack.c.b16 %v929, %v917
    %v1362 = vpack.c.b16 %v930, %v918
    %v1363 = vpack.c.b16 %v931, %v919
    %v1364 = vpack.c.b16 %v932, %v920
    %v1365 = vpack.c.b16 %v933, %v921
    %v1366 = vpack.c.b16 %v934, %v922
    %v1367 = vpack.c.b16 %v935, %v923
    %v1368 = vpack.c.b16 %v936, %v924
    %v1369 = vpack.c.b16 %v937, %v925
    %v1370 = vpack.c.b16 %v938, %v926
    %v1371 = vpack.c.b16 %v939, %v927
    %v1372 = vpack.c.b16 %v952, %v940
    %v1373 = vpack.c.b16 %v953, %v941
    %v1374 = vpack.c.b16 %v954, %v942
    %v1375 = vpack.c.b16 %v955, %v943
    %v1376 = vpack.c.b16 %v956, %v944
    %v1377 = vpack.c.b16 %v957, %v945
    %v1378 = vpack.c.b16 %v958, %v946
    %v1379 = vpack.c.b16 %v959, %v947
    %v1380 = vpack.c.b16 %v960, %v948
    %v1381 = vpack.c.b16 %v961, %v949
    %v1382 = vpack.c.b16 %v962, %v950
    %v1383 = vpack.c.b16 %v963, %v951
    %v1384 = vpack.c.b16 %v976, %v964
    %v1385 = vpack.c.b16 %v977, %v965
    %v1386 = vpack.c.b16 %v978, %v966
    %v1387 = vpack.c.b16 %v979, %v967
    %v1388 = vpack.c.b16 %v980, %v968
    %v1389 = vpack.c.b16 %v981, %v969
    %v1390 = vpack.c.b16 %v982, %v970
    %v1391 = vpack.c.b16 %v983, %v971
    %v1392 = vpack.c.b16 %v984, %v972
    %v1393 = vpack.c.b16 %v985, %v973
    %v1394 = vpack.c.b16 %v986, %v974
    %v1395 = vpack.c.b16 %v987, %v975
    %v1396 = vpack.c.b16 %v1000, %v988
    %v1397 = vpack.c.b16 %v1001, %v989
    %v1398 = vpack.c.b16 %v1002, %v990
    %v1399 = vpack.c.b16 %v1003, %v991
    %v1400 = vpack.c.b16 %v1004, %v992
    %v1401 = vpack.c.b16 %v1005, %v993
    %v1402 = vpack.c.b16 %v1006, %v994
    %v1403 = vpack.c.b16 %v1007, %v995
    %v1404 = vpack.c.b16 %v1008, %v996
    %v1405 = vpack.c.b16 %v1009, %v997
    %v1406 = vpack.c.b16 %v1010, %v998
    %v1407 = vpack.c.b16 %v1011, %v999
    %v1408 = vpack.c.b16 %v1024, %v1012
    %v1409 = vpack.c.b16 %v1025, %v1013
    %v1410 = vpack.c.b16 %v1026, %v1014
    %v1411 = vpack.c.b16 %v1027, %v1015
    %v1412 = vpack.c.b16 %v1028, %v1016
    %v1413 = vpack.c.b16 %v1029, %v1017
    %v1414 = vpack.c.b16 %v1030, %v1018
    %v1415 = vpack.c.b16 %v1031, %v1019
    %v1416 = vpack.c.b16 %v1032, %v1020
    %v1417 = vpack.c.b16 %v1033, %v1021
    %v1418 = vpack.c.b16 %v1034, %v1022
    %v1419 = vpack.c.b16 %v1035, %v1023
    %v1420 = vpack.c.b16 %v1048, %v1036
    %v1421 = vpack.c.b16 %v1049, %v1037
    %v1422 = vpack.c.b16 %v1050, %v1038
    %v1423 = vpack.c.b16 %v1051, %v1039
    %v1424 = vpack.c.b16 %v1052, %v1040
    %v1425 = vpack.c.b16 %v1053, %v1041
    %v1426 = vpack.c.b16 %v1054, %v1042
    %v1427 = vpack.c.b16 %v1055, %v1043
    %v1428 = vpack.c.b16 %v1056, %v1044
    %v1429 = vpack.c.b16 %v1057, %v1045
    %v1430 = vpack.c.b16 %v1058, %v1046
    %v1431 = vpack.c.b16 %v1059, %v1047
    %v1432 = vpack.c.b16 %v1072, %v1060
    %v1433 = vpack.c.b16 %v1073, %v1061
    %v1434 = vpack.c.b16 %v1074, %v1062
    %v1435 = vpack.c.b16 %v1075, %v1063
    %v1436 = vpack.c.b16 %v1076, %v1064
    %v1437 = vpack.c.b16 %v1077, %v1065
    %v1438 = vpack.c.b16 %v1078, %v1066
    %v1439 = vpack.c.b16 %v1079, %v1067
    %v1440 = vpack.c.b16 %v1080, %v1068
    %v1441 = vpack.c.b16 %v1081, %v1069
    %v1442 = vpack.c.b16 %v1082, %v1070
    %v1443 = vpack.c.b16 %v1083, %v1071
    %v1444 = vpack.c.b16 %v1096, %v1084
    %v1445 = vpack.c.b16 %v1097, %v1085
    %v1446 = vpack.c.b16 %v1098, %v1086
    %v1447 = vpack.c.b16 %v1099, %v1087
    %v1448 = vpack.c.b16 %v1100, %v1088
    %v1449 = vpack.c.b16 %v1101, %v1089
    %v1450 = vpack.c.b16 %v1102, %v1090
    %v1451 = vpack.c.b16 %v1103, %v1091
    %v1452 = vpack.c.b16 %v1104, %v1092
    %v1453 = vpack.c.b16 %v1105, %v1093
    %v1454 = vpack.c.b16 %v1106, %v1094
    %v1455 = vpack.c.b16 %v1107, %v1095
    %v1456 = vpack.c.b16 %v1120, %v1108
    %v1457 = vpack.c.b16 %v1121, %v1109
    %v1458 = vpack.c.b16 %v1122, %v1110
    %v1459 = vpack.c.b16 %v1123, %v1111
    %v1460 = vpack.c.b16 %v1124, %v1112
    %v1461 = vpack.c.b16 %v1125, %v1113
    %v1462 = vpack.c.b16 %v1126, %v1114
    %v1463 = vpack.c.b16 %v1127, %v1115
    %v1464 = vpack.c.b16 %v1128, %v1116
    %v1465 = vpack.c.b16 %v1129, %v1117
    %v1466 = vpack.c.b16 %v1130, %v1118
    %v1467 = vpack.c.b16 %v1131, %v1119
    %v1468 = vpack.c.b16 %v1144, %v1132
    %v1469 = vpack.c.b16 %v1145, %v1133
    %v1470 = vpack.c.b16 %v1146, %v1134
    %v1471 = vpack.c.b16 %v1147, %v1135
    %v1472 = vpack.c.b16 %v1148, %v1136
    %v1473 = vpack.c.b16 %v1149, %v1137
    %v1474 = vpack.c.b16 %v1150, %v1138
    %v1475 = vpack.c.b16 %v1151, %v1139
    %v1476 = vpack.c.b16 %v1152, %v1140
    %v1477 = vpack.c.b16 %v1153, %v1141
    %v1478 = vpack.c.b16 %v1154, %v1142
    %v1479 = vpack.c.b16 %v1155, %v1143
    %v1480 = vpack.c.b16 %v1168, %v1156
    %v1481 = vpack.c.b16 %v1169, %v1157
    %v1482 = vpack.c.b16 %v1170, %v1158
    %v1483 = vpack.c.b16 %v1171, %v1159
    %v1484 = vpack.c.b16 %v1172, %v1160
    %v1485 = vpack.c.b16 %v1173, %v1161
    %v1486 = vpack.c.b16 %v1174, %v1162
    %v1487 = vpack.c.b16 %v1175, %v1163
    %v1488 = vpack.c.b16 %v1176, %v1164
    %v1489 = vpack.c.b16 %v1177, %v1165
    %v1490 = vpack.c.b16 %v1178, %v1166
    %v1491 = vpack.c.b16 %v1179, %v1167
    %v1492 = vpack.c.b16 %v1192, %v1180
    %v1493 = vpack.c.b16 %v1193, %v1181
    %v1494 = vpack.c.b16 %v1194, %v1182
    %v1495 = vpack.c.b16 %v1195, %v1183
    %v1496 = vpack.c.b16 %v1196, %v1184
    %v1497 = vpack.c.b16 %v1197, %v1185
    %v1498 = vpack.c.b16 %v1198, %v1186
    %v1499 = vpack.c.b16 %v1199, %v1187
    %v1500 = vpack.c.b16 %v1200, %v1188
    %v1501 = vpack.c.b16 %v1201, %v1189
    %v1502 = vpack.c.b16 %v1202, %v1190
    %v1503 = vpack.c.b16 %v1203, %v1191
    %v1504 = vpack.c.b16 %v1216, %v1204
    %v1505 = vpack.c.b16 %v1217, %v1205
    %v1506 = vpack.c.b16 %v1218, %v1206
    %v1507 = vpack.c.b16 %v1219, %v1207
    %v1508 = vpack.c.b16 %v1220, %v1208
    %v1509 = vpack.c.b16 %v1221, %v1209
    %v1510 = vpack.c.b16 %v1222, %v1210
    %v1511 = vpack.c.b16 %v1223, %v1211
    %v1512 = vpack.c.b16 %v1224, %v1212
    %v1513 = vpack.c.b16 %v1225, %v1213
    %v1514 = vpack.c.b16 %v1226, %v1214
    %v1515 = vpack.c.b16 %v1227, %v1215
    %1804 = vmatprep.subr.bf16.mxu0 %v1229
    %1805 = vmatpush1.bf16.msra.mxu0 %v1228
    %1806 = vmatprep.subr.bf16.mxu0 %v1241
    %1807 = vmatpush1.bf16.msra.mxu0 %v1240
    %1808 = vmatprep.subr.bf16.mxu0 %v1253
    %1809 = vmatpush1.bf16.msra.mxu0 %v1252
    %1810 = vmatprep.subr.bf16.mxu0 %v1265
    %1811 = vmatpush1.bf16.msra.mxu0 %v1264
    %1812 = vmatprep.subr.bf16.mxu0 %v1277
    %1813 = vmatpush1.bf16.msra.mxu0 %v1276
    %1814 = vmatprep.subr.bf16.mxu0 %v1289
    %1815 = vmatpush1.bf16.msra.mxu0 %v1288
    %1816 = vmatprep.subr.bf16.mxu0 %v1301
    %1817 = vmatpush1.bf16.msra.mxu0 %v1300
    %1818 = vmatprep.subr.bf16.mxu0 %v1313
    %1819 = vmatpush1.bf16.msra.mxu0 %v1312
    %1820 = vmatprep.subr.bf16.mxu0 %v1325
    %1821 = vmatpush1.bf16.msra.mxu0 %v1324
    %1822 = vmatprep.subr.bf16.mxu0 %v1337
    %1823 = vmatpush1.bf16.msra.mxu0 %v1336
    %1824 = vmatprep.subr.bf16.mxu0 %v1349
    %1825 = vmatpush1.bf16.msra.mxu0 %v1348
    %1826 = vmatprep.subr.bf16.mxu0 %v1361
    %1827 = vmatpush1.bf16.msra.mxu0 %v1360
    %1828 = vmatprep.subr.bf16.mxu0 %v1373
    %1829 = vmatpush1.bf16.msra.mxu0 %v1372
    %1830 = vmatprep.subr.bf16.mxu0 %v1385
    %1831 = vmatpush1.bf16.msra.mxu0 %v1384
    %1832 = vmatprep.subr.bf16.mxu0 %v1397
    %1833 = vmatpush1.bf16.msra.mxu0 %v1396
    %1834 = vmatprep.subr.bf16.mxu0 %v1409
    %1835 = vmatpush1.bf16.msra.mxu0 %v1408
    %1836 = vmatprep.mubr.bf16.mxu0 0
    %1837 = vmatmul.mubr.bf16.gmra.mrb[0].mxu0 0
    %v1838 = vpop.f32.mrb[0].mxu0
    %v1839 = vadd.f32 0.0, %v1838
    %v1840 = vpop.f32.mrb[0].mxu0
    %v1841 = vadd.f32 0.0, %v1840
    %v1842 = vpop.f32.mrb[0].mxu0
    %v1843 = vpop.f32.mrb[0].mxu0
    %1844 = vdwg.mxu0
    %1845 = vmatprep.subr.bf16.mxu0 %v1421
    %1846 = vmatpush1.bf16.msra.mxu0 %v1420
    %1847 = vmatprep.subr.bf16.mxu0 %v1433
    %1848 = vmatpush1.bf16.msra.mxu0 %v1432
    %1849 = vmatprep.subr.bf16.mxu0 %v1445
    %1850 = vmatpush1.bf16.msra.mxu0 %v1444
    %1851 = vmatprep.subr.bf16.mxu0 %v1457
    %1852 = vmatpush1.bf16.msra.mxu0 %v1456
    %1853 = vmatprep.subr.bf16.mxu0 %v1469
    %1854 = vmatpush1.bf16.msra.mxu0 %v1468
    %1855 = vmatprep.subr.bf16.mxu0 %v1481
    %1856 = vmatpush1.bf16.msra.mxu0 %v1480
    %1857 = vmatprep.subr.bf16.mxu0 %v1493
    %1858 = vmatpush1.bf16.msra.mxu0 %v1492
    %1859 = vmatprep.subr.bf16.mxu0 %v1505
    %1860 = vmatpush1.bf16.msra.mxu0 %v1504
    %1861 = vmatprep.subr.bf16.mxu0 0
    %1862 = vmatpush1.bf16.msra.mxu0 0
    %1863 = vmatprep.subr.bf16.mxu0 0
    %1864 = vmatpush1.bf16.msra.mxu0 0
    %1865 = vmatprep.subr.bf16.mxu0 0
    %1866 = vmatpush1.bf16.msra.mxu0 0
    %1867 = vmatprep.subr.bf16.mxu0 0
    %1868 = vmatpush1.bf16.msra.mxu0 0
    %1869 = vmatprep.subr.bf16.mxu0 0
    %1870 = vmatpush1.bf16.msra.mxu0 0
    %1871 = vmatprep.subr.bf16.mxu0 0
    %1872 = vmatpush1.bf16.msra.mxu0 0
    %1873 = vmatprep.subr.bf16.mxu0 0
    %1874 = vmatpush1.bf16.msra.mxu0 0
    %1875 = vmatprep.subr.bf16.mxu0 0
    %1876 = vmatpush1.bf16.msra.mxu0 0
    %1877 = vmatprep.mubr.bf16.mxu0 0
    %1878 = vmatmul.mubr.bf16.gmra.mrb[0].mxu0 0
    %v1879 = vpop.f32.mrb[0].mxu0
    %v1880 = vadd.f32 %v1839, %v1879
    %v1881 = vpop.f32.mrb[0].mxu0
    %v1882 = vadd.f32 %v1841, %v1881
    %v1883 = vpop.f32.mrb[0].mxu0
    %v1884 = vpop.f32.mrb[0].mxu0
    %1885 = vdwg.mxu0
    %1886 = vmatprep.subr.bf16.mxu0 %v1231
    %1887 = vmatpush1.bf16.msra.mxu0 %v1230
    %1888 = vmatprep.subr.bf16.mxu0 %v1243
    %1889 = vmatpush1.bf16.msra.mxu0 %v1242
    %1890 = vmatprep.subr.bf16.mxu0 %v1255
    %1891 = vmatpush1.bf16.msra.mxu0 %v1254
    %1892 = vmatprep.subr.bf16.mxu0 %v1267
    %1893 = vmatpush1.bf16.msra.mxu0 %v1266
    %1894 = vmatprep.subr.bf16.mxu0 %v1279
    %1895 = vmatpush1.bf16.msra.mxu0 %v1278
    %1896 = vmatprep.subr.bf16.mxu0 %v1291
    %1897 = vmatpush1.bf16.msra.mxu0 %v1290
    %1898 = vmatprep.subr.bf16.mxu0 %v1303
    %1899 = vmatpush1.bf16.msra.mxu0 %v1302
    %1900 = vmatprep.subr.bf16.mxu0 %v1315
    %1901 = vmatpush1.bf16.msra.mxu0 %v1314
    %1902 = vmatprep.subr.bf16.mxu0 %v1327
    %1903 = vmatpush1.bf16.msra.mxu0 %v1326
    %1904 = vmatprep.subr.bf16.mxu0 %v1339
    %1905 = vmatpush1.bf16.msra.mxu0 %v1338
    %1906 = vmatprep.subr.bf16.mxu0 %v1351
    %1907 = vmatpush1.bf16.msra.mxu0 %v1350
    %1908 = vmatprep.subr.bf16.mxu0 %v1363
    %1909 = vmatpush1.bf16.msra.mxu0 %v1362
    %1910 = vmatprep.subr.bf16.mxu0 %v1375
    %1911 = vmatpush1.bf16.msra.mxu0 %v1374
    %1912 = vmatprep.subr.bf16.mxu0 %v1387
    %1913 = vmatpush1.bf16.msra.mxu0 %v1386
    %1914 = vmatprep.subr.bf16.mxu0 %v1399
    %1915 = vmatpush1.bf16.msra.mxu0 %v1398
    %1916 = vmatprep.subr.bf16.mxu0 %v1411
    %1917 = vmatpush1.bf16.msra.mxu0 %v1410
    %1918 = vmatprep.mubr.bf16.mxu0 0
    %1919 = vmatmul.mubr.bf16.gmra.mrb[0].mxu0 0
    %v1920 = vpop.f32.mrb[0].mxu0
    %v1921 = vadd.f32 0.0, %v1920
    %v1922 = vpop.f32.mrb[0].mxu0
    %v1923 = vadd.f32 0.0, %v1922
    %v1924 = vpop.f32.mrb[0].mxu0
    %v1925 = vpop.f32.mrb[0].mxu0
    %1926 = vdwg.mxu0
    %1927 = vmatprep.subr.bf16.mxu0 %v1423
    %1928 = vmatpush1.bf16.msra.mxu0 %v1422
    %1929 = vmatprep.subr.bf16.mxu0 %v1435
    %1930 = vmatpush1.bf16.msra.mxu0 %v1434
    %1931 = vmatprep.subr.bf16.mxu0 %v1447
    %1932 = vmatpush1.bf16.msra.mxu0 %v1446
    %1933 = vmatprep.subr.bf16.mxu0 %v1459
    %1934 = vmatpush1.bf16.msra.mxu0 %v1458
    %1935 = vmatprep.subr.bf16.mxu0 %v1471
    %1936 = vmatpush1.bf16.msra.mxu0 %v1470
    %1937 = vmatprep.subr.bf16.mxu0 %v1483
    %1938 = vmatpush1.bf16.msra.mxu0 %v1482
    %1939 = vmatprep.subr.bf16.mxu0 %v1495
    %1940 = vmatpush1.bf16.msra.mxu0 %v1494
    %1941 = vmatprep.subr.bf16.mxu0 %v1507
    %1942 = vmatpush1.bf16.msra.mxu0 %v1506
    %1943 = vmatprep.subr.bf16.mxu0 0
    %1944 = vmatpush1.bf16.msra.mxu0 0
    %1945 = vmatprep.subr.bf16.mxu0 0
    %1946 = vmatpush1.bf16.msra.mxu0 0
    %1947 = vmatprep.subr.bf16.mxu0 0
    %1948 = vmatpush1.bf16.msra.mxu0 0
    %1949 = vmatprep.subr.bf16.mxu0 0
    %1950 = vmatpush1.bf16.msra.mxu0 0
    %1951 = vmatprep.subr.bf16.mxu0 0
    %1952 = vmatpush1.bf16.msra.mxu0 0
    %1953 = vmatprep.subr.bf16.mxu0 0
    %1954 = vmatpush1.bf16.msra.mxu0 0
    %1955 = vmatprep.subr.bf16.mxu0 0
    %1956 = vmatpush1.bf16.msra.mxu0 0
    %1957 = vmatprep.subr.bf16.mxu0 0
    %1958 = vmatpush1.bf16.msra.mxu0 0
    %1959 = vmatprep.mubr.bf16.mxu0 0
    %1960 = vmatmul.mubr.bf16.gmra.mrb[0].mxu0 0
    %v1961 = vpop.f32.mrb[0].mxu0
    %v1962 = vadd.f32 %v1921, %v1961
    %v1963 = vpop.f32.mrb[0].mxu0
    %v1964 = vadd.f32 %v1923, %v1963
    %v1965 = vpop.f32.mrb[0].mxu0
    %v1966 = vpop.f32.mrb[0].mxu0
    %1967 = vdwg.mxu0
    %1968 = vmatprep.subr.bf16.mxu0 %v1233
    %1969 = vmatpush1.bf16.msra.mxu0 %v1232
    %1970 = vmatprep.subr.bf16.mxu0 %v1245
    %1971 = vmatpush1.bf16.msra.mxu0 %v1244
    %1972 = vmatprep.subr.bf16.mxu0 %v1257
    %1973 = vmatpush1.bf16.msra.mxu0 %v1256
    %1974 = vmatprep.subr.bf16.mxu0 %v1269
    %1975 = vmatpush1.bf16.msra.mxu0 %v1268
    %1976 = vmatprep.subr.bf16.mxu0 %v1281
    %1977 = vmatpush1.bf16.msra.mxu0 %v1280
    %1978 = vmatprep.subr.bf16.mxu0 %v1293
    %1979 = vmatpush1.bf16.msra.mxu0 %v1292
    %1980 = vmatprep.subr.bf16.mxu0 %v1305
    %1981 = vmatpush1.bf16.msra.mxu0 %v1304
    %1982 = vmatprep.subr.bf16.mxu0 %v1317
    %1983 = vmatpush1.bf16.msra.mxu0 %v1316
    %1984 = vmatprep.subr.bf16.mxu0 %v1329
    %1985 = vmatpush1.bf16.msra.mxu0 %v1328
    %1986 = vmatprep.subr.bf16.mxu0 %v1341
    %1987 = vmatpush1.bf16.msra.mxu0 %v1340
    %1988 = vmatprep.subr.bf16.mxu0 %v1353
    %1989 = vmatpush1.bf16.msra.mxu0 %v1352
    %1990 = vmatprep.subr.bf16.mxu0 %v1365
    %1991 = vmatpush1.bf16.msra.mxu0 %v1364
    %1992 = vmatprep.subr.bf16.mxu0 %v1377
    %1993 = vmatpush1.bf16.msra.mxu0 %v1376
    %1994 = vmatprep.subr.bf16.mxu0 %v1389
    %1995 = vmatpush1.bf16.msra.mxu0 %v1388
    %1996 = vmatprep.subr.bf16.mxu0 %v1401
    %1997 = vmatpush1.bf16.msra.mxu0 %v1400
    %1998 = vmatprep.subr.bf16.mxu0 %v1413
    %1999 = vmatpush1.bf16.msra.mxu0 %v1412
    %2000 = vmatprep.mubr.bf16.mxu0 0
    %2001 = vmatmul.mubr.bf16.gmra.mrb[0].mxu0 0
    %v2002 = vpop.f32.mrb[0].mxu0
    %v2003 = vadd.f32 0.0, %v2002
    %v2004 = vpop.f32.mrb[0].mxu0
    %v2005 = vadd.f32 0.0, %v2004
    %v2006 = vpop.f32.mrb[0].mxu0
    %v2007 = vpop.f32.mrb[0].mxu0
    %2008 = vdwg.mxu0
    %2009 = vmatprep.subr.bf16.mxu0 %v1425
    %2010 = vmatpush1.bf16.msra.mxu0 %v1424
    %2011 = vmatprep.subr.bf16.mxu0 %v1437
    %2012 = vmatpush1.bf16.msra.mxu0 %v1436
    %2013 = vmatprep.subr.bf16.mxu0 %v1449
    %2014 = vmatpush1.bf16.msra.mxu0 %v1448
    %2015 = vmatprep.subr.bf16.mxu0 %v1461
    %2016 = vmatpush1.bf16.msra.mxu0 %v1460
    %2017 = vmatprep.subr.bf16.mxu0 %v1473
    %2018 = vmatpush1.bf16.msra.mxu0 %v1472
    %2019 = vmatprep.subr.bf16.mxu0 %v1485
    %2020 = vmatpush1.bf16.msra.mxu0 %v1484
    %2021 = vmatprep.subr.bf16.mxu0 %v1497
    %2022 = vmatpush1.bf16.msra.mxu0 %v1496
    %2023 = vmatprep.subr.bf16.mxu0 %v1509
    %2024 = vmatpush1.bf16.msra.mxu0 %v1508
    %2025 = vmatprep.subr.bf16.mxu0 0
    %2026 = vmatpush1.bf16.msra.mxu0 0
    %2027 = vmatprep.subr.bf16.mxu0 0
    %2028 = vmatpush1.bf16.msra.mxu0 0
    %2029 = vmatprep.subr.bf16.mxu0 0
    %2030 = vmatpush1.bf16.msra.mxu0 0
    %2031 = vmatprep.subr.bf16.mxu0 0
    %2032 = vmatpush1.bf16.msra.mxu0 0
    %2033 = vmatprep.subr.bf16.mxu0 0
    %2034 = vmatpush1.bf16.msra.mxu0 0
    %2035 = vmatprep.subr.bf16.mxu0 0
    %2036 = vmatpush1.bf16.msra.mxu0 0
    %2037 = vmatprep.subr.bf16.mxu0 0
    %2038 = vmatpush1.bf16.msra.mxu0 0
    %2039 = vmatprep.subr.bf16.mxu0 0
    %2040 = vmatpush1.bf16.msra.mxu0 0
    %2041 = vmatprep.mubr.bf16.mxu0 0
    %2042 = vmatmul.mubr.bf16.gmra.mrb[0].mxu0 0
    %v2043 = vpop.f32.mrb[0].mxu0
    %v2044 = vadd.f32 %v2003, %v2043
    %v2045 = vpop.f32.mrb[0].mxu0
    %v2046 = vadd.f32 %v2005, %v2045
    %v2047 = vpop.f32.mrb[0].mxu0
    %v2048 = vpop.f32.mrb[0].mxu0
    %2049 = vdwg.mxu0
    %2050 = vmatprep.subr.bf16.mxu0 %v1235
    %2051 = vmatpush1.bf16.msra.mxu0 %v1234
    %2052 = vmatprep.subr.bf16.mxu0 %v1247
    %2053 = vmatpush1.bf16.msra.mxu0 %v1246
    %2054 = vmatprep.subr.bf16.mxu0 %v1259
    %2055 = vmatpush1.bf16.msra.mxu0 %v1258
    %2056 = vmatprep.subr.bf16.mxu0 %v1271
    %2057 = vmatpush1.bf16.msra.mxu0 %v1270
    %2058 = vmatprep.subr.bf16.mxu0 %v1283
    %2059 = vmatpush1.bf16.msra.mxu0 %v1282
    %2060 = vmatprep.subr.bf16.mxu0 %v1295
    %2061 = vmatpush1.bf16.msra.mxu0 %v1294
    %2062 = vmatprep.subr.bf16.mxu0 %v1307
    %2063 = vmatpush1.bf16.msra.mxu0 %v1306
    %2064 = vmatprep.subr.bf16.mxu0 %v1319
    %2065 = vmatpush1.bf16.msra.mxu0 %v1318
    %2066 = vmatprep.subr.bf16.mxu0 %v1331
    %2067 = vmatpush1.bf16.msra.mxu0 %v1330
    %2068 = vmatprep.subr.bf16.mxu0 %v1343
    %2069 = vmatpush1.bf16.msra.mxu0 %v1342
    %2070 = vmatprep.subr.bf16.mxu0 %v1355
    %2071 = vmatpush1.bf16.msra.mxu0 %v1354
    %2072 = vmatprep.subr.bf16.mxu0 %v1367
    %2073 = vmatpush1.bf16.msra.mxu0 %v1366
    %2074 = vmatprep.subr.bf16.mxu0 %v1379
    %2075 = vmatpush1.bf16.msra.mxu0 %v1378
    %2076 = vmatprep.subr.bf16.mxu0 %v1391
    %2077 = vmatpush1.bf16.msra.mxu0 %v1390
    %2078 = vmatprep.subr.bf16.mxu0 %v1403
    %2079 = vmatpush1.bf16.msra.mxu0 %v1402
    %2080 = vmatprep.subr.bf16.mxu0 %v1415
    %2081 = vmatpush1.bf16.msra.mxu0 %v1414
    %2082 = vmatprep.mubr.bf16.mxu0 0
    %2083 = vmatmul.mubr.bf16.gmra.mrb[0].mxu0 0
    %v2084 = vpop.f32.mrb[0].mxu0
    %v2085 = vadd.f32 0.0, %v2084
    %v2086 = vpop.f32.mrb[0].mxu0
    %v2087 = vadd.f32 0.0, %v2086
    %v2088 = vpop.f32.mrb[0].mxu0
    %v2089 = vpop.f32.mrb[0].mxu0
    %2090 = vdwg.mxu0
    %2091 = vmatprep.subr.bf16.mxu0 %v1427
    %2092 = vmatpush1.bf16.msra.mxu0 %v1426
    %2093 = vmatprep.subr.bf16.mxu0 %v1439
    %2094 = vmatpush1.bf16.msra.mxu0 %v1438
    %2095 = vmatprep.subr.bf16.mxu0 %v1451
    %2096 = vmatpush1.bf16.msra.mxu0 %v1450
    %2097 = vmatprep.subr.bf16.mxu0 %v1463
    %2098 = vmatpush1.bf16.msra.mxu0 %v1462
    %2099 = vmatprep.subr.bf16.mxu0 %v1475
    %2100 = vmatpush1.bf16.msra.mxu0 %v1474
    %2101 = vmatprep.subr.bf16.mxu0 %v1487
    %2102 = vmatpush1.bf16.msra.mxu0 %v1486
    %2103 = vmatprep.subr.bf16.mxu0 %v1499
    %2104 = vmatpush1.bf16.msra.mxu0 %v1498
    %2105 = vmatprep.subr.bf16.mxu0 %v1511
    %2106 = vmatpush1.bf16.msra.mxu0 %v1510
    %2107 = vmatprep.subr.bf16.mxu0 0
    %2108 = vmatpush1.bf16.msra.mxu0 0
    %2109 = vmatprep.subr.bf16.mxu0 0
    %2110 = vmatpush1.bf16.msra.mxu0 0
    %2111 = vmatprep.subr.bf16.mxu0 0
    %2112 = vmatpush1.bf16.msra.mxu0 0
    %2113 = vmatprep.subr.bf16.mxu0 0
    %2114 = vmatpush1.bf16.msra.mxu0 0
    %2115 = vmatprep.subr.bf16.mxu0 0
    %2116 = vmatpush1.bf16.msra.mxu0 0
    %2117 = vmatprep.subr.bf16.mxu0 0
    %2118 = vmatpush1.bf16.msra.mxu0 0
    %2119 = vmatprep.subr.bf16.mxu0 0
    %2120 = vmatpush1.bf16.msra.mxu0 0
    %2121 = vmatprep.subr.bf16.mxu0 0
    %2122 = vmatpush1.bf16.msra.mxu0 0
    %2123 = vmatprep.mubr.bf16.mxu0 0
    %2124 = vmatmul.mubr.bf16.gmra.mrb[0].mxu0 0
    %v2125 = vpop.f32.mrb[0].mxu0
    %v2126 = vadd.f32 %v2085, %v2125
    %v2127 = vpop.f32.mrb[0].mxu0
    %v2128 = vadd.f32 %v2087, %v2127
    %v2129 = vpop.f32.mrb[0].mxu0
    %v2130 = vpop.f32.mrb[0].mxu0
    %2131 = vdwg.mxu0
    %2132 = vmatprep.subr.bf16.mxu0 %v1237
    %2133 = vmatpush1.bf16.msra.mxu0 %v1236
    %2134 = vmatprep.subr.bf16.mxu0 %v1249
    %2135 = vmatpush1.bf16.msra.mxu0 %v1248
    %2136 = vmatprep.subr.bf16.mxu0 %v1261
    %2137 = vmatpush1.bf16.msra.mxu0 %v1260
    %2138 = vmatprep.subr.bf16.mxu0 %v1273
    %2139 = vmatpush1.bf16.msra.mxu0 %v1272
    %2140 = vmatprep.subr.bf16.mxu0 %v1285
    %2141 = vmatpush1.bf16.msra.mxu0 %v1284
    %2142 = vmatprep.subr.bf16.mxu0 %v1297
    %2143 = vmatpush1.bf16.msra.mxu0 %v1296
    %2144 = vmatprep.subr.bf16.mxu0 %v1309
    %2145 = vmatpush1.bf16.msra.mxu0 %v1308
    %2146 = vmatprep.subr.bf16.mxu0 %v1321
    %2147 = vmatpush1.bf16.msra.mxu0 %v1320
    %2148 = vmatprep.subr.bf16.mxu0 %v1333
    %2149 = vmatpush1.bf16.msra.mxu0 %v1332
    %2150 = vmatprep.subr.bf16.mxu0 %v1345
    %2151 = vmatpush1.bf16.msra.mxu0 %v1344
    %2152 = vmatprep.subr.bf16.mxu0 %v1357
    %2153 = vmatpush1.bf16.msra.mxu0 %v1356
    %2154 = vmatprep.subr.bf16.mxu0 %v1369
    %2155 = vmatpush1.bf16.msra.mxu0 %v1368
    %2156 = vmatprep.subr.bf16.mxu0 %v1381
    %2157 = vmatpush1.bf16.msra.mxu0 %v1380
    %2158 = vmatprep.subr.bf16.mxu0 %v1393
    %2159 = vmatpush1.bf16.msra.mxu0 %v1392
    %2160 = vmatprep.subr.bf16.mxu0 %v1405
    %2161 = vmatpush1.bf16.msra.mxu0 %v1404
    %2162 = vmatprep.subr.bf16.mxu0 %v1417
    %2163 = vmatpush1.bf16.msra.mxu0 %v1416
    %2164 = vmatprep.mubr.bf16.mxu0 0
    %2165 = vmatmul.mubr.bf16.gmra.mrb[0].mxu0 0
    %v2166 = vpop.f32.mrb[0].mxu0
    %v2167 = vadd.f32 0.0, %v2166
    %v2168 = vpop.f32.mrb[0].mxu0
    %v2169 = vadd.f32 0.0, %v2168
    %v2170 = vpop.f32.mrb[0].mxu0
    %v2171 = vpop.f32.mrb[0].mxu0
    %2172 = vdwg.mxu0
    %2173 = vmatprep.subr.bf16.mxu0 %v1429
    %2174 = vmatpush1.bf16.msra.mxu0 %v1428
    %2175 = vmatprep.subr.bf16.mxu0 %v1441
    %2176 = vmatpush1.bf16.msra.mxu0 %v1440
    %2177 = vmatprep.subr.bf16.mxu0 %v1453
    %2178 = vmatpush1.bf16.msra.mxu0 %v1452
    %2179 = vmatprep.subr.bf16.mxu0 %v1465
    %2180 = vmatpush1.bf16.msra.mxu0 %v1464
    %2181 = vmatprep.subr.bf16.mxu0 %v1477
    %2182 = vmatpush1.bf16.msra.mxu0 %v1476
    %2183 = vmatprep.subr.bf16.mxu0 %v1489
    %2184 = vmatpush1.bf16.msra.mxu0 %v1488
    %2185 = vmatprep.subr.bf16.mxu0 %v1501
    %2186 = vmatpush1.bf16.msra.mxu0 %v1500
    %2187 = vmatprep.subr.bf16.mxu0 %v1513
    %2188 = vmatpush1.bf16.msra.mxu0 %v1512
    %2189 = vmatprep.subr.bf16.mxu0 0
    %2190 = vmatpush1.bf16.msra.mxu0 0
    %2191 = vmatprep.subr.bf16.mxu0 0
    %2192 = vmatpush1.bf16.msra.mxu0 0
    %2193 = vmatprep.subr.bf16.mxu0 0
    %2194 = vmatpush1.bf16.msra.mxu0 0
    %2195 = vmatprep.subr.bf16.mxu0 0
    %2196 = vmatpush1.bf16.msra.mxu0 0
    %2197 = vmatprep.subr.bf16.mxu0 0
    %2198 = vmatpush1.bf16.msra.mxu0 0
    %2199 = vmatprep.subr.bf16.mxu0 0
    %2200 = vmatpush1.bf16.msra.mxu0 0
    %2201 = vmatprep.subr.bf16.mxu0 0
    %2202 = vmatpush1.bf16.msra.mxu0 0
    %2203 = vmatprep.subr.bf16.mxu0 0
    %2204 = vmatpush1.bf16.msra.mxu0 0
    %2205 = vmatprep.mubr.bf16.mxu0 0
    %2206 = vmatmul.mubr.bf16.gmra.mrb[0].mxu0 0
    %v2207 = vpop.f32.mrb[0].mxu0
    %v2208 = vadd.f32 %v2167, %v2207
    %v2209 = vpop.f32.mrb[0].mxu0
    %v2210 = vadd.f32 %v2169, %v2209
    %v2211 = vpop.f32.mrb[0].mxu0
    %v2212 = vpop.f32.mrb[0].mxu0
    %2213 = vdwg.mxu0
    %2214 = vmatprep.subr.bf16.mxu0 %v1239
    %2215 = vmatpush1.bf16.msra.mxu0 %v1238
    %2216 = vmatprep.subr.bf16.mxu0 %v1251
    %2217 = vmatpush1.bf16.msra.mxu0 %v1250
    %2218 = vmatprep.subr.bf16.mxu0 %v1263
    %2219 = vmatpush1.bf16.msra.mxu0 %v1262
    %2220 = vmatprep.subr.bf16.mxu0 %v1275
    %2221 = vmatpush1.bf16.msra.mxu0 %v1274
    %2222 = vmatprep.subr.bf16.mxu0 %v1287
    %2223 = vmatpush1.bf16.msra.mxu0 %v1286
    %2224 = vmatprep.subr.bf16.mxu0 %v1299
    %2225 = vmatpush1.bf16.msra.mxu0 %v1298
    %2226 = vmatprep.subr.bf16.mxu0 %v1311
    %2227 = vmatpush1.bf16.msra.mxu0 %v1310
    %2228 = vmatprep.subr.bf16.mxu0 %v1323
    %2229 = vmatpush1.bf16.msra.mxu0 %v1322
    %2230 = vmatprep.subr.bf16.mxu0 %v1335
    %2231 = vmatpush1.bf16.msra.mxu0 %v1334
    %2232 = vmatprep.subr.bf16.mxu0 %v1347
    %2233 = vmatpush1.bf16.msra.mxu0 %v1346
    %2234 = vmatprep.subr.bf16.mxu0 %v1359
    %2235 = vmatpush1.bf16.msra.mxu0 %v1358
    %2236 = vmatprep.subr.bf16.mxu0 %v1371
    %2237 = vmatpush1.bf16.msra.mxu0 %v1370
    %2238 = vmatprep.subr.bf16.mxu0 %v1383
    %2239 = vmatpush1.bf16.msra.mxu0 %v1382
    %2240 = vmatprep.subr.bf16.mxu0 %v1395
    %2241 = vmatpush1.bf16.msra.mxu0 %v1394
    %2242 = vmatprep.subr.bf16.mxu0 %v1407
    %2243 = vmatpush1.bf16.msra.mxu0 %v1406
    %2244 = vmatprep.subr.bf16.mxu0 %v1419
    %2245 = vmatpush1.bf16.msra.mxu0 %v1418
    %2246 = vmatprep.mubr.bf16.mxu0 0
    %2247 = vmatmul.mubr.bf16.gmra.mrb[0].mxu0 0
    %v2248 = vpop.f32.mrb[0].mxu0
    %v2249 = vadd.f32 0.0, %v2248
    %v2250 = vpop.f32.mrb[0].mxu0
    %v2251 = vadd.f32 0.0, %v2250
    %v2252 = vpop.f32.mrb[0].mxu0
    %v2253 = vpop.f32.mrb[0].mxu0
    %2254 = vdwg.mxu0
    %2255 = vmatprep.subr.bf16.mxu0 %v1431
    %2256 = vmatpush1.bf16.msra.mxu0 %v1430
    %2257 = vmatprep.subr.bf16.mxu0 %v1443
    %2258 = vmatpush1.bf16.msra.mxu0 %v1442
    %2259 = vmatprep.subr.bf16.mxu0 %v1455
    %2260 = vmatpush1.bf16.msra.mxu0 %v1454
    %2261 = vmatprep.subr.bf16.mxu0 %v1467
    %2262 = vmatpush1.bf16.msra.mxu0 %v1466
    %2263 = vmatprep.subr.bf16.mxu0 %v1479
    %2264 = vmatpush1.bf16.msra.mxu0 %v1478
    %2265 = vmatprep.subr.bf16.mxu0 %v1491
    %2266 = vmatpush1.bf16.msra.mxu0 %v1490
    %2267 = vmatprep.subr.bf16.mxu0 %v1503
    %2268 = vmatpush1.bf16.msra.mxu0 %v1502
    %2269 = vmatprep.subr.bf16.mxu0 %v1515
    %2270 = vmatpush1.bf16.msra.mxu0 %v1514
    %2271 = vmatprep.subr.bf16.mxu0 0
    %2272 = vmatpush1.bf16.msra.mxu0 0
    %2273 = vmatprep.subr.bf16.mxu0 0
    %2274 = vmatpush1.bf16.msra.mxu0 0
    %2275 = vmatprep.subr.bf16.mxu0 0
    %2276 = vmatpush1.bf16.msra.mxu0 0
    %2277 = vmatprep.subr.bf16.mxu0 0
    %2278 = vmatpush1.bf16.msra.mxu0 0
    %2279 = vmatprep.subr.bf16.mxu0 0
    %2280 = vmatpush1.bf16.msra.mxu0 0
    %2281 = vmatprep.subr.bf16.mxu0 0
    %2282 = vmatpush1.bf16.msra.mxu0 0
    %2283 = vmatprep.subr.bf16.mxu0 0
    %2284 = vmatpush1.bf16.msra.mxu0 0
    %2285 = vmatprep.subr.bf16.mxu0 0
    %2286 = vmatpush1.bf16.msra.mxu0 0
    %2287 = vmatprep.mubr.bf16.mxu0 0
    %2288 = vmatmul.mubr.bf16.gmra.mrb[0].mxu0 0
    %v2289 = vpop.f32.mrb[0].mxu0
    %v2290 = vadd.f32 %v2249, %v2289
    %v2291 = vpop.f32.mrb[0].mxu0
    %v2292 = vadd.f32 %v2251, %v2291
    %v2293 = vpop.f32.mrb[0].mxu0
    %v2294 = vpop.f32.mrb[0].mxu0
    %2295 = vdwg.mxu0
    %v2320 = vunpack.c.l.b16 %v49
    %v2321 = vunpack.c.h.b16 %v49
    %v2322 = vunpack.c.l.b16 %v50
    %v2323 = vunpack.c.h.b16 %v50
    %v2324 = vunpack.c.l.b16 %v51
    %v2325 = vunpack.c.h.b16 %v51
    %v2326 = vunpack.c.l.b16 %v52
    %v2327 = vunpack.c.h.b16 %v52
    %v2328 = vunpack.c.l.b16 %v53
    %v2329 = vunpack.c.h.b16 %v53
    %v2330 = vunpack.c.l.b16 %v54
    %v2331 = vunpack.c.h.b16 %v54
    %v2332 = vunpack.c.l.b16 %v55
    %v2333 = vunpack.c.h.b16 %v55
    %v2334 = vunpack.c.l.b16 %v56
    %v2335 = vunpack.c.h.b16 %v56
    %v2336 = vunpack.c.l.b16 %v57
    %v2337 = vunpack.c.h.b16 %v57
    %v2338 = vunpack.c.l.b16 %v58
    %v2339 = vunpack.c.h.b16 %v58
    %v2340 = vunpack.c.l.b16 %v59
    %v2341 = vunpack.c.h.b16 %v59
    %v2342 = vunpack.c.l.b16 %v60
    %v2343 = vunpack.c.h.b16 %v60
    %v2344 = vunpack.c.l.b16 %v61
    %v2345 = vunpack.c.h.b16 %v61
    %v2346 = vunpack.c.l.b16 %v62
    %v2347 = vunpack.c.h.b16 %v62
    %v2348 = vunpack.c.l.b16 %v63
    %v2349 = vunpack.c.h.b16 %v63
    %v2350 = vunpack.c.l.b16 %v64
    %v2351 = vunpack.c.h.b16 %v64
    %v2352 = vunpack.c.l.b16 %v65
    %v2353 = vunpack.c.h.b16 %v65
    %v2354 = vunpack.c.l.b16 %v66
    %v2355 = vunpack.c.h.b16 %v66
    %v2356 = vunpack.c.l.b16 %v67
    %v2357 = vunpack.c.h.b16 %v67
    %v2358 = vunpack.c.l.b16 %v68
    %v2359 = vunpack.c.h.b16 %v68
    %v2360 = vunpack.c.l.b16 %v69
    %v2361 = vunpack.c.h.b16 %v69
    %v2362 = vunpack.c.l.b16 %v70
    %v2363 = vunpack.c.h.b16 %v70
    %v2364 = vunpack.c.l.b16 %v71
    %v2365 = vunpack.c.h.b16 %v71
    %v2366 = vunpack.c.l.b16 %v72
    %v2367 = vunpack.c.h.b16 %v72
    %v2368 = vpack.c.b16 %v2332, %v2320
    %v2369 = vpack.c.b16 %v2333, %v2321
    %v2370 = vpack.c.b16 %v2334, %v2322
    %v2371 = vpack.c.b16 %v2335, %v2323
    %v2372 = vpack.c.b16 %v2336, %v2324
    %v2373 = vpack.c.b16 %v2337, %v2325
    %v2374 = vpack.c.b16 %v2338, %v2326
    %v2375 = vpack.c.b16 %v2339, %v2327
    %v2376 = vpack.c.b16 %v2340, %v2328
    %v2377 = vpack.c.b16 %v2341, %v2329
    %v2378 = vpack.c.b16 %v2342, %v2330
    %v2379 = vpack.c.b16 %v2343, %v2331
    %v2380 = vpack.c.b16 %v2356, %v2344
    %v2381 = vpack.c.b16 %v2357, %v2345
    %v2382 = vpack.c.b16 %v2358, %v2346
    %v2383 = vpack.c.b16 %v2359, %v2347
    %v2384 = vpack.c.b16 %v2360, %v2348
    %v2385 = vpack.c.b16 %v2361, %v2349
    %v2386 = vpack.c.b16 %v2362, %v2350
    %v2387 = vpack.c.b16 %v2363, %v2351
    %v2388 = vpack.c.b16 %v2364, %v2352
    %v2389 = vpack.c.b16 %v2365, %v2353
    %v2390 = vpack.c.b16 %v2366, %v2354
    %v2391 = vpack.c.b16 %v2367, %v2355
    %vm2416 = vcmask 261120
    %v2418 = vsel %vm2416, %v363, 0
    %2420 = vmatprep.subr.bf16.mxu0 %v2369
    %2421 = vmatpush1.bf16.msra.mxu0 %v2368
    %2422 = vmatprep.subr.bf16.mxu0 %v2381
    %2423 = vmatpush1.bf16.msra.mxu0 %v2380
    %2424 = vmatprep.subr.bf16.mxu0 0
    %2425 = vmatpush1.bf16.msra.mxu0 0
    %2426 = vmatprep.subr.bf16.mxu0 0
    %2427 = vmatpush1.bf16.msra.mxu0 0
    %2428 = vmatprep.subr.bf16.mxu0 0
    %2429 = vmatpush1.bf16.msra.mxu0 0
    %2430 = vmatprep.subr.bf16.mxu0 0
    %2431 = vmatpush1.bf16.msra.mxu0 0
    %2432 = vmatprep.subr.bf16.mxu0 0
    %2433 = vmatpush1.bf16.msra.mxu0 0
    %2434 = vmatprep.subr.bf16.mxu0 0
    %2435 = vmatpush1.bf16.msra.mxu0 0
    %2436 = vmatprep.subr.bf16.mxu0 0
    %2437 = vmatpush1.bf16.msra.mxu0 0
    %2438 = vmatprep.subr.bf16.mxu0 0
    %2439 = vmatpush1.bf16.msra.mxu0 0
    %2440 = vmatprep.subr.bf16.mxu0 0
    %2441 = vmatpush1.bf16.msra.mxu0 0
    %2442 = vmatprep.subr.bf16.mxu0 0
    %2443 = vmatpush1.bf16.msra.mxu0 0
    %2444 = vmatprep.subr.bf16.mxu0 0
    %2445 = vmatpush1.bf16.msra.mxu0 0
    %2446 = vmatprep.subr.bf16.mxu0 0
    %2447 = vmatpush1.bf16.msra.mxu0 0
    %2448 = vmatprep.subr.bf16.mxu0 0
    %2449 = vmatpush1.bf16.msra.mxu0 0
    %2450 = vmatprep.subr.bf16.mxu0 0
    %2451 = vmatpush1.bf16.msra.mxu0 0
    %2452 = vmatprep.mubr.bf16.mxu0 0
    %2453 = vmatmul.mubr.bf16.gmra.mrb[0].mxu0 %v2418
    %v2454 = vpop.f32.mrb[0].mxu0
    %v2455 = vadd.f32 %v1880, %v2454
    %v2456 = vpop.f32.mrb[0].mxu0
    %v2457 = vadd.f32 %v1882, %v2456
    %v2458 = vpop.f32.mrb[0].mxu0
    %v2459 = vpop.f32.mrb[0].mxu0
    %2460 = vdwg.mxu0
    %2461 = vmatprep.subr.bf16.mxu0 %v2371
    %2462 = vmatpush1.bf16.msra.mxu0 %v2370
    %2463 = vmatprep.subr.bf16.mxu0 %v2383
    %2464 = vmatpush1.bf16.msra.mxu0 %v2382
    %2465 = vmatprep.subr.bf16.mxu0 0
    %2466 = vmatpush1.bf16.msra.mxu0 0
    %2467 = vmatprep.subr.bf16.mxu0 0
    %2468 = vmatpush1.bf16.msra.mxu0 0
    %2469 = vmatprep.subr.bf16.mxu0 0
    %2470 = vmatpush1.bf16.msra.mxu0 0
    %2471 = vmatprep.subr.bf16.mxu0 0
    %2472 = vmatpush1.bf16.msra.mxu0 0
    %2473 = vmatprep.subr.bf16.mxu0 0
    %2474 = vmatpush1.bf16.msra.mxu0 0
    %2475 = vmatprep.subr.bf16.mxu0 0
    %2476 = vmatpush1.bf16.msra.mxu0 0
    %2477 = vmatprep.subr.bf16.mxu0 0
    %2478 = vmatpush1.bf16.msra.mxu0 0
    %2479 = vmatprep.subr.bf16.mxu0 0
    %2480 = vmatpush1.bf16.msra.mxu0 0
    %2481 = vmatprep.subr.bf16.mxu0 0
    %2482 = vmatpush1.bf16.msra.mxu0 0
    %2483 = vmatprep.subr.bf16.mxu0 0
    %2484 = vmatpush1.bf16.msra.mxu0 0
    %2485 = vmatprep.subr.bf16.mxu0 0
    %2486 = vmatpush1.bf16.msra.mxu0 0
    %2487 = vmatprep.subr.bf16.mxu0 0
    %2488 = vmatpush1.bf16.msra.mxu0 0
    %2489 = vmatprep.subr.bf16.mxu0 0
    %2490 = vmatpush1.bf16.msra.mxu0 0
    %2491 = vmatprep.subr.bf16.mxu0 0
    %2492 = vmatpush1.bf16.msra.mxu0 0
    %2493 = vmatprep.mubr.bf16.mxu0 0
    %2494 = vmatmul.mubr.bf16.gmra.mrb[0].mxu0 %v2418
    %v2495 = vpop.f32.mrb[0].mxu0
    %v2496 = vadd.f32 %v1962, %v2495
    %v2497 = vpop.f32.mrb[0].mxu0
    %v2498 = vadd.f32 %v1964, %v2497
    %v2499 = vpop.f32.mrb[0].mxu0
    %v2500 = vpop.f32.mrb[0].mxu0
    %2501 = vdwg.mxu0
    %2502 = vmatprep.subr.bf16.mxu0 %v2373
    %2503 = vmatpush1.bf16.msra.mxu0 %v2372
    %2504 = vmatprep.subr.bf16.mxu0 %v2385
    %2505 = vmatpush1.bf16.msra.mxu0 %v2384
    %2506 = vmatprep.subr.bf16.mxu0 0
    %2507 = vmatpush1.bf16.msra.mxu0 0
    %2508 = vmatprep.subr.bf16.mxu0 0
    %2509 = vmatpush1.bf16.msra.mxu0 0
    %2510 = vmatprep.subr.bf16.mxu0 0
    %2511 = vmatpush1.bf16.msra.mxu0 0
    %2512 = vmatprep.subr.bf16.mxu0 0
    %2513 = vmatpush1.bf16.msra.mxu0 0
    %2514 = vmatprep.subr.bf16.mxu0 0
    %2515 = vmatpush1.bf16.msra.mxu0 0
    %2516 = vmatprep.subr.bf16.mxu0 0
    %2517 = vmatpush1.bf16.msra.mxu0 0
    %2518 = vmatprep.subr.bf16.mxu0 0
    %2519 = vmatpush1.bf16.msra.mxu0 0
    %2520 = vmatprep.subr.bf16.mxu0 0
    %2521 = vmatpush1.bf16.msra.mxu0 0
    %2522 = vmatprep.subr.bf16.mxu0 0
    %2523 = vmatpush1.bf16.msra.mxu0 0
    %2524 = vmatprep.subr.bf16.mxu0 0
    %2525 = vmatpush1.bf16.msra.mxu0 0
    %2526 = vmatprep.subr.bf16.mxu0 0
    %2527 = vmatpush1.bf16.msra.mxu0 0
    %2528 = vmatprep.subr.bf16.mxu0 0
    %2529 = vmatpush1.bf16.msra.mxu0 0
    %2530 = vmatprep.subr.bf16.mxu0 0
    %2531 = vmatpush1.bf16.msra.mxu0 0
    %2532 = vmatprep.subr.bf16.mxu0 0
    %2533 = vmatpush1.bf16.msra.mxu0 0
    %2534 = vmatprep.mubr.bf16.mxu0 0
    %2535 = vmatmul.mubr.bf16.gmra.mrb[0].mxu0 %v2418
    %v2536 = vpop.f32.mrb[0].mxu0
    %v2537 = vadd.f32 %v2044, %v2536
    %v2538 = vpop.f32.mrb[0].mxu0
    %v2539 = vadd.f32 %v2046, %v2538
    %v2540 = vpop.f32.mrb[0].mxu0
    %v2541 = vpop.f32.mrb[0].mxu0
    %2542 = vdwg.mxu0
    %2543 = vmatprep.subr.bf16.mxu0 %v2375
    %2544 = vmatpush1.bf16.msra.mxu0 %v2374
    %2545 = vmatprep.subr.bf16.mxu0 %v2387
    %2546 = vmatpush1.bf16.msra.mxu0 %v2386
    %2547 = vmatprep.subr.bf16.mxu0 0
    %2548 = vmatpush1.bf16.msra.mxu0 0
    %2549 = vmatprep.subr.bf16.mxu0 0
    %2550 = vmatpush1.bf16.msra.mxu0 0
    %2551 = vmatprep.subr.bf16.mxu0 0
    %2552 = vmatpush1.bf16.msra.mxu0 0
    %2553 = vmatprep.subr.bf16.mxu0 0
    %2554 = vmatpush1.bf16.msra.mxu0 0
    %2555 = vmatprep.subr.bf16.mxu0 0
    %2556 = vmatpush1.bf16.msra.mxu0 0
    %2557 = vmatprep.subr.bf16.mxu0 0
    %2558 = vmatpush1.bf16.msra.mxu0 0
    %2559 = vmatprep.subr.bf16.mxu0 0
    %2560 = vmatpush1.bf16.msra.mxu0 0
    %2561 = vmatprep.subr.bf16.mxu0 0
    %2562 = vmatpush1.bf16.msra.mxu0 0
    %2563 = vmatprep.subr.bf16.mxu0 0
    %2564 = vmatpush1.bf16.msra.mxu0 0
    %2565 = vmatprep.subr.bf16.mxu0 0
    %2566 = vmatpush1.bf16.msra.mxu0 0
    %2567 = vmatprep.subr.bf16.mxu0 0
    %2568 = vmatpush1.bf16.msra.mxu0 0
    %2569 = vmatprep.subr.bf16.mxu0 0
    %2570 = vmatpush1.bf16.msra.mxu0 0
    %2571 = vmatprep.subr.bf16.mxu0 0
    %2572 = vmatpush1.bf16.msra.mxu0 0
    %2573 = vmatprep.subr.bf16.mxu0 0
    %2574 = vmatpush1.bf16.msra.mxu0 0
    %2575 = vmatprep.mubr.bf16.mxu0 0
    %2576 = vmatmul.mubr.bf16.gmra.mrb[0].mxu0 %v2418
    %v2577 = vpop.f32.mrb[0].mxu0
    %v2578 = vadd.f32 %v2126, %v2577
    %v2579 = vpop.f32.mrb[0].mxu0
    %v2580 = vadd.f32 %v2128, %v2579
    %v2581 = vpop.f32.mrb[0].mxu0
    %v2582 = vpop.f32.mrb[0].mxu0
    %2583 = vdwg.mxu0
    %2584 = vmatprep.subr.bf16.mxu0 %v2377
    %2585 = vmatpush1.bf16.msra.mxu0 %v2376
    %2586 = vmatprep.subr.bf16.mxu0 %v2389
    %2587 = vmatpush1.bf16.msra.mxu0 %v2388
    %2588 = vmatprep.subr.bf16.mxu0 0
    %2589 = vmatpush1.bf16.msra.mxu0 0
    %2590 = vmatprep.subr.bf16.mxu0 0
    %2591 = vmatpush1.bf16.msra.mxu0 0
    %2592 = vmatprep.subr.bf16.mxu0 0
    %2593 = vmatpush1.bf16.msra.mxu0 0
    %2594 = vmatprep.subr.bf16.mxu0 0
    %2595 = vmatpush1.bf16.msra.mxu0 0
    %2596 = vmatprep.subr.bf16.mxu0 0
    %2597 = vmatpush1.bf16.msra.mxu0 0
    %2598 = vmatprep.subr.bf16.mxu0 0
    %2599 = vmatpush1.bf16.msra.mxu0 0
    %2600 = vmatprep.subr.bf16.mxu0 0
    %2601 = vmatpush1.bf16.msra.mxu0 0
    %2602 = vmatprep.subr.bf16.mxu0 0
    %2603 = vmatpush1.bf16.msra.mxu0 0
    %2604 = vmatprep.subr.bf16.mxu0 0
    %2605 = vmatpush1.bf16.msra.mxu0 0
    %2606 = vmatprep.subr.bf16.mxu0 0
    %2607 = vmatpush1.bf16.msra.mxu0 0
    %2608 = vmatprep.subr.bf16.mxu0 0
    %2609 = vmatpush1.bf16.msra.mxu0 0
    %2610 = vmatprep.subr.bf16.mxu0 0
    %2611 = vmatpush1.bf16.msra.mxu0 0
    %2612 = vmatprep.subr.bf16.mxu0 0
    %2613 = vmatpush1.bf16.msra.mxu0 0
    %2614 = vmatprep.subr.bf16.mxu0 0
    %2615 = vmatpush1.bf16.msra.mxu0 0
    %2616 = vmatprep.mubr.bf16.mxu0 0
    %2617 = vmatmul.mubr.bf16.gmra.mrb[0].mxu0 %v2418
    %v2618 = vpop.f32.mrb[0].mxu0
    %v2619 = vadd.f32 %v2208, %v2618
    %v2620 = vpop.f32.mrb[0].mxu0
    %v2621 = vadd.f32 %v2210, %v2620
    %v2622 = vpop.f32.mrb[0].mxu0
    %v2623 = vpop.f32.mrb[0].mxu0
    %2624 = vdwg.mxu0
    %2625 = vmatprep.subr.bf16.mxu0 %v2379
    %2626 = vmatpush1.bf16.msra.mxu0 %v2378
    %2627 = vmatprep.subr.bf16.mxu0 %v2391
    %2628 = vmatpush1.bf16.msra.mxu0 %v2390
    %2629 = vmatprep.subr.bf16.mxu0 0
    %2630 = vmatpush1.bf16.msra.mxu0 0
    %2631 = vmatprep.subr.bf16.mxu0 0
    %2632 = vmatpush1.bf16.msra.mxu0 0
    %2633 = vmatprep.subr.bf16.mxu0 0
    %2634 = vmatpush1.bf16.msra.mxu0 0
    %2635 = vmatprep.subr.bf16.mxu0 0
    %2636 = vmatpush1.bf16.msra.mxu0 0
    %2637 = vmatprep.subr.bf16.mxu0 0
    %2638 = vmatpush1.bf16.msra.mxu0 0
    %2639 = vmatprep.subr.bf16.mxu0 0
    %2640 = vmatpush1.bf16.msra.mxu0 0
    %2641 = vmatprep.subr.bf16.mxu0 0
    %2642 = vmatpush1.bf16.msra.mxu0 0
    %2643 = vmatprep.subr.bf16.mxu0 0
    %2644 = vmatpush1.bf16.msra.mxu0 0
    %2645 = vmatprep.subr.bf16.mxu0 0
    %2646 = vmatpush1.bf16.msra.mxu0 0
    %2647 = vmatprep.subr.bf16.mxu0 0
    %2648 = vmatpush1.bf16.msra.mxu0 0
    %2649 = vmatprep.subr.bf16.mxu0 0
    %2650 = vmatpush1.bf16.msra.mxu0 0
    %2651 = vmatprep.subr.bf16.mxu0 0
    %2652 = vmatpush1.bf16.msra.mxu0 0
    %2653 = vmatprep.subr.bf16.mxu0 0
    %2654 = vmatpush1.bf16.msra.mxu0 0
    %2655 = vmatprep.subr.bf16.mxu0 0
    %2656 = vmatpush1.bf16.msra.mxu0 0
    %2657 = vmatprep.mubr.bf16.mxu0 0
    %2658 = vmatmul.mubr.bf16.gmra.mrb[0].mxu0 %v2418
    %v2659 = vpop.f32.mrb[0].mxu0
    %v2660 = vadd.f32 %v2290, %v2659
    %v2661 = vpop.f32.mrb[0].mxu0
    %v2662 = vadd.f32 %v2292, %v2661
    %v2663 = vpop.f32.mrb[0].mxu0
    %v2664 = vpop.f32.mrb[0].mxu0
    %2665 = vdwg.mxu0
    %v2668 = vlaneseq
    %v2669 = vshrl.u32 %v2668, 7
    %v2670 = vsub.s32 0, %v2669
    %v2671 = vrot.slane %v361, %v2670
    %v2672 = vlaneseq
    %v2673 = vshrl.u32 %v2672, 7
    %v2674 = vsub.s32 1, %v2673
    %v2675 = vrot.slane %v361, %v2674
    %v2676 = vlaneseq
    %v2677 = vshrl.u32 %v2676, 7
    %v2678 = vsub.s32 2, %v2677
    %v2679 = vrot.slane %v361, %v2678
    %v2680 = vlaneseq
    %v2681 = vshrl.u32 %v2680, 7
    %v2682 = vsub.s32 3, %v2681
    %v2683 = vrot.slane %v361, %v2682
    %v2684 = vlaneseq
    %v2685 = vshrl.u32 %v2684, 7
    %v2686 = vsub.s32 4, %v2685
    %v2687 = vrot.slane %v361, %v2686
    %v2688 = vlaneseq
    %v2689 = vshrl.u32 %v2688, 7
    %v2690 = vsub.s32 5, %v2689
    %v2691 = vrot.slane %v361, %v2690
    %v2692 = vlaneseq
    %v2693 = vshrl.u32 %v2692, 7
    %v2694 = vsub.s32 6, %v2693
    %v2695 = vrot.slane %v361, %v2694
    %v2696 = vlaneseq
    %v2697 = vshrl.u32 %v2696, 7
    %v2698 = vsub.s32 7, %v2697
    %v2699 = vrot.slane %v361, %v2698
    %v2700 = vlaneseq
    %v2701 = vshrl.u32 %v2700, 7
    %v2702 = vsub.s32 0, %v2701
    %v2703 = vrot.slane %v362, %v2702
    %v2704 = vlaneseq
    %v2705 = vshrl.u32 %v2704, 7
    %v2706 = vsub.s32 1, %v2705
    %v2707 = vrot.slane %v362, %v2706
    %v2708 = vlaneseq
    %v2709 = vshrl.u32 %v2708, 7
    %v2710 = vsub.s32 2, %v2709
    %v2711 = vrot.slane %v362, %v2710
    %v2712 = vlaneseq
    %v2713 = vshrl.u32 %v2712, 7
    %v2714 = vsub.s32 3, %v2713
    %v2715 = vrot.slane %v362, %v2714
    %v2728 = vadd.f32 %v2455, %v2671
    %v2729 = vadd.f32 %v2457, %v2675
    %v2730 = vadd.f32 %v2496, %v2679
    %v2731 = vadd.f32 %v2498, %v2683
    %v2732 = vadd.f32 %v2537, %v2687
    %v2733 = vadd.f32 %v2539, %v2691
    %v2734 = vadd.f32 %v2578, %v2695
    %v2735 = vadd.f32 %v2580, %v2699
    %v2736 = vadd.f32 %v2619, %v2703
    %v2737 = vadd.f32 %v2621, %v2707
    %v2738 = vadd.f32 %v2660, %v2711
    %v2739 = vadd.f32 %v2662, %v2715
    %v2740 = vmul.f32 %v2728, 0.5
    %v2741 = vmul.f32 %v2729, 0.5
    %v2742 = vmul.f32 %v2730, 0.5
    %v2743 = vtanh.pop %v2740
    %v2744 = vtanh.pop %v2741
    %v2745 = vtanh.pop %v2742
    %v2746 = vmul.f32 %v2743, 0.5
    %v2747 = vmul.f32 %v2744, 0.5
    %v2748 = vmul.f32 %v2745, 0.5
    %v2749 = vadd.f32 %v2746, 0.5
    %v2750 = vadd.f32 %v2747, 0.5
    %v2751 = vadd.f32 %v2748, 0.5
    %v2752 = vmul.f32 %v2731, 0.5
    %v2753 = vmul.f32 %v2732, 0.5
    %v2754 = vmul.f32 %v2733, 0.5
    %v2755 = vtanh.pop %v2752
    %v2756 = vtanh.pop %v2753
    %v2757 = vtanh.pop %v2754
    %v2758 = vmul.f32 %v2755, 0.5
    %v2759 = vmul.f32 %v2756, 0.5
    %v2760 = vmul.f32 %v2757, 0.5
    %v2761 = vadd.f32 %v2758, 0.5
    %v2762 = vadd.f32 %v2759, 0.5
    %v2763 = vadd.f32 %v2760, 0.5
    %v2764 = vtanh.pop %v2734
    %v2765 = vtanh.pop %v2735
    %v2766 = vtanh.pop %v2736
    %v2767 = vmul.f32 %v2737, 0.5
    %v2768 = vmul.f32 %v2738, 0.5
    %v2769 = vmul.f32 %v2739, 0.5
    %v2770 = vtanh.pop %v2767
    %v2771 = vtanh.pop %v2768
    %v2772 = vtanh.pop %v2769
    %v2773 = vmul.f32 %v2770, 0.5
    %v2774 = vmul.f32 %v2771, 0.5
    %v2775 = vmul.f32 %v2772, 0.5
    %v2776 = vadd.f32 %v2773, 0.5
    %v2777 = vadd.f32 %v2774, 0.5
    %v2778 = vadd.f32 %v2775, 0.5
    %v2779 = vmul.f32 %v2761, 0.0
    %v2780 = vmul.f32 %v2762, 0.0
    %v2781 = vmul.f32 %v2763, 0.0
    %v2782 = vmul.f32 %v2749, %v2764
    %v2783 = vmul.f32 %v2750, %v2765
    %v2784 = vmul.f32 %v2751, %v2766
    %v2785 = vadd.f32 %v2779, %v2782
    %v2786 = vadd.f32 %v2780, %v2783
    %v2787 = vadd.f32 %v2781, %v2784
    %v2788 = vtanh.pop %v2785
    %v2789 = vtanh.pop %v2786
    %v2790 = vtanh.pop %v2787
    %v2791 = vmul.f32 %v2776, %v2788
    %v2792 = vmul.f32 %v2777, %v2789
    %v2793 = vmul.f32 %v2778, %v2790
    %v2794 = vtanh.pop %v2791
    %v2795 = vtanh.pop %v2792
    %v2796 = vtanh.pop %v2793
    %v2797 = vmax.f32 %v2794, 0.0
    %v2798 = vmax.f32 %v2795, 0.0
    %v2799 = vmax.f32 %v2796, 0.0
    %s2800 = sld [smem:[#allocation2]]
    %v2801 = vstv %s2800
    %v2802 = vmul.f32 %v2797, %v2801
    %v2803 = vadd.f32 %v2802, 0.0
    %s2804 = sld [smem:[#allocation2 + $0x1]]
    %v2805 = vstv %s2804
    %v2806 = vmul.f32 %v2797, %v2805
    %v2807 = vadd.f32 %v2806, 0.0
    %s2808 = sld [smem:[#allocation2 + $0x2]]
    %v2809 = vstv %s2808
    %v2810 = vmul.f32 %v2797, %v2809
    %v2811 = vadd.f32 %v2810, 0.0
    %s2812 = sld [smem:[#allocation2 + $0xc]]
    %v2813 = vstv %s2812
    %v2814 = vmul.f32 %v2798, %v2813
    %v2815 = vadd.f32 %v2803, %v2814
    %s2816 = sld [smem:[#allocation2 + $0xd]]
    %v2817 = vstv %s2816
    %v2818 = vmul.f32 %v2798, %v2817
    %v2819 = vadd.f32 %v2807, %v2818
    %s2820 = sld [smem:[#allocation2 + $0xe]]
    %v2821 = vstv %s2820
    %v2822 = vmul.f32 %v2798, %v2821
    %v2823 = vadd.f32 %v2811, %v2822
    %s2824 = sld [smem:[#allocation2 + $0x18]]
    %v2825 = vstv %s2824
    %v2826 = vmul.f32 %v2799, %v2825
    %v2827 = vadd.f32 %v2815, %v2826
    %s2828 = sld [smem:[#allocation2 + $0x19]]
    %v2829 = vstv %s2828
    %v2830 = vmul.f32 %v2799, %v2829
    %v2831 = vadd.f32 %v2819, %v2830
    %s2832 = sld [smem:[#allocation2 + $0x1a]]
    %v2833 = vstv %s2832
    %v2834 = vmul.f32 %v2799, %v2833
    %v2835 = vadd.f32 %v2823, %v2834
    %s2836 = scalar_lea.vmem %s0, 4
    %v2837 = vld [vmem:[%s2836] sm:$0xf]
    %v2838 = vpack.c.bf16 %v2794, %v2794
    %v2839 = vpack.c.bf16 %v2795, %v2795
    %v2840 = vpack.c.bf16 %v2796, %v2796
    %2841 = vmatprep.subr.bf16.mxu0 %v1229
    %2842 = vmatpush1.bf16.msra.mxu0 %v1228
    %2843 = vmatprep.subr.bf16.mxu0 %v1241
    %2844 = vmatpush1.bf16.msra.mxu0 %v1240
    %2845 = vmatprep.subr.bf16.mxu0 %v1253
    %2846 = vmatpush1.bf16.msra.mxu0 %v1252
    %2847 = vmatprep.subr.bf16.mxu0 %v1265
    %2848 = vmatpush1.bf16.msra.mxu0 %v1264
    %2849 = vmatprep.subr.bf16.mxu0 %v1277
    %2850 = vmatpush1.bf16.msra.mxu0 %v1276
    %2851 = vmatprep.subr.bf16.mxu0 %v1289
    %2852 = vmatpush1.bf16.msra.mxu0 %v1288
    %2853 = vmatprep.subr.bf16.mxu0 %v1301
    %2854 = vmatpush1.bf16.msra.mxu0 %v1300
    %2855 = vmatprep.subr.bf16.mxu0 %v1313
    %2856 = vmatpush1.bf16.msra.mxu0 %v1312
    %2857 = vmatprep.subr.bf16.mxu0 %v1325
    %2858 = vmatpush1.bf16.msra.mxu0 %v1324
    %2859 = vmatprep.subr.bf16.mxu0 %v1337
    %2860 = vmatpush1.bf16.msra.mxu0 %v1336
    %2861 = vmatprep.subr.bf16.mxu0 %v1349
    %2862 = vmatpush1.bf16.msra.mxu0 %v1348
    %2863 = vmatprep.subr.bf16.mxu0 %v1361
    %2864 = vmatpush1.bf16.msra.mxu0 %v1360
    %2865 = vmatprep.subr.bf16.mxu0 %v1373
    %2866 = vmatpush1.bf16.msra.mxu0 %v1372
    %2867 = vmatprep.subr.bf16.mxu0 %v1385
    %2868 = vmatpush1.bf16.msra.mxu0 %v1384
    %2869 = vmatprep.subr.bf16.mxu0 %v1397
    %2870 = vmatpush1.bf16.msra.mxu0 %v1396
    %2871 = vmatprep.subr.bf16.mxu0 %v1409
    %2872 = vmatpush1.bf16.msra.mxu0 %v1408
    %2873 = vmatprep.mubr.bf16.mxu0 %v2839
    %2874 = vmatmul.mubr.bf16.gmra.mrb[0].mxu0 %v2838
    %v2875 = vpop.f32.mrb[0].mxu0
    %v2876 = vadd.f32 0.0, %v2875
    %v2877 = vpop.f32.mrb[0].mxu0
    %v2878 = vadd.f32 0.0, %v2877
    %v2879 = vpop.f32.mrb[0].mxu0
    %v2880 = vpop.f32.mrb[0].mxu0
    %2881 = vdwg.mxu0
    %2882 = vmatprep.subr.bf16.mxu0 %v1421
    %2883 = vmatpush1.bf16.msra.mxu0 %v1420
    %2884 = vmatprep.subr.bf16.mxu0 %v1433
    %2885 = vmatpush1.bf16.msra.mxu0 %v1432
    %2886 = vmatprep.subr.bf16.mxu0 %v1445
    %2887 = vmatpush1.bf16.msra.mxu0 %v1444
    %2888 = vmatprep.subr.bf16.mxu0 %v1457
    %2889 = vmatpush1.bf16.msra.mxu0 %v1456
    %2890 = vmatprep.subr.bf16.mxu0 %v1469
    %2891 = vmatpush1.bf16.msra.mxu0 %v1468
    %2892 = vmatprep.subr.bf16.mxu0 %v1481
    %2893 = vmatpush1.bf16.msra.mxu0 %v1480
    %2894 = vmatprep.subr.bf16.mxu0 %v1493
    %2895 = vmatpush1.bf16.msra.mxu0 %v1492
    %2896 = vmatprep.subr.bf16.mxu0 %v1505
    %2897 = vmatpush1.bf16.msra.mxu0 %v1504
    %2898 = vmatprep.subr.bf16.mxu0 0
    %2899 = vmatpush1.bf16.msra.mxu0 0
    %2900 = vmatprep.subr.bf16.mxu0 0
    %2901 = vmatpush1.bf16.msra.mxu0 0
    %2902 = vmatprep.subr.bf16.mxu0 0
    %2903 = vmatpush1.bf16.msra.mxu0 0
    %2904 = vmatprep.subr.bf16.mxu0 0
    %2905 = vmatpush1.bf16.msra.mxu0 0
    %2906 = vmatprep.subr.bf16.mxu0 0
    %2907 = vmatpush1.bf16.msra.mxu0 0
    %2908 = vmatprep.subr.bf16.mxu0 0
    %2909 = vmatpush1.bf16.msra.mxu0 0
    %2910 = vmatprep.subr.bf16.mxu0 0
    %2911 = vmatpush1.bf16.msra.mxu0 0
    %2912 = vmatprep.subr.bf16.mxu0 0
    %2913 = vmatpush1.bf16.msra.mxu0 0
    %2914 = vmatprep.mubr.bf16.mxu0 0
    %2915 = vmatmul.mubr.bf16.gmra.mrb[0].mxu0 %v2840
    %v2916 = vpop.f32.mrb[0].mxu0
    %v2917 = vadd.f32 %v2876, %v2916
    %v2918 = vpop.f32.mrb[0].mxu0
    %v2919 = vadd.f32 %v2878, %v2918
    %v2920 = vpop.f32.mrb[0].mxu0
    %v2921 = vpop.f32.mrb[0].mxu0
    %2922 = vdwg.mxu0
    %2923 = vmatprep.subr.bf16.mxu0 %v1231
    %2924 = vmatpush1.bf16.msra.mxu0 %v1230
    %2925 = vmatprep.subr.bf16.mxu0 %v1243
    %2926 = vmatpush1.bf16.msra.mxu0 %v1242
    %2927 = vmatprep.subr.bf16.mxu0 %v1255
    %2928 = vmatpush1.bf16.msra.mxu0 %v1254
    %2929 = vmatprep.subr.bf16.mxu0 %v1267
    %2930 = vmatpush1.bf16.msra.mxu0 %v1266
    %2931 = vmatprep.subr.bf16.mxu0 %v1279
    %2932 = vmatpush1.bf16.msra.mxu0 %v1278
    %2933 = vmatprep.subr.bf16.mxu0 %v1291
    %2934 = vmatpush1.bf16.msra.mxu0 %v1290
    %2935 = vmatprep.subr.bf16.mxu0 %v1303
    %2936 = vmatpush1.bf16.msra.mxu0 %v1302
    %2937 = vmatprep.subr.bf16.mxu0 %v1315
    %2938 = vmatpush1.bf16.msra.mxu0 %v1314
    %2939 = vmatprep.subr.bf16.mxu0 %v1327
    %2940 = vmatpush1.bf16.msra.mxu0 %v1326
    %2941 = vmatprep.subr.bf16.mxu0 %v1339
    %2942 = vmatpush1.bf16.msra.mxu0 %v1338
    %2943 = vmatprep.subr.bf16.mxu0 %v1351
    %2944 = vmatpush1.bf16.msra.mxu0 %v1350
    %2945 = vmatprep.subr.bf16.mxu0 %v1363
    %2946 = vmatpush1.bf16.msra.mxu0 %v1362
    %2947 = vmatprep.subr.bf16.mxu0 %v1375
    %2948 = vmatpush1.bf16.msra.mxu0 %v1374
    %2949 = vmatprep.subr.bf16.mxu0 %v1387
    %2950 = vmatpush1.bf16.msra.mxu0 %v1386
    %2951 = vmatprep.subr.bf16.mxu0 %v1399
    %2952 = vmatpush1.bf16.msra.mxu0 %v1398
    %2953 = vmatprep.subr.bf16.mxu0 %v1411
    %2954 = vmatpush1.bf16.msra.mxu0 %v1410
    %2955 = vmatprep.mubr.bf16.mxu0 %v2839
    %2956 = vmatmul.mubr.bf16.gmra.mrb[0].mxu0 %v2838
    %v2957 = vpop.f32.mrb[0].mxu0
    %v2958 = vadd.f32 0.0, %v2957
    %v2959 = vpop.f32.mrb[0].mxu0
    %v2960 = vadd.f32 0.0, %v2959
    %v2961 = vpop.f32.mrb[0].mxu0
    %v2962 = vpop.f32.mrb[0].mxu0
    %2963 = vdwg.mxu0
    %2964 = vmatprep.subr.bf16.mxu0 %v1423
    %2965 = vmatpush1.bf16.msra.mxu0 %v1422
    %2966 = vmatprep.subr.bf16.mxu0 %v1435
    %2967 = vmatpush1.bf16.msra.mxu0 %v1434
    %2968 = vmatprep.subr.bf16.mxu0 %v1447
    %2969 = vmatpush1.bf16.msra.mxu0 %v1446
    %2970 = vmatprep.subr.bf16.mxu0 %v1459
    %2971 = vmatpush1.bf16.msra.mxu0 %v1458
    %2972 = vmatprep.subr.bf16.mxu0 %v1471
    %2973 = vmatpush1.bf16.msra.mxu0 %v1470
    %2974 = vmatprep.subr.bf16.mxu0 %v1483
    %2975 = vmatpush1.bf16.msra.mxu0 %v1482
    %2976 = vmatprep.subr.bf16.mxu0 %v1495
    %2977 = vmatpush1.bf16.msra.mxu0 %v1494
    %2978 = vmatprep.subr.bf16.mxu0 %v1507
    %2979 = vmatpush1.bf16.msra.mxu0 %v1506
    %2980 = vmatprep.subr.bf16.mxu0 0
    %2981 = vmatpush1.bf16.msra.mxu0 0
    %2982 = vmatprep.subr.bf16.mxu0 0
    %2983 = vmatpush1.bf16.msra.mxu0 0
    %2984 = vmatprep.subr.bf16.mxu0 0
    %2985 = vmatpush1.bf16.msra.mxu0 0
    %2986 = vmatprep.subr.bf16.mxu0 0
    %2987 = vmatpush1.bf16.msra.mxu0 0
    %2988 = vmatprep.subr.bf16.mxu0 0
    %2989 = vmatpush1.bf16.msra.mxu0 0
    %2990 = vmatprep.subr.bf16.mxu0 0
    %2991 = vmatpush1.bf16.msra.mxu0 0
    %2992 = vmatprep.subr.bf16.mxu0 0
    %2993 = vmatpush1.bf16.msra.mxu0 0
    %2994 = vmatprep.subr.bf16.mxu0 0
    %2995 = vmatpush1.bf16.msra.mxu0 0
    %2996 = vmatprep.mubr.bf16.mxu0 0
    %2997 = vmatmul.mubr.bf16.gmra.mrb[0].mxu0 %v2840
    %v2998 = vpop.f32.mrb[0].mxu0
    %v2999 = vadd.f32 %v2958, %v2998
    %v3000 = vpop.f32.mrb[0].mxu0
    %v3001 = vadd.f32 %v2960, %v3000
    %v3002 = vpop.f32.mrb[0].mxu0
    %v3003 = vpop.f32.mrb[0].mxu0
    %3004 = vdwg.mxu0
    %3005 = vmatprep.subr.bf16.mxu0 %v1233
    %3006 = vmatpush1.bf16.msra.mxu0 %v1232
    %3007 = vmatprep.subr.bf16.mxu0 %v1245
    %3008 = vmatpush1.bf16.msra.mxu0 %v1244
    %3009 = vmatprep.subr.bf16.mxu0 %v1257
    %3010 = vmatpush1.bf16.msra.mxu0 %v1256
    %3011 = vmatprep.subr.bf16.mxu0 %v1269
    %3012 = vmatpush1.bf16.msra.mxu0 %v1268
    %3013 = vmatprep.subr.bf16.mxu0 %v1281
    %3014 = vmatpush1.bf16.msra.mxu0 %v1280
    %3015 = vmatprep.subr.bf16.mxu0 %v1293
    %3016 = vmatpush1.bf16.msra.mxu0 %v1292
    %3017 = vmatprep.subr.bf16.mxu0 %v1305
    %3018 = vmatpush1.bf16.msra.mxu0 %v1304
    %3019 = vmatprep.subr.bf16.mxu0 %v1317
    %3020 = vmatpush1.bf16.msra.mxu0 %v1316
    %3021 = vmatprep.subr.bf16.mxu0 %v1329
    %3022 = vmatpush1.bf16.msra.mxu0 %v1328
    %3023 = vmatprep.subr.bf16.mxu0 %v1341
    %3024 = vmatpush1.bf16.msra.mxu0 %v1340
    %3025 = vmatprep.subr.bf16.mxu0 %v1353
    %3026 = vmatpush1.bf16.msra.mxu0 %v1352
    %3027 = vmatprep.subr.bf16.mxu0 %v1365
    %3028 = vmatpush1.bf16.msra.mxu0 %v1364
    %3029 = vmatprep.subr.bf16.mxu0 %v1377
    %3030 = vmatpush1.bf16.msra.mxu0 %v1376
    %3031 = vmatprep.subr.bf16.mxu0 %v1389
    %3032 = vmatpush1.bf16.msra.mxu0 %v1388
    %3033 = vmatprep.subr.bf16.mxu0 %v1401
    %3034 = vmatpush1.bf16.msra.mxu0 %v1400
    %3035 = vmatprep.subr.bf16.mxu0 %v1413
    %3036 = vmatpush1.bf16.msra.mxu0 %v1412
    %3037 = vmatprep.mubr.bf16.mxu0 %v2839
    %3038 = vmatmul.mubr.bf16.gmra.mrb[0].mxu0 %v2838
    %v3039 = vpop.f32.mrb[0].mxu0
    %v3040 = vadd.f32 0.0, %v3039
    %v3041 = vpop.f32.mrb[0].mxu0
    %v3042 = vadd.f32 0.0, %v3041
    %v3043 = vpop.f32.mrb[0].mxu0
    %v3044 = vpop.f32.mrb[0].mxu0
    %3045 = vdwg.mxu0
    %3046 = vmatprep.subr.bf16.mxu0 %v1425
    %3047 = vmatpush1.bf16.msra.mxu0 %v1424
    %3048 = vmatprep.subr.bf16.mxu0 %v1437
    %3049 = vmatpush1.bf16.msra.mxu0 %v1436
    %3050 = vmatprep.subr.bf16.mxu0 %v1449
    %3051 = vmatpush1.bf16.msra.mxu0 %v1448
    %3052 = vmatprep.subr.bf16.mxu0 %v1461
    %3053 = vmatpush1.bf16.msra.mxu0 %v1460
    %3054 = vmatprep.subr.bf16.mxu0 %v1473
    %3055 = vmatpush1.bf16.msra.mxu0 %v1472
    %3056 = vmatprep.subr.bf16.mxu0 %v1485
    %3057 = vmatpush1.bf16.msra.mxu0 %v1484
    %3058 = vmatprep.subr.bf16.mxu0 %v1497
    %3059 = vmatpush1.bf16.msra.mxu0 %v1496
    %3060 = vmatprep.subr.bf16.mxu0 %v1509
    %3061 = vmatpush1.bf16.msra.mxu0 %v1508
    %3062 = vmatprep.subr.bf16.mxu0 0
    %3063 = vmatpush1.bf16.msra.mxu0 0
    %3064 = vmatprep.subr.bf16.mxu0 0
    %3065 = vmatpush1.bf16.msra.mxu0 0
    %3066 = vmatprep.subr.bf16.mxu0 0
    %3067 = vmatpush1.bf16.msra.mxu0 0
    %3068 = vmatprep.subr.bf16.mxu0 0
    %3069 = vmatpush1.bf16.msra.mxu0 0
    %3070 = vmatprep.subr.bf16.mxu0 0
    %3071 = vmatpush1.bf16.msra.mxu0 0
    %3072 = vmatprep.subr.bf16.mxu0 0
    %3073 = vmatpush1.bf16.msra.mxu0 0
    %3074 = vmatprep.subr.bf16.mxu0 0
    %3075 = vmatpush1.bf16.msra.mxu0 0
    %3076 = vmatprep.subr.bf16.mxu0 0
    %3077 = vmatpush1.bf16.msra.mxu0 0
    %3078 = vmatprep.mubr.bf16.mxu0 0
    %3079 = vmatmul.mubr.bf16.gmra.mrb[0].mxu0 %v2840
    %v3080 = vpop.f32.mrb[0].mxu0
    %v3081 = vadd.f32 %v3040, %v3080
    %v3082 = vpop.f32.mrb[0].mxu0
    %v3083 = vadd.f32 %v3042, %v3082
    %v3084 = vpop.f32.mrb[0].mxu0
    %v3085 = vpop.f32.mrb[0].mxu0
    %3086 = vdwg.mxu0
    %3087 = vmatprep.subr.bf16.mxu0 %v1235
    %3088 = vmatpush1.bf16.msra.mxu0 %v1234
    %3089 = vmatprep.subr.bf16.mxu0 %v1247
    %3090 = vmatpush1.bf16.msra.mxu0 %v1246
    %3091 = vmatprep.subr.bf16.mxu0 %v1259
    %3092 = vmatpush1.bf16.msra.mxu0 %v1258
    %3093 = vmatprep.subr.bf16.mxu0 %v1271
    %3094 = vmatpush1.bf16.msra.mxu0 %v1270
    %3095 = vmatprep.subr.bf16.mxu0 %v1283
    %3096 = vmatpush1.bf16.msra.mxu0 %v1282
    %3097 = vmatprep.subr.bf16.mxu0 %v1295
    %3098 = vmatpush1.bf16.msra.mxu0 %v1294
    %3099 = vmatprep.subr.bf16.mxu0 %v1307
    %3100 = vmatpush1.bf16.msra.mxu0 %v1306
    %3101 = vmatprep.subr.bf16.mxu0 %v1319
    %3102 = vmatpush1.bf16.msra.mxu0 %v1318
    %3103 = vmatprep.subr.bf16.mxu0 %v1331
    %3104 = vmatpush1.bf16.msra.mxu0 %v1330
    %3105 = vmatprep.subr.bf16.mxu0 %v1343
    %3106 = vmatpush1.bf16.msra.mxu0 %v1342
    %3107 = vmatprep.subr.bf16.mxu0 %v1355
    %3108 = vmatpush1.bf16.msra.mxu0 %v1354
    %3109 = vmatprep.subr.bf16.mxu0 %v1367
    %3110 = vmatpush1.bf16.msra.mxu0 %v1366
    %3111 = vmatprep.subr.bf16.mxu0 %v1379
    %3112 = vmatpush1.bf16.msra.mxu0 %v1378
    %3113 = vmatprep.subr.bf16.mxu0 %v1391
    %3114 = vmatpush1.bf16.msra.mxu0 %v1390
    %3115 = vmatprep.subr.bf16.mxu0 %v1403
    %3116 = vmatpush1.bf16.msra.mxu0 %v1402
    %3117 = vmatprep.subr.bf16.mxu0 %v1415
    %3118 = vmatpush1.bf16.msra.mxu0 %v1414
    %3119 = vmatprep.mubr.bf16.mxu0 %v2839
    %3120 = vmatmul.mubr.bf16.gmra.mrb[0].mxu0 %v2838
    %v3121 = vpop.f32.mrb[0].mxu0
    %v3122 = vadd.f32 0.0, %v3121
    %v3123 = vpop.f32.mrb[0].mxu0
    %v3124 = vadd.f32 0.0, %v3123
    %v3125 = vpop.f32.mrb[0].mxu0
    %v3126 = vpop.f32.mrb[0].mxu0
    %3127 = vdwg.mxu0
    %3128 = vmatprep.subr.bf16.mxu0 %v1427
    %3129 = vmatpush1.bf16.msra.mxu0 %v1426
    %3130 = vmatprep.subr.bf16.mxu0 %v1439
    %3131 = vmatpush1.bf16.msra.mxu0 %v1438
    %3132 = vmatprep.subr.bf16.mxu0 %v1451
    %3133 = vmatpush1.bf16.msra.mxu0 %v1450
    %3134 = vmatprep.subr.bf16.mxu0 %v1463
    %3135 = vmatpush1.bf16.msra.mxu0 %v1462
    %3136 = vmatprep.subr.bf16.mxu0 %v1475
    %3137 = vmatpush1.bf16.msra.mxu0 %v1474
    %3138 = vmatprep.subr.bf16.mxu0 %v1487
    %3139 = vmatpush1.bf16.msra.mxu0 %v1486
    %3140 = vmatprep.subr.bf16.mxu0 %v1499
    %3141 = vmatpush1.bf16.msra.mxu0 %v1498
    %3142 = vmatprep.subr.bf16.mxu0 %v1511
    %3143 = vmatpush1.bf16.msra.mxu0 %v1510
    %3144 = vmatprep.subr.bf16.mxu0 0
    %3145 = vmatpush1.bf16.msra.mxu0 0
    %3146 = vmatprep.subr.bf16.mxu0 0
    %3147 = vmatpush1.bf16.msra.mxu0 0
    %3148 = vmatprep.subr.bf16.mxu0 0
    %3149 = vmatpush1.bf16.msra.mxu0 0
    %3150 = vmatprep.subr.bf16.mxu0 0
    %3151 = vmatpush1.bf16.msra.mxu0 0
    %3152 = vmatprep.subr.bf16.mxu0 0
    %3153 = vmatpush1.bf16.msra.mxu0 0
    %3154 = vmatprep.subr.bf16.mxu0 0
    %3155 = vmatpush1.bf16.msra.mxu0 0
    %3156 = vmatprep.subr.bf16.mxu0 0
    %3157 = vmatpush1.bf16.msra.mxu0 0
    %3158 = vmatprep.subr.bf16.mxu0 0
    %3159 = vmatpush1.bf16.msra.mxu0 0
    %3160 = vmatprep.mubr.bf16.mxu0 0
    %3161 = vmatmul.mubr.bf16.gmra.mrb[0].mxu0 %v2840
    %v3162 = vpop.f32.mrb[0].mxu0
    %v3163 = vadd.f32 %v3122, %v3162
    %v3164 = vpop.f32.mrb[0].mxu0
    %v3165 = vadd.f32 %v3124, %v3164
    %v3166 = vpop.f32.mrb[0].mxu0
    %v3167 = vpop.f32.mrb[0].mxu0
    %3168 = vdwg.mxu0
    %3169 = vmatprep.subr.bf16.mxu0 %v1237
    %3170 = vmatpush1.bf16.msra.mxu0 %v1236
    %3171 = vmatprep.subr.bf16.mxu0 %v1249
    %3172 = vmatpush1.bf16.msra.mxu0 %v1248
    %3173 = vmatprep.subr.bf16.mxu0 %v1261
    %3174 = vmatpush1.bf16.msra.mxu0 %v1260
    %3175 = vmatprep.subr.bf16.mxu0 %v1273
    %3176 = vmatpush1.bf16.msra.mxu0 %v1272
    %3177 = vmatprep.subr.bf16.mxu0 %v1285
    %3178 = vmatpush1.bf16.msra.mxu0 %v1284
    %3179 = vmatprep.subr.bf16.mxu0 %v1297
    %3180 = vmatpush1.bf16.msra.mxu0 %v1296
    %3181 = vmatprep.subr.bf16.mxu0 %v1309
    %3182 = vmatpush1.bf16.msra.mxu0 %v1308
    %3183 = vmatprep.subr.bf16.mxu0 %v1321
    %3184 = vmatpush1.bf16.msra.mxu0 %v1320
    %3185 = vmatprep.subr.bf16.mxu0 %v1333
    %3186 = vmatpush1.bf16.msra.mxu0 %v1332
    %3187 = vmatprep.subr.bf16.mxu0 %v1345
    %3188 = vmatpush1.bf16.msra.mxu0 %v1344
    %3189 = vmatprep.subr.bf16.mxu0 %v1357
    %3190 = vmatpush1.bf16.msra.mxu0 %v1356
    %3191 = vmatprep.subr.bf16.mxu0 %v1369
    %3192 = vmatpush1.bf16.msra.mxu0 %v1368
    %3193 = vmatprep.subr.bf16.mxu0 %v1381
    %3194 = vmatpush1.bf16.msra.mxu0 %v1380
    %3195 = vmatprep.subr.bf16.mxu0 %v1393
    %3196 = vmatpush1.bf16.msra.mxu0 %v1392
    %3197 = vmatprep.subr.bf16.mxu0 %v1405
    %3198 = vmatpush1.bf16.msra.mxu0 %v1404
    %3199 = vmatprep.subr.bf16.mxu0 %v1417
    %3200 = vmatpush1.bf16.msra.mxu0 %v1416
    %3201 = vmatprep.mubr.bf16.mxu0 %v2839
    %3202 = vmatmul.mubr.bf16.gmra.mrb[0].mxu0 %v2838
    %v3203 = vpop.f32.mrb[0].mxu0
    %v3204 = vadd.f32 0.0, %v3203
    %v3205 = vpop.f32.mrb[0].mxu0
    %v3206 = vadd.f32 0.0, %v3205
    %v3207 = vpop.f32.mrb[0].mxu0
    %v3208 = vpop.f32.mrb[0].mxu0
    %3209 = vdwg.mxu0
    %3210 = vmatprep.subr.bf16.mxu0 %v1429
    %3211 = vmatpush1.bf16.msra.mxu0 %v1428
    %3212 = vmatprep.subr.bf16.mxu0 %v1441
    %3213 = vmatpush1.bf16.msra.mxu0 %v1440
    %3214 = vmatprep.subr.bf16.mxu0 %v1453
    %3215 = vmatpush1.bf16.msra.mxu0 %v1452
    %3216 = vmatprep.subr.bf16.mxu0 %v1465
    %3217 = vmatpush1.bf16.msra.mxu0 %v1464
    %3218 = vmatprep.subr.bf16.mxu0 %v1477
    %3219 = vmatpush1.bf16.msra.mxu0 %v1476
    %3220 = vmatprep.subr.bf16.mxu0 %v1489
    %3221 = vmatpush1.bf16.msra.mxu0 %v1488
    %3222 = vmatprep.subr.bf16.mxu0 %v1501
    %3223 = vmatpush1.bf16.msra.mxu0 %v1500
    %3224 = vmatprep.subr.bf16.mxu0 %v1513
    %3225 = vmatpush1.bf16.msra.mxu0 %v1512
    %3226 = vmatprep.subr.bf16.mxu0 0
    %3227 = vmatpush1.bf16.msra.mxu0 0
    %3228 = vmatprep.subr.bf16.mxu0 0
    %3229 = vmatpush1.bf16.msra.mxu0 0
    %3230 = vmatprep.subr.bf16.mxu0 0
    %3231 = vmatpush1.bf16.msra.mxu0 0
    %3232 = vmatprep.subr.bf16.mxu0 0
    %3233 = vmatpush1.bf16.msra.mxu0 0
    %3234 = vmatprep.subr.bf16.mxu0 0
    %3235 = vmatpush1.bf16.msra.mxu0 0
    %3236 = vmatprep.subr.bf16.mxu0 0
    %3237 = vmatpush1.bf16.msra.mxu0 0
    %3238 = vmatprep.subr.bf16.mxu0 0
    %3239 = vmatpush1.bf16.msra.mxu0 0
    %3240 = vmatprep.subr.bf16.mxu0 0
    %3241 = vmatpush1.bf16.msra.mxu0 0
    %3242 = vmatprep.mubr.bf16.mxu0 0
    %3243 = vmatmul.mubr.bf16.gmra.mrb[0].mxu0 %v2840
    %v3244 = vpop.f32.mrb[0].mxu0
    %v3245 = vadd.f32 %v3204, %v3244
    %v3246 = vpop.f32.mrb[0].mxu0
    %v3247 = vadd.f32 %v3206, %v3246
    %v3248 = vpop.f32.mrb[0].mxu0
    %v3249 = vpop.f32.mrb[0].mxu0
    %3250 = vdwg.mxu0
    %3251 = vmatprep.subr.bf16.mxu0 %v1239
    %3252 = vmatpush1.bf16.msra.mxu0 %v1238
    %3253 = vmatprep.subr.bf16.mxu0 %v1251
    %3254 = vmatpush1.bf16.msra.mxu0 %v1250
    %3255 = vmatprep.subr.bf16.mxu0 %v1263
    %3256 = vmatpush1.bf16.msra.mxu0 %v1262
    %3257 = vmatprep.subr.bf16.mxu0 %v1275
    %3258 = vmatpush1.bf16.msra.mxu0 %v1274
    %3259 = vmatprep.subr.bf16.mxu0 %v1287
    %3260 = vmatpush1.bf16.msra.mxu0 %v1286
    %3261 = vmatprep.subr.bf16.mxu0 %v1299
    %3262 = vmatpush1.bf16.msra.mxu0 %v1298
    %3263 = vmatprep.subr.bf16.mxu0 %v1311
    %3264 = vmatpush1.bf16.msra.mxu0 %v1310
    %3265 = vmatprep.subr.bf16.mxu0 %v1323
    %3266 = vmatpush1.bf16.msra.mxu0 %v1322
    %3267 = vmatprep.subr.bf16.mxu0 %v1335
    %3268 = vmatpush1.bf16.msra.mxu0 %v1334
    %3269 = vmatprep.subr.bf16.mxu0 %v1347
    %3270 = vmatpush1.bf16.msra.mxu0 %v1346
    %3271 = vmatprep.subr.bf16.mxu0 %v1359
    %3272 = vmatpush1.bf16.msra.mxu0 %v1358
    %3273 = vmatprep.subr.bf16.mxu0 %v1371
    %3274 = vmatpush1.bf16.msra.mxu0 %v1370
    %3275 = vmatprep.subr.bf16.mxu0 %v1383
    %3276 = vmatpush1.bf16.msra.mxu0 %v1382
    %3277 = vmatprep.subr.bf16.mxu0 %v1395
    %3278 = vmatpush1.bf16.msra.mxu0 %v1394
    %3279 = vmatprep.subr.bf16.mxu0 %v1407
    %3280 = vmatpush1.bf16.msra.mxu0 %v1406
    %3281 = vmatprep.subr.bf16.mxu0 %v1419
    %3282 = vmatpush1.bf16.msra.mxu0 %v1418
    %3283 = vmatprep.mubr.bf16.mxu0 %v2839
    %3284 = vmatmul.mubr.bf16.gmra.mrb[0].mxu0 %v2838
    %v3285 = vpop.f32.mrb[0].mxu0
    %v3286 = vadd.f32 0.0, %v3285
    %v3287 = vpop.f32.mrb[0].mxu0
    %v3288 = vadd.f32 0.0, %v3287
    %v3289 = vpop.f32.mrb[0].mxu0
    %v3290 = vpop.f32.mrb[0].mxu0
    %3291 = vdwg.mxu0
    %3292 = vmatprep.subr.bf16.mxu0 %v1431
    %3293 = vmatpush1.bf16.msra.mxu0 %v1430
    %3294 = vmatprep.subr.bf16.mxu0 %v1443
    %3295 = vmatpush1.bf16.msra.mxu0 %v1442
    %3296 = vmatprep.subr.bf16.mxu0 %v1455
    %3297 = vmatpush1.bf16.msra.mxu0 %v1454
    %3298 = vmatprep.subr.bf16.mxu0 %v1467
    %3299 = vmatpush1.bf16.msra.mxu0 %v1466
    %3300 = vmatprep.subr.bf16.mxu0 %v1479
    %3301 = vmatpush1.bf16.msra.mxu0 %v1478
    %3302 = vmatprep.subr.bf16.mxu0 %v1491
    %3303 = vmatpush1.bf16.msra.mxu0 %v1490
    %3304 = vmatprep.subr.bf16.mxu0 %v1503
    %3305 = vmatpush1.bf16.msra.mxu0 %v1502
    %3306 = vmatprep.subr.bf16.mxu0 %v1515
    %3307 = vmatpush1.bf16.msra.mxu0 %v1514
    %3308 = vmatprep.subr.bf16.mxu0 0
    %3309 = vmatpush1.bf16.msra.mxu0 0
    %3310 = vmatprep.subr.bf16.mxu0 0
    %3311 = vmatpush1.bf16.msra.mxu0 0
    %3312 = vmatprep.subr.bf16.mxu0 0
    %3313 = vmatpush1.bf16.msra.mxu0 0
    %3314 = vmatprep.subr.bf16.mxu0 0
    %3315 = vmatpush1.bf16.msra.mxu0 0
    %3316 = vmatprep.subr.bf16.mxu0 0
    %3317 = vmatpush1.bf16.msra.mxu0 0
    %3318 = vmatprep.subr.bf16.mxu0 0
    %3319 = vmatpush1.bf16.msra.mxu0 0
    %3320 = vmatprep.subr.bf16.mxu0 0
    %3321 = vmatpush1.bf16.msra.mxu0 0
    %3322 = vmatprep.subr.bf16.mxu0 0
    %3323 = vmatpush1.bf16.msra.mxu0 0
    %3324 = vmatprep.mubr.bf16.mxu0 0
    %3325 = vmatmul.mubr.bf16.gmra.mrb[0].mxu0 %v2840
    %v3326 = vpop.f32.mrb[0].mxu0
    %v3327 = vadd.f32 %v3286, %v3326
    %v3328 = vpop.f32.mrb[0].mxu0
    %v3329 = vadd.f32 %v3288, %v3328
    %v3330 = vpop.f32.mrb[0].mxu0
    %v3331 = vpop.f32.mrb[0].mxu0
    %3332 = vdwg.mxu0
    %v3334 = vsel %vm2416, %v2837, 0
    %3336 = vmatprep.subr.bf16.mxu0 %v2369
    %3337 = vmatpush1.bf16.msra.mxu0 %v2368
    %3338 = vmatprep.subr.bf16.mxu0 %v2381
    %3339 = vmatpush1.bf16.msra.mxu0 %v2380
    %3340 = vmatprep.subr.bf16.mxu0 0
    %3341 = vmatpush1.bf16.msra.mxu0 0
    %3342 = vmatprep.subr.bf16.mxu0 0
    %3343 = vmatpush1.bf16.msra.mxu0 0
    %3344 = vmatprep.subr.bf16.mxu0 0
    %3345 = vmatpush1.bf16.msra.mxu0 0
    %3346 = vmatprep.subr.bf16.mxu0 0
    %3347 = vmatpush1.bf16.msra.mxu0 0
    %3348 = vmatprep.subr.bf16.mxu0 0
    %3349 = vmatpush1.bf16.msra.mxu0 0
    %3350 = vmatprep.subr.bf16.mxu0 0
    %3351 = vmatpush1.bf16.msra.mxu0 0
    %3352 = vmatprep.subr.bf16.mxu0 0
    %3353 = vmatpush1.bf16.msra.mxu0 0
    %3354 = vmatprep.subr.bf16.mxu0 0
    %3355 = vmatpush1.bf16.msra.mxu0 0
    %3356 = vmatprep.subr.bf16.mxu0 0
    %3357 = vmatpush1.bf16.msra.mxu0 0
    %3358 = vmatprep.subr.bf16.mxu0 0
    %3359 = vmatpush1.bf16.msra.mxu0 0
    %3360 = vmatprep.subr.bf16.mxu0 0
    %3361 = vmatpush1.bf16.msra.mxu0 0
    %3362 = vmatprep.subr.bf16.mxu0 0
    %3363 = vmatpush1.bf16.msra.mxu0 0
    %3364 = vmatprep.subr.bf16.mxu0 0
    %3365 = vmatpush1.bf16.msra.mxu0 0
    %3366 = vmatprep.subr.bf16.mxu0 0
    %3367 = vmatpush1.bf16.msra.mxu0 0
    %3368 = vmatprep.mubr.bf16.mxu0 0
    %3369 = vmatmul.mubr.bf16.gmra.mrb[0].mxu0 %v3334
    %v3370 = vpop.f32.mrb[0].mxu0
    %v3371 = vadd.f32 %v2917, %v3370
    %v3372 = vpop.f32.mrb[0].mxu0
    %v3373 = vadd.f32 %v2919, %v3372
    %v3374 = vpop.f32.mrb[0].mxu0
    %v3375 = vpop.f32.mrb[0].mxu0
    %3376 = vdwg.mxu0
    %3377 = vmatprep.subr.bf16.mxu0 %v2371
    %3378 = vmatpush1.bf16.msra.mxu0 %v2370
    %3379 = vmatprep.subr.bf16.mxu0 %v2383
    %3380 = vmatpush1.bf16.msra.mxu0 %v2382
    %3381 = vmatprep.subr.bf16.mxu0 0
    %3382 = vmatpush1.bf16.msra.mxu0 0
    %3383 = vmatprep.subr.bf16.mxu0 0
    %3384 = vmatpush1.bf16.msra.mxu0 0
    %3385 = vmatprep.subr.bf16.mxu0 0
    %3386 = vmatpush1.bf16.msra.mxu0 0
    %3387 = vmatprep.subr.bf16.mxu0 0
    %3388 = vmatpush1.bf16.msra.mxu0 0
    %3389 = vmatprep.subr.bf16.mxu0 0
    %3390 = vmatpush1.bf16.msra.mxu0 0
    %3391 = vmatprep.subr.bf16.mxu0 0
    %3392 = vmatpush1.bf16.msra.mxu0 0
    %3393 = vmatprep.subr.bf16.mxu0 0
    %3394 = vmatpush1.bf16.msra.mxu0 0
    %3395 = vmatprep.subr.bf16.mxu0 0
    %3396 = vmatpush1.bf16.msra.mxu0 0
    %3397 = vmatprep.subr.bf16.mxu0 0
    %3398 = vmatpush1.bf16.msra.mxu0 0
    %3399 = vmatprep.subr.bf16.mxu0 0
    %3400 = vmatpush1.bf16.msra.mxu0 0
    %3401 = vmatprep.subr.bf16.mxu0 0
    %3402 = vmatpush1.bf16.msra.mxu0 0
    %3403 = vmatprep.subr.bf16.mxu0 0
    %3404 = vmatpush1.bf16.msra.mxu0 0
    %3405 = vmatprep.subr.bf16.mxu0 0
    %3406 = vmatpush1.bf16.msra.mxu0 0
    %3407 = vmatprep.subr.bf16.mxu0 0
    %3408 = vmatpush1.bf16.msra.mxu0 0
    %3409 = vmatprep.mubr.bf16.mxu0 0
    %3410 = vmatmul.mubr.bf16.gmra.mrb[0].mxu0 %v3334
    %v3411 = vpop.f32.mrb[0].mxu0
    %v3412 = vadd.f32 %v2999, %v3411
    %v3413 = vpop.f32.mrb[0].mxu0
    %v3414 = vadd.f32 %v3001, %v3413
    %v3415 = vpop.f32.mrb[0].mxu0
    %v3416 = vpop.f32.mrb[0].mxu0
    %3417 = vdwg.mxu0
    %3418 = vmatprep.subr.bf16.mxu0 %v2373
    %3419 = vmatpush1.bf16.msra.mxu0 %v2372
    %3420 = vmatprep.subr.bf16.mxu0 %v2385
    %3421 = vmatpush1.bf16.msra.mxu0 %v2384
    %3422 = vmatprep.subr.bf16.mxu0 0
    %3423 = vmatpush1.bf16.msra.mxu0 0
    %3424 = vmatprep.subr.bf16.mxu0 0
    %3425 = vmatpush1.bf16.msra.mxu0 0
    %3426 = vmatprep.subr.bf16.mxu0 0
    %3427 = vmatpush1.bf16.msra.mxu0 0
    %3428 = vmatprep.subr.bf16.mxu0 0
    %3429 = vmatpush1.bf16.msra.mxu0 0
    %3430 = vmatprep.subr.bf16.mxu0 0
    %3431 = vmatpush1.bf16.msra.mxu0 0
    %3432 = vmatprep.subr.bf16.mxu0 0
    %3433 = vmatpush1.bf16.msra.mxu0 0
    %3434 = vmatprep.subr.bf16.mxu0 0
    %3435 = vmatpush1.bf16.msra.mxu0 0
    %3436 = vmatprep.subr.bf16.mxu0 0
    %3437 = vmatpush1.bf16.msra.mxu0 0
    %3438 = vmatprep.subr.bf16.mxu0 0
    %3439 = vmatpush1.bf16.msra.mxu0 0
    %3440 = vmatprep.subr.bf16.mxu0 0
    %3441 = vmatpush1.bf16.msra.mxu0 0
    %3442 = vmatprep.subr.bf16.mxu0 0
    %3443 = vmatpush1.bf16.msra.mxu0 0
    %3444 = vmatprep.subr.bf16.mxu0 0
    %3445 = vmatpush1.bf16.msra.mxu0 0
    %3446 = vmatprep.subr.bf16.mxu0 0
    %3447 = vmatpush1.bf16.msra.mxu0 0
    %3448 = vmatprep.subr.bf16.mxu0 0
    %3449 = vmatpush1.bf16.msra.mxu0 0
    %3450 = vmatprep.mubr.bf16.mxu0 0
    %3451 = vmatmul.mubr.bf16.gmra.mrb[0].mxu0 %v3334
    %v3452 = vpop.f32.mrb[0].mxu0
    %v3453 = vadd.f32 %v3081, %v3452
    %v3454 = vpop.f32.mrb[0].mxu0
    %v3455 = vadd.f32 %v3083, %v3454
    %v3456 = vpop.f32.mrb[0].mxu0
    %v3457 = vpop.f32.mrb[0].mxu0
    %3458 = vdwg.mxu0
    %3459 = vmatprep.subr.bf16.mxu0 %v2375
    %3460 = vmatpush1.bf16.msra.mxu0 %v2374
    %3461 = vmatprep.subr.bf16.mxu0 %v2387
    %3462 = vmatpush1.bf16.msra.mxu0 %v2386
    %3463 = vmatprep.subr.bf16.mxu0 0
    %3464 = vmatpush1.bf16.msra.mxu0 0
    %3465 = vmatprep.subr.bf16.mxu0 0
    %3466 = vmatpush1.bf16.msra.mxu0 0
    %3467 = vmatprep.subr.bf16.mxu0 0
    %3468 = vmatpush1.bf16.msra.mxu0 0
    %3469 = vmatprep.subr.bf16.mxu0 0
    %3470 = vmatpush1.bf16.msra.mxu0 0
    %3471 = vmatprep.subr.bf16.mxu0 0
    %3472 = vmatpush1.bf16.msra.mxu0 0
    %3473 = vmatprep.subr.bf16.mxu0 0
    %3474 = vmatpush1.bf16.msra.mxu0 0
    %3475 = vmatprep.subr.bf16.mxu0 0
    %3476 = vmatpush1.bf16.msra.mxu0 0
    %3477 = vmatprep.subr.bf16.mxu0 0
    %3478 = vmatpush1.bf16.msra.mxu0 0
    %3479 = vmatprep.subr.bf16.mxu0 0
    %3480 = vmatpush1.bf16.msra.mxu0 0
    %3481 = vmatprep.subr.bf16.mxu0 0
    %3482 = vmatpush1.bf16.msra.mxu0 0
    %3483 = vmatprep.subr.bf16.mxu0 0
    %3484 = vmatpush1.bf16.msra.mxu0 0
    %3485 = vmatprep.subr.bf16.mxu0 0
    %3486 = vmatpush1.bf16.msra.mxu0 0
    %3487 = vmatprep.subr.bf16.mxu0 0
    %3488 = vmatpush1.bf16.msra.mxu0 0
    %3489 = vmatprep.subr.bf16.mxu0 0
    %3490 = vmatpush1.bf16.msra.mxu0 0
    %3491 = vmatprep.mubr.bf16.mxu0 0
    %3492 = vmatmul.mubr.bf16.gmra.mrb[0].mxu0 %v3334
    %v3493 = vpop.f32.mrb[0].mxu0
    %v3494 = vadd.f32 %v3163, %v3493
    %v3495 = vpop.f32.mrb[0].mxu0
    %v3496 = vadd.f32 %v3165, %v3495
    %v3497 = vpop.f32.mrb[0].mxu0
    %v3498 = vpop.f32.mrb[0].mxu0
    %3499 = vdwg.mxu0
    %3500 = vmatprep.subr.bf16.mxu0 %v2377
    %3501 = vmatpush1.bf16.msra.mxu0 %v2376
    %3502 = vmatprep.subr.bf16.mxu0 %v2389
    %3503 = vmatpush1.bf16.msra.mxu0 %v2388
    %3504 = vmatprep.subr.bf16.mxu0 0
    %3505 = vmatpush1.bf16.msra.mxu0 0
    %3506 = vmatprep.subr.bf16.mxu0 0
    %3507 = vmatpush1.bf16.msra.mxu0 0
    %3508 = vmatprep.subr.bf16.mxu0 0
    %3509 = vmatpush1.bf16.msra.mxu0 0
    %3510 = vmatprep.subr.bf16.mxu0 0
    %3511 = vmatpush1.bf16.msra.mxu0 0
    %3512 = vmatprep.subr.bf16.mxu0 0
    %3513 = vmatpush1.bf16.msra.mxu0 0
    %3514 = vmatprep.subr.bf16.mxu0 0
    %3515 = vmatpush1.bf16.msra.mxu0 0
    %3516 = vmatprep.subr.bf16.mxu0 0
    %3517 = vmatpush1.bf16.msra.mxu0 0
    %3518 = vmatprep.subr.bf16.mxu0 0
    %3519 = vmatpush1.bf16.msra.mxu0 0
    %3520 = vmatprep.subr.bf16.mxu0 0
    %3521 = vmatpush1.bf16.msra.mxu0 0
    %3522 = vmatprep.subr.bf16.mxu0 0
    %3523 = vmatpush1.bf16.msra.mxu0 0
    %3524 = vmatprep.subr.bf16.mxu0 0
    %3525 = vmatpush1.bf16.msra.mxu0 0
    %3526 = vmatprep.subr.bf16.mxu0 0
    %3527 = vmatpush1.bf16.msra.mxu0 0
    %3528 = vmatprep.subr.bf16.mxu0 0
    %3529 = vmatpush1.bf16.msra.mxu0 0
    %3530 = vmatprep.subr.bf16.mxu0 0
    %3531 = vmatpush1.bf16.msra.mxu0 0
    %3532 = vmatprep.mubr.bf16.mxu0 0
    %3533 = vmatmul.mubr.bf16.gmra.mrb[0].mxu0 %v3334
    %v3534 = vpop.f32.mrb[0].mxu0
    %v3535 = vadd.f32 %v3245, %v3534
    %v3536 = vpop.f32.mrb[0].mxu0
    %v3537 = vadd.f32 %v3247, %v3536
    %v3538 = vpop.f32.mrb[0].mxu0
    %v3539 = vpop.f32.mrb[0].mxu0
    %3540 = vdwg.mxu0
    %3541 = vmatprep.subr.bf16.mxu0 %v2379
    %3542 = vmatpush1.bf16.msra.mxu0 %v2378
    %3543 = vmatprep.subr.bf16.mxu0 %v2391
    %3544 = vmatpush1.bf16.msra.mxu0 %v2390
    %3545 = vmatprep.subr.bf16.mxu0 0
    %3546 = vmatpush1.bf16.msra.mxu0 0
    %3547 = vmatprep.subr.bf16.mxu0 0
    %3548 = vmatpush1.bf16.msra.mxu0 0
    %3549 = vmatprep.subr.bf16.mxu0 0
    %3550 = vmatpush1.bf16.msra.mxu0 0
    %3551 = vmatprep.subr.bf16.mxu0 0
    %3552 = vmatpush1.bf16.msra.mxu0 0
    %3553 = vmatprep.subr.bf16.mxu0 0
    %3554 = vmatpush1.bf16.msra.mxu0 0
    %3555 = vmatprep.subr.bf16.mxu0 0
    %3556 = vmatpush1.bf16.msra.mxu0 0
    %3557 = vmatprep.subr.bf16.mxu0 0
    %3558 = vmatpush1.bf16.msra.mxu0 0
    %3559 = vmatprep.subr.bf16.mxu0 0
    %3560 = vmatpush1.bf16.msra.mxu0 0
    %3561 = vmatprep.subr.bf16.mxu0 0
    %3562 = vmatpush1.bf16.msra.mxu0 0
    %3563 = vmatprep.subr.bf16.mxu0 0
    %3564 = vmatpush1.bf16.msra.mxu0 0
    %3565 = vmatprep.subr.bf16.mxu0 0
    %3566 = vmatpush1.bf16.msra.mxu0 0
    %3567 = vmatprep.subr.bf16.mxu0 0
    %3568 = vmatpush1.bf16.msra.mxu0 0
    %3569 = vmatprep.subr.bf16.mxu0 0
    %3570 = vmatpush1.bf16.msra.mxu0 0
    %3571 = vmatprep.subr.bf16.mxu0 0
    %3572 = vmatpush1.bf16.msra.mxu0 0
    %3573 = vmatprep.mubr.bf16.mxu0 0
    %3574 = vmatmul.mubr.bf16.gmra.mrb[0].mxu0 %v3334
    %v3575 = vpop.f32.mrb[0].mxu0
    %v3576 = vadd.f32 %v3327, %v3575
    %v3577 = vpop.f32.mrb[0].mxu0
    %v3578 = vadd.f32 %v3329, %v3577
    %v3579 = vpop.f32.mrb[0].mxu0
    %v3580 = vpop.f32.mrb[0].mxu0
    %3581 = vdwg.mxu0
    %v3582 = vadd.f32 %v3371, %v2671
    %v3583 = vadd.f32 %v3373, %v2675
    %v3584 = vadd.f32 %v3412, %v2679
    %v3585 = vadd.f32 %v3414, %v2683
    %v3586 = vadd.f32 %v3453, %v2687
    %v3587 = vadd.f32 %v3455, %v2691
    %v3588 = vadd.f32 %v3494, %v2695
    %v3589 = vadd.f32 %v3496, %v2699
    %v3590 = vadd.f32 %v3535, %v2703
    %v3591 = vadd.f32 %v3537, %v2707
    %v3592 = vadd.f32 %v3576, %v2711
    %v3593 = vadd.f32 %v3578, %v2715
    %v3594 = vmul.f32 %v3582, 0.5
    %v3595 = vmul.f32 %v3583, 0.5
    %v3596 = vmul.f32 %v3584, 0.5
    %v3597 = vtanh.pop %v3594
    %v3598 = vtanh.pop %v3595
    %v3599 = vtanh.pop %v3596
    %v3600 = vmul.f32 %v3597, 0.5
    %v3601 = vmul.f32 %v3598, 0.5
    %v3602 = vmul.f32 %v3599, 0.5
    %v3603 = vadd.f32 %v3600, 0.5
    %v3604 = vadd.f32 %v3601, 0.5
    %v3605 = vadd.f32 %v3602, 0.5
    %v3606 = vmul.f32 %v3585, 0.5
    %v3607 = vmul.f32 %v3586, 0.5
    %v3608 = vmul.f32 %v3587, 0.5
    %v3609 = vtanh.pop %v3606
    %v3610 = vtanh.pop %v3607
    %v3611 = vtanh.pop %v3608
    %v3612 = vmul.f32 %v3609, 0.5
    %v3613 = vmul.f32 %v3610, 0.5
    %v3614 = vmul.f32 %v3611, 0.5
    %v3615 = vadd.f32 %v3612, 0.5
    %v3616 = vadd.f32 %v3613, 0.5
    %v3617 = vadd.f32 %v3614, 0.5
    %v3618 = vtanh.pop %v3588
    %v3619 = vtanh.pop %v3589
    %v3620 = vtanh.pop %v3590
    %v3621 = vmul.f32 %v3591, 0.5
    %v3622 = vmul.f32 %v3592, 0.5
    %v3623 = vmul.f32 %v3593, 0.5
    %v3624 = vtanh.pop %v3621
    %v3625 = vtanh.pop %v3622
    %v3626 = vtanh.pop %v3623
    %v3627 = vmul.f32 %v3624, 0.5
    %v3628 = vmul.f32 %v3625, 0.5
    %v3629 = vmul.f32 %v3626, 0.5
    %v3630 = vadd.f32 %v3627, 0.5
    %v3631 = vadd.f32 %v3628, 0.5
    %v3632 = vadd.f32 %v3629, 0.5
    %v3633 = vmul.f32 %v3615, %v2785
    %v3634 = vmul.f32 %v3616, %v2786
    %v3635 = vmul.f32 %v3617, %v2787
    %v3636 = vmul.f32 %v3603, %v3618
    %v3637 = vmul.f32 %v3604, %v3619
    %v3638 = vmul.f32 %v3605, %v3620
    %v3639 = vadd.f32 %v3633, %v3636
    %v3640 = vadd.f32 %v3634, %v3637
    %v3641 = vadd.f32 %v3635, %v3638
    %v3642 = vtanh.pop %v3639
    %v3643 = vtanh.pop %v3640
    %v3644 = vtanh.pop %v3641
    %v3645 = vmul.f32 %v3630, %v3642
    %v3646 = vmul.f32 %v3631, %v3643
    %v3647 = vmul.f32 %v3632, %v3644
    %v3648 = vtanh.pop %v3645
    %v3649 = vtanh.pop %v3646
    %v3650 = vtanh.pop %v3647
    %v3651 = vmax.f32 %v3648, 0.0
    %v3652 = vmax.f32 %v3649, 0.0
    %v3653 = vmax.f32 %v3650, 0.0
    %s3654 = sld [smem:[#allocation2 + $0x3]]
    %v3655 = vstv %s3654
    %v3656 = vmul.f32 %v3651, %v3655
    %v3657 = vadd.f32 %v2827, %v3656
    %s3658 = sld [smem:[#allocation2 + $0x4]]
    %v3659 = vstv %s3658
    %v3660 = vmul.f32 %v3651, %v3659
    %v3661 = vadd.f32 %v2831, %v3660
    %s3662 = sld [smem:[#allocation2 + $0x5]]
    %v3663 = vstv %s3662
    %v3664 = vmul.f32 %v3651, %v3663
    %v3665 = vadd.f32 %v2835, %v3664
    %s3666 = sld [smem:[#allocation2 + $0xf]]
    %v3667 = vstv %s3666
    %v3668 = vmul.f32 %v3652, %v3667
    %v3669 = vadd.f32 %v3657, %v3668
    %s3670 = sld [smem:[#allocation2 + $0x10]]
    %v3671 = vstv %s3670
    %v3672 = vmul.f32 %v3652, %v3671
    %v3673 = vadd.f32 %v3661, %v3672
    %s3674 = sld [smem:[#allocation2 + $0x11]]
    %v3675 = vstv %s3674
    %v3676 = vmul.f32 %v3652, %v3675
    %v3677 = vadd.f32 %v3665, %v3676
    %s3678 = sld [smem:[#allocation2 + $0x1b]]
    %v3679 = vstv %s3678
    %v3680 = vmul.f32 %v3653, %v3679
    %v3681 = vadd.f32 %v3669, %v3680
    %s3682 = sld [smem:[#allocation2 + $0x1c]]
    %v3683 = vstv %s3682
    %v3684 = vmul.f32 %v3653, %v3683
    %v3685 = vadd.f32 %v3673, %v3684
    %s3686 = sld [smem:[#allocation2 + $0x1d]]
    %v3687 = vstv %s3686
    %v3688 = vmul.f32 %v3653, %v3687
    %v3689 = vadd.f32 %v3677, %v3688
    %s3690 = scalar_lea.vmem %s0, 8
    %v3691 = vld [vmem:[%s3690] sm:$0xf]
    %v3692 = vpack.c.bf16 %v3648, %v3648
    %v3693 = vpack.c.bf16 %v3649, %v3649
    %v3694 = vpack.c.bf16 %v3650, %v3650
    %3695 = vmatprep.subr.bf16.mxu0 %v1229
    %3696 = vmatpush1.bf16.msra.mxu0 %v1228
    %3697 = vmatprep.subr.bf16.mxu0 %v1241
    %3698 = vmatpush1.bf16.msra.mxu0 %v1240
    %3699 = vmatprep.subr.bf16.mxu0 %v1253
    %3700 = vmatpush1.bf16.msra.mxu0 %v1252
    %3701 = vmatprep.subr.bf16.mxu0 %v1265
    %3702 = vmatpush1.bf16.msra.mxu0 %v1264
    %3703 = vmatprep.subr.bf16.mxu0 %v1277
    %3704 = vmatpush1.bf16.msra.mxu0 %v1276
    %3705 = vmatprep.subr.bf16.mxu0 %v1289
    %3706 = vmatpush1.bf16.msra.mxu0 %v1288
    %3707 = vmatprep.subr.bf16.mxu0 %v1301
    %3708 = vmatpush1.bf16.msra.mxu0 %v1300
    %3709 = vmatprep.subr.bf16.mxu0 %v1313
    %3710 = vmatpush1.bf16.msra.mxu0 %v1312
    %3711 = vmatprep.subr.bf16.mxu0 %v1325
    %3712 = vmatpush1.bf16.msra.mxu0 %v1324
    %3713 = vmatprep.subr.bf16.mxu0 %v1337
    %3714 = vmatpush1.bf16.msra.mxu0 %v1336
    %3715 = vmatprep.subr.bf16.mxu0 %v1349
    %3716 = vmatpush1.bf16.msra.mxu0 %v1348
    %3717 = vmatprep.subr.bf16.mxu0 %v1361
    %3718 = vmatpush1.bf16.msra.mxu0 %v1360
    %3719 = vmatprep.subr.bf16.mxu0 %v1373
    %3720 = vmatpush1.bf16.msra.mxu0 %v1372
    %3721 = vmatprep.subr.bf16.mxu0 %v1385
    %3722 = vmatpush1.bf16.msra.mxu0 %v1384
    %3723 = vmatprep.subr.bf16.mxu0 %v1397
    %3724 = vmatpush1.bf16.msra.mxu0 %v1396
    %3725 = vmatprep.subr.bf16.mxu0 %v1409
    %3726 = vmatpush1.bf16.msra.mxu0 %v1408
    %3727 = vmatprep.mubr.bf16.mxu0 %v3693
    %3728 = vmatmul.mubr.bf16.gmra.mrb[0].mxu0 %v3692
    %v3729 = vpop.f32.mrb[0].mxu0
    %v3730 = vadd.f32 0.0, %v3729
    %v3731 = vpop.f32.mrb[0].mxu0
    %v3732 = vadd.f32 0.0, %v3731
    %v3733 = vpop.f32.mrb[0].mxu0
    %v3734 = vpop.f32.mrb[0].mxu0
    %3735 = vdwg.mxu0
    %3736 = vmatprep.subr.bf16.mxu0 %v1421
    %3737 = vmatpush1.bf16.msra.mxu0 %v1420
    %3738 = vmatprep.subr.bf16.mxu0 %v1433
    %3739 = vmatpush1.bf16.msra.mxu0 %v1432
    %3740 = vmatprep.subr.bf16.mxu0 %v1445
    %3741 = vmatpush1.bf16.msra.mxu0 %v1444
    %3742 = vmatprep.subr.bf16.mxu0 %v1457
    %3743 = vmatpush1.bf16.msra.mxu0 %v1456
    %3744 = vmatprep.subr.bf16.mxu0 %v1469
    %3745 = vmatpush1.bf16.msra.mxu0 %v1468
    %3746 = vmatprep.subr.bf16.mxu0 %v1481
    %3747 = vmatpush1.bf16.msra.mxu0 %v1480
    %3748 = vmatprep.subr.bf16.mxu0 %v1493
    %3749 = vmatpush1.bf16.msra.mxu0 %v1492
    %3750 = vmatprep.subr.bf16.mxu0 %v1505
    %3751 = vmatpush1.bf16.msra.mxu0 %v1504
    %3752 = vmatprep.subr.bf16.mxu0 0
    %3753 = vmatpush1.bf16.msra.mxu0 0
    %3754 = vmatprep.subr.bf16.mxu0 0
    %3755 = vmatpush1.bf16.msra.mxu0 0
    %3756 = vmatprep.subr.bf16.mxu0 0
    %3757 = vmatpush1.bf16.msra.mxu0 0
    %3758 = vmatprep.subr.bf16.mxu0 0
    %3759 = vmatpush1.bf16.msra.mxu0 0
    %3760 = vmatprep.subr.bf16.mxu0 0
    %3761 = vmatpush1.bf16.msra.mxu0 0
    %3762 = vmatprep.subr.bf16.mxu0 0
    %3763 = vmatpush1.bf16.msra.mxu0 0
    %3764 = vmatprep.subr.bf16.mxu0 0
    %3765 = vmatpush1.bf16.msra.mxu0 0
    %3766 = vmatprep.subr.bf16.mxu0 0
    %3767 = vmatpush1.bf16.msra.mxu0 0
    %3768 = vmatprep.mubr.bf16.mxu0 0
    %3769 = vmatmul.mubr.bf16.gmra.mrb[0].mxu0 %v3694
    %v3770 = vpop.f32.mrb[0].mxu0
    %v3771 = vadd.f32 %v3730, %v3770
    %v3772 = vpop.f32.mrb[0].mxu0
    %v3773 = vadd.f32 %v3732, %v3772
    %v3774 = vpop.f32.mrb[0].mxu0
    %v3775 = vpop.f32.mrb[0].mxu0
    %3776 = vdwg.mxu0
    %3777 = vmatprep.subr.bf16.mxu0 %v1231
    %3778 = vmatpush1.bf16.msra.mxu0 %v1230
    %3779 = vmatprep.subr.bf16.mxu0 %v1243
    %3780 = vmatpush1.bf16.msra.mxu0 %v1242
    %3781 = vmatprep.subr.bf16.mxu0 %v1255
    %3782 = vmatpush1.bf16.msra.mxu0 %v1254
    %3783 = vmatprep.subr.bf16.mxu0 %v1267
    %3784 = vmatpush1.bf16.msra.mxu0 %v1266
    %3785 = vmatprep.subr.bf16.mxu0 %v1279
    %3786 = vmatpush1.bf16.msra.mxu0 %v1278
    %3787 = vmatprep.subr.bf16.mxu0 %v1291
    %3788 = vmatpush1.bf16.msra.mxu0 %v1290
    %3789 = vmatprep.subr.bf16.mxu0 %v1303
    %3790 = vmatpush1.bf16.msra.mxu0 %v1302
    %3791 = vmatprep.subr.bf16.mxu0 %v1315
    %3792 = vmatpush1.bf16.msra.mxu0 %v1314
    %3793 = vmatprep.subr.bf16.mxu0 %v1327
    %3794 = vmatpush1.bf16.msra.mxu0 %v1326
    %3795 = vmatprep.subr.bf16.mxu0 %v1339
    %3796 = vmatpush1.bf16.msra.mxu0 %v1338
    %3797 = vmatprep.subr.bf16.mxu0 %v1351
    %3798 = vmatpush1.bf16.msra.mxu0 %v1350
    %3799 = vmatprep.subr.bf16.mxu0 %v1363
    %3800 = vmatpush1.bf16.msra.mxu0 %v1362
    %3801 = vmatprep.subr.bf16.mxu0 %v1375
    %3802 = vmatpush1.bf16.msra.mxu0 %v1374
    %3803 = vmatprep.subr.bf16.mxu0 %v1387
    %3804 = vmatpush1.bf16.msra.mxu0 %v1386
    %3805 = vmatprep.subr.bf16.mxu0 %v1399
    %3806 = vmatpush1.bf16.msra.mxu0 %v1398
    %3807 = vmatprep.subr.bf16.mxu0 %v1411
    %3808 = vmatpush1.bf16.msra.mxu0 %v1410
    %3809 = vmatprep.mubr.bf16.mxu0 %v3693
    %3810 = vmatmul.mubr.bf16.gmra.mrb[0].mxu0 %v3692
    %v3811 = vpop.f32.mrb[0].mxu0
    %v3812 = vadd.f32 0.0, %v3811
    %v3813 = vpop.f32.mrb[0].mxu0
    %v3814 = vadd.f32 0.0, %v3813
    %v3815 = vpop.f32.mrb[0].mxu0
    %v3816 = vpop.f32.mrb[0].mxu0
    %3817 = vdwg.mxu0
    %3818 = vmatprep.subr.bf16.mxu0 %v1423
    %3819 = vmatpush1.bf16.msra.mxu0 %v1422
    %3820 = vmatprep.subr.bf16.mxu0 %v1435
    %3821 = vmatpush1.bf16.msra.mxu0 %v1434
    %3822 = vmatprep.subr.bf16.mxu0 %v1447
    %3823 = vmatpush1.bf16.msra.mxu0 %v1446
    %3824 = vmatprep.subr.bf16.mxu0 %v1459
    %3825 = vmatpush1.bf16.msra.mxu0 %v1458
    %3826 = vmatprep.subr.bf16.mxu0 %v1471
    %3827 = vmatpush1.bf16.msra.mxu0 %v1470
    %3828 = vmatprep.subr.bf16.mxu0 %v1483
    %3829 = vmatpush1.bf16.msra.mxu0 %v1482
    %3830 = vmatprep.subr.bf16.mxu0 %v1495
    %3831 = vmatpush1.bf16.msra.mxu0 %v1494
    %3832 = vmatprep.subr.bf16.mxu0 %v1507
    %3833 = vmatpush1.bf16.msra.mxu0 %v1506
    %3834 = vmatprep.subr.bf16.mxu0 0
    %3835 = vmatpush1.bf16.msra.mxu0 0
    %3836 = vmatprep.subr.bf16.mxu0 0
    %3837 = vmatpush1.bf16.msra.mxu0 0
    %3838 = vmatprep.subr.bf16.mxu0 0
    %3839 = vmatpush1.bf16.msra.mxu0 0
    %3840 = vmatprep.subr.bf16.mxu0 0
    %3841 = vmatpush1.bf16.msra.mxu0 0
    %3842 = vmatprep.subr.bf16.mxu0 0
    %3843 = vmatpush1.bf16.msra.mxu0 0
    %3844 = vmatprep.subr.bf16.mxu0 0
    %3845 = vmatpush1.bf16.msra.mxu0 0
    %3846 = vmatprep.subr.bf16.mxu0 0
    %3847 = vmatpush1.bf16.msra.mxu0 0
    %3848 = vmatprep.subr.bf16.mxu0 0
    %3849 = vmatpush1.bf16.msra.mxu0 0
    %3850 = vmatprep.mubr.bf16.mxu0 0
    %3851 = vmatmul.mubr.bf16.gmra.mrb[0].mxu0 %v3694
    %v3852 = vpop.f32.mrb[0].mxu0
    %v3853 = vadd.f32 %v3812, %v3852
    %v3854 = vpop.f32.mrb[0].mxu0
    %v3855 = vadd.f32 %v3814, %v3854
    %v3856 = vpop.f32.mrb[0].mxu0
    %v3857 = vpop.f32.mrb[0].mxu0
    %3858 = vdwg.mxu0
    %3859 = vmatprep.subr.bf16.mxu0 %v1233
    %3860 = vmatpush1.bf16.msra.mxu0 %v1232
    %3861 = vmatprep.subr.bf16.mxu0 %v1245
    %3862 = vmatpush1.bf16.msra.mxu0 %v1244
    %3863 = vmatprep.subr.bf16.mxu0 %v1257
    %3864 = vmatpush1.bf16.msra.mxu0 %v1256
    %3865 = vmatprep.subr.bf16.mxu0 %v1269
    %3866 = vmatpush1.bf16.msra.mxu0 %v1268
    %3867 = vmatprep.subr.bf16.mxu0 %v1281
    %3868 = vmatpush1.bf16.msra.mxu0 %v1280
    %3869 = vmatprep.subr.bf16.mxu0 %v1293
    %3870 = vmatpush1.bf16.msra.mxu0 %v1292
    %3871 = vmatprep.subr.bf16.mxu0 %v1305
    %3872 = vmatpush1.bf16.msra.mxu0 %v1304
    %3873 = vmatprep.subr.bf16.mxu0 %v1317
    %3874 = vmatpush1.bf16.msra.mxu0 %v1316
    %3875 = vmatprep.subr.bf16.mxu0 %v1329
    %3876 = vmatpush1.bf16.msra.mxu0 %v1328
    %3877 = vmatprep.subr.bf16.mxu0 %v1341
    %3878 = vmatpush1.bf16.msra.mxu0 %v1340
    %3879 = vmatprep.subr.bf16.mxu0 %v1353
    %3880 = vmatpush1.bf16.msra.mxu0 %v1352
    %3881 = vmatprep.subr.bf16.mxu0 %v1365
    %3882 = vmatpush1.bf16.msra.mxu0 %v1364
    %3883 = vmatprep.subr.bf16.mxu0 %v1377
    %3884 = vmatpush1.bf16.msra.mxu0 %v1376
    %3885 = vmatprep.subr.bf16.mxu0 %v1389
    %3886 = vmatpush1.bf16.msra.mxu0 %v1388
    %3887 = vmatprep.subr.bf16.mxu0 %v1401
    %3888 = vmatpush1.bf16.msra.mxu0 %v1400
    %3889 = vmatprep.subr.bf16.mxu0 %v1413
    %3890 = vmatpush1.bf16.msra.mxu0 %v1412
    %3891 = vmatprep.mubr.bf16.mxu0 %v3693
    %3892 = vmatmul.mubr.bf16.gmra.mrb[0].mxu0 %v3692
    %v3893 = vpop.f32.mrb[0].mxu0
    %v3894 = vadd.f32 0.0, %v3893
    %v3895 = vpop.f32.mrb[0].mxu0
    %v3896 = vadd.f32 0.0, %v3895
    %v3897 = vpop.f32.mrb[0].mxu0
    %v3898 = vpop.f32.mrb[0].mxu0
    %3899 = vdwg.mxu0
    %3900 = vmatprep.subr.bf16.mxu0 %v1425
    %3901 = vmatpush1.bf16.msra.mxu0 %v1424
    %3902 = vmatprep.subr.bf16.mxu0 %v1437
    %3903 = vmatpush1.bf16.msra.mxu0 %v1436
    %3904 = vmatprep.subr.bf16.mxu0 %v1449
    %3905 = vmatpush1.bf16.msra.mxu0 %v1448
    %3906 = vmatprep.subr.bf16.mxu0 %v1461
    %3907 = vmatpush1.bf16.msra.mxu0 %v1460
    %3908 = vmatprep.subr.bf16.mxu0 %v1473
    %3909 = vmatpush1.bf16.msra.mxu0 %v1472
    %3910 = vmatprep.subr.bf16.mxu0 %v1485
    %3911 = vmatpush1.bf16.msra.mxu0 %v1484
    %3912 = vmatprep.subr.bf16.mxu0 %v1497
    %3913 = vmatpush1.bf16.msra.mxu0 %v1496
    %3914 = vmatprep.subr.bf16.mxu0 %v1509
    %3915 = vmatpush1.bf16.msra.mxu0 %v1508
    %3916 = vmatprep.subr.bf16.mxu0 0
    %3917 = vmatpush1.bf16.msra.mxu0 0
    %3918 = vmatprep.subr.bf16.mxu0 0
    %3919 = vmatpush1.bf16.msra.mxu0 0
    %3920 = vmatprep.subr.bf16.mxu0 0
    %3921 = vmatpush1.bf16.msra.mxu0 0
    %3922 = vmatprep.subr.bf16.mxu0 0
    %3923 = vmatpush1.bf16.msra.mxu0 0
    %3924 = vmatprep.subr.bf16.mxu0 0
    %3925 = vmatpush1.bf16.msra.mxu0 0
    %3926 = vmatprep.subr.bf16.mxu0 0
    %3927 = vmatpush1.bf16.msra.mxu0 0
    %3928 = vmatprep.subr.bf16.mxu0 0
    %3929 = vmatpush1.bf16.msra.mxu0 0
    %3930 = vmatprep.subr.bf16.mxu0 0
    %3931 = vmatpush1.bf16.msra.mxu0 0
    %3932 = vmatprep.mubr.bf16.mxu0 0
    %3933 = vmatmul.mubr.bf16.gmra.mrb[0].mxu0 %v3694
    %v3934 = vpop.f32.mrb[0].mxu0
    %v3935 = vadd.f32 %v3894, %v3934
    %v3936 = vpop.f32.mrb[0].mxu0
    %v3937 = vadd.f32 %v3896, %v3936
    %v3938 = vpop.f32.mrb[0].mxu0
    %v3939 = vpop.f32.mrb[0].mxu0
    %3940 = vdwg.mxu0
    %3941 = vmatprep.subr.bf16.mxu0 %v1235
    %3942 = vmatpush1.bf16.msra.mxu0 %v1234
    %3943 = vmatprep.subr.bf16.mxu0 %v1247
    %3944 = vmatpush1.bf16.msra.mxu0 %v1246
    %3945 = vmatprep.subr.bf16.mxu0 %v1259
    %3946 = vmatpush1.bf16.msra.mxu0 %v1258
    %3947 = vmatprep.subr.bf16.mxu0 %v1271
    %3948 = vmatpush1.bf16.msra.mxu0 %v1270
    %3949 = vmatprep.subr.bf16.mxu0 %v1283
    %3950 = vmatpush1.bf16.msra.mxu0 %v1282
    %3951 = vmatprep.subr.bf16.mxu0 %v1295
    %3952 = vmatpush1.bf16.msra.mxu0 %v1294
    %3953 = vmatprep.subr.bf16.mxu0 %v1307
    %3954 = vmatpush1.bf16.msra.mxu0 %v1306
    %3955 = vmatprep.subr.bf16.mxu0 %v1319
    %3956 = vmatpush1.bf16.msra.mxu0 %v1318
    %3957 = vmatprep.subr.bf16.mxu0 %v1331
    %3958 = vmatpush1.bf16.msra.mxu0 %v1330
    %3959 = vmatprep.subr.bf16.mxu0 %v1343
    %3960 = vmatpush1.bf16.msra.mxu0 %v1342
    %3961 = vmatprep.subr.bf16.mxu0 %v1355
    %3962 = vmatpush1.bf16.msra.mxu0 %v1354
    %3963 = vmatprep.subr.bf16.mxu0 %v1367
    %3964 = vmatpush1.bf16.msra.mxu0 %v1366
    %3965 = vmatprep.subr.bf16.mxu0 %v1379
    %3966 = vmatpush1.bf16.msra.mxu0 %v1378
    %3967 = vmatprep.subr.bf16.mxu0 %v1391
    %3968 = vmatpush1.bf16.msra.mxu0 %v1390
    %3969 = vmatprep.subr.bf16.mxu0 %v1403
    %3970 = vmatpush1.bf16.msra.mxu0 %v1402
    %3971 = vmatprep.subr.bf16.mxu0 %v1415
    %3972 = vmatpush1.bf16.msra.mxu0 %v1414
    %3973 = vmatprep.mubr.bf16.mxu0 %v3693
    %3974 = vmatmul.mubr.bf16.gmra.mrb[0].mxu0 %v3692
    %v3975 = vpop.f32.mrb[0].mxu0
    %v3976 = vadd.f32 0.0, %v3975
    %v3977 = vpop.f32.mrb[0].mxu0
    %v3978 = vadd.f32 0.0, %v3977
    %v3979 = vpop.f32.mrb[0].mxu0
    %v3980 = vpop.f32.mrb[0].mxu0
    %3981 = vdwg.mxu0
    %3982 = vmatprep.subr.bf16.mxu0 %v1427
    %3983 = vmatpush1.bf16.msra.mxu0 %v1426
    %3984 = vmatprep.subr.bf16.mxu0 %v1439
    %3985 = vmatpush1.bf16.msra.mxu0 %v1438
    %3986 = vmatprep.subr.bf16.mxu0 %v1451
    %3987 = vmatpush1.bf16.msra.mxu0 %v1450
    %3988 = vmatprep.subr.bf16.mxu0 %v1463
    %3989 = vmatpush1.bf16.msra.mxu0 %v1462
    %3990 = vmatprep.subr.bf16.mxu0 %v1475
    %3991 = vmatpush1.bf16.msra.mxu0 %v1474
    %3992 = vmatprep.subr.bf16.mxu0 %v1487
    %3993 = vmatpush1.bf16.msra.mxu0 %v1486
    %3994 = vmatprep.subr.bf16.mxu0 %v1499
    %3995 = vmatpush1.bf16.msra.mxu0 %v1498
    %3996 = vmatprep.subr.bf16.mxu0 %v1511
    %3997 = vmatpush1.bf16.msra.mxu0 %v1510
    %3998 = vmatprep.subr.bf16.mxu0 0
    %3999 = vmatpush1.bf16.msra.mxu0 0
    %4000 = vmatprep.subr.bf16.mxu0 0
    %4001 = vmatpush1.bf16.msra.mxu0 0
    %4002 = vmatprep.subr.bf16.mxu0 0
    %4003 = vmatpush1.bf16.msra.mxu0 0
    %4004 = vmatprep.subr.bf16.mxu0 0
    %4005 = vmatpush1.bf16.msra.mxu0 0
    %4006 = vmatprep.subr.bf16.mxu0 0
    %4007 = vmatpush1.bf16.msra.mxu0 0
    %4008 = vmatprep.subr.bf16.mxu0 0
    %4009 = vmatpush1.bf16.msra.mxu0 0
    %4010 = vmatprep.subr.bf16.mxu0 0
    %4011 = vmatpush1.bf16.msra.mxu0 0
    %4012 = vmatprep.subr.bf16.mxu0 0
    %4013 = vmatpush1.bf16.msra.mxu0 0
    %4014 = vmatprep.mubr.bf16.mxu0 0
    %4015 = vmatmul.mubr.bf16.gmra.mrb[0].mxu0 %v3694
    %v4016 = vpop.f32.mrb[0].mxu0
    %v4017 = vadd.f32 %v3976, %v4016
    %v4018 = vpop.f32.mrb[0].mxu0
    %v4019 = vadd.f32 %v3978, %v4018
    %v4020 = vpop.f32.mrb[0].mxu0
    %v4021 = vpop.f32.mrb[0].mxu0
    %4022 = vdwg.mxu0
    %4023 = vmatprep.subr.bf16.mxu0 %v1237
    %4024 = vmatpush1.bf16.msra.mxu0 %v1236
    %4025 = vmatprep.subr.bf16.mxu0 %v1249
    %4026 = vmatpush1.bf16.msra.mxu0 %v1248
    %4027 = vmatprep.subr.bf16.mxu0 %v1261
    %4028 = vmatpush1.bf16.msra.mxu0 %v1260
    %4029 = vmatprep.subr.bf16.mxu0 %v1273
    %4030 = vmatpush1.bf16.msra.mxu0 %v1272
    %4031 = vmatprep.subr.bf16.mxu0 %v1285
    %4032 = vmatpush1.bf16.msra.mxu0 %v1284
    %4033 = vmatprep.subr.bf16.mxu0 %v1297
    %4034 = vmatpush1.bf16.msra.mxu0 %v1296
    %4035 = vmatprep.subr.bf16.mxu0 %v1309
    %4036 = vmatpush1.bf16.msra.mxu0 %v1308
    %4037 = vmatprep.subr.bf16.mxu0 %v1321
    %4038 = vmatpush1.bf16.msra.mxu0 %v1320
    %4039 = vmatprep.subr.bf16.mxu0 %v1333
    %4040 = vmatpush1.bf16.msra.mxu0 %v1332
    %4041 = vmatprep.subr.bf16.mxu0 %v1345
    %4042 = vmatpush1.bf16.msra.mxu0 %v1344
    %4043 = vmatprep.subr.bf16.mxu0 %v1357
    %4044 = vmatpush1.bf16.msra.mxu0 %v1356
    %4045 = vmatprep.subr.bf16.mxu0 %v1369
    %4046 = vmatpush1.bf16.msra.mxu0 %v1368
    %4047 = vmatprep.subr.bf16.mxu0 %v1381
    %4048 = vmatpush1.bf16.msra.mxu0 %v1380
    %4049 = vmatprep.subr.bf16.mxu0 %v1393
    %4050 = vmatpush1.bf16.msra.mxu0 %v1392
    %4051 = vmatprep.subr.bf16.mxu0 %v1405
    %4052 = vmatpush1.bf16.msra.mxu0 %v1404
    %4053 = vmatprep.subr.bf16.mxu0 %v1417
    %4054 = vmatpush1.bf16.msra.mxu0 %v1416
    %4055 = vmatprep.mubr.bf16.mxu0 %v3693
    %4056 = vmatmul.mubr.bf16.gmra.mrb[0].mxu0 %v3692
    %v4057 = vpop.f32.mrb[0].mxu0
    %v4058 = vadd.f32 0.0, %v4057
    %v4059 = vpop.f32.mrb[0].mxu0
    %v4060 = vadd.f32 0.0, %v4059
    %v4061 = vpop.f32.mrb[0].mxu0
    %v4062 = vpop.f32.mrb[0].mxu0
    %4063 = vdwg.mxu0
    %4064 = vmatprep.subr.bf16.mxu0 %v1429
    %4065 = vmatpush1.bf16.msra.mxu0 %v1428
    %4066 = vmatprep.subr.bf16.mxu0 %v1441
    %4067 = vmatpush1.bf16.msra.mxu0 %v1440
    %4068 = vmatprep.subr.bf16.mxu0 %v1453
    %4069 = vmatpush1.bf16.msra.mxu0 %v1452
    %4070 = vmatprep.subr.bf16.mxu0 %v1465
    %4071 = vmatpush1.bf16.msra.mxu0 %v1464
    %4072 = vmatprep.subr.bf16.mxu0 %v1477
    %4073 = vmatpush1.bf16.msra.mxu0 %v1476
    %4074 = vmatprep.subr.bf16.mxu0 %v1489
    %4075 = vmatpush1.bf16.msra.mxu0 %v1488
    %4076 = vmatprep.subr.bf16.mxu0 %v1501
    %4077 = vmatpush1.bf16.msra.mxu0 %v1500
    %4078 = vmatprep.subr.bf16.mxu0 %v1513
    %4079 = vmatpush1.bf16.msra.mxu0 %v1512
    %4080 = vmatprep.subr.bf16.mxu0 0
    %4081 = vmatpush1.bf16.msra.mxu0 0
    %4082 = vmatprep.subr.bf16.mxu0 0
    %4083 = vmatpush1.bf16.msra.mxu0 0
    %4084 = vmatprep.subr.bf16.mxu0 0
    %4085 = vmatpush1.bf16.msra.mxu0 0
    %4086 = vmatprep.subr.bf16.mxu0 0
    %4087 = vmatpush1.bf16.msra.mxu0 0
    %4088 = vmatprep.subr.bf16.mxu0 0
    %4089 = vmatpush1.bf16.msra.mxu0 0
    %4090 = vmatprep.subr.bf16.mxu0 0
    %4091 = vmatpush1.bf16.msra.mxu0 0
    %4092 = vmatprep.subr.bf16.mxu0 0
    %4093 = vmatpush1.bf16.msra.mxu0 0
    %4094 = vmatprep.subr.bf16.mxu0 0
    %4095 = vmatpush1.bf16.msra.mxu0 0
    %4096 = vmatprep.mubr.bf16.mxu0 0
    %4097 = vmatmul.mubr.bf16.gmra.mrb[0].mxu0 %v3694
    %v4098 = vpop.f32.mrb[0].mxu0
    %v4099 = vadd.f32 %v4058, %v4098
    %v4100 = vpop.f32.mrb[0].mxu0
    %v4101 = vadd.f32 %v4060, %v4100
    %v4102 = vpop.f32.mrb[0].mxu0
    %v4103 = vpop.f32.mrb[0].mxu0
    %4104 = vdwg.mxu0
    %4105 = vmatprep.subr.bf16.mxu0 %v1239
    %4106 = vmatpush1.bf16.msra.mxu0 %v1238
    %4107 = vmatprep.subr.bf16.mxu0 %v1251
    %4108 = vmatpush1.bf16.msra.mxu0 %v1250
    %4109 = vmatprep.subr.bf16.mxu0 %v1263
    %4110 = vmatpush1.bf16.msra.mxu0 %v1262
    %4111 = vmatprep.subr.bf16.mxu0 %v1275
    %4112 = vmatpush1.bf16.msra.mxu0 %v1274
    %4113 = vmatprep.subr.bf16.mxu0 %v1287
    %4114 = vmatpush1.bf16.msra.mxu0 %v1286
    %4115 = vmatprep.subr.bf16.mxu0 %v1299
    %4116 = vmatpush1.bf16.msra.mxu0 %v1298
    %4117 = vmatprep.subr.bf16.mxu0 %v1311
    %4118 = vmatpush1.bf16.msra.mxu0 %v1310
    %4119 = vmatprep.subr.bf16.mxu0 %v1323
    %4120 = vmatpush1.bf16.msra.mxu0 %v1322
    %4121 = vmatprep.subr.bf16.mxu0 %v1335
    %4122 = vmatpush1.bf16.msra.mxu0 %v1334
    %4123 = vmatprep.subr.bf16.mxu0 %v1347
    %4124 = vmatpush1.bf16.msra.mxu0 %v1346
    %4125 = vmatprep.subr.bf16.mxu0 %v1359
    %4126 = vmatpush1.bf16.msra.mxu0 %v1358
    %4127 = vmatprep.subr.bf16.mxu0 %v1371
    %4128 = vmatpush1.bf16.msra.mxu0 %v1370
    %4129 = vmatprep.subr.bf16.mxu0 %v1383
    %4130 = vmatpush1.bf16.msra.mxu0 %v1382
    %4131 = vmatprep.subr.bf16.mxu0 %v1395
    %4132 = vmatpush1.bf16.msra.mxu0 %v1394
    %4133 = vmatprep.subr.bf16.mxu0 %v1407
    %4134 = vmatpush1.bf16.msra.mxu0 %v1406
    %4135 = vmatprep.subr.bf16.mxu0 %v1419
    %4136 = vmatpush1.bf16.msra.mxu0 %v1418
    %4137 = vmatprep.mubr.bf16.mxu0 %v3693
    %4138 = vmatmul.mubr.bf16.gmra.mrb[0].mxu0 %v3692
    %v4139 = vpop.f32.mrb[0].mxu0
    %v4140 = vadd.f32 0.0, %v4139
    %v4141 = vpop.f32.mrb[0].mxu0
    %v4142 = vadd.f32 0.0, %v4141
    %v4143 = vpop.f32.mrb[0].mxu0
    %v4144 = vpop.f32.mrb[0].mxu0
    %4145 = vdwg.mxu0
    %4146 = vmatprep.subr.bf16.mxu0 %v1431
    %4147 = vmatpush1.bf16.msra.mxu0 %v1430
    %4148 = vmatprep.subr.bf16.mxu0 %v1443
    %4149 = vmatpush1.bf16.msra.mxu0 %v1442
    %4150 = vmatprep.subr.bf16.mxu0 %v1455
    %4151 = vmatpush1.bf16.msra.mxu0 %v1454
    %4152 = vmatprep.subr.bf16.mxu0 %v1467
    %4153 = vmatpush1.bf16.msra.mxu0 %v1466
    %4154 = vmatprep.subr.bf16.mxu0 %v1479
    %4155 = vmatpush1.bf16.msra.mxu0 %v1478
    %4156 = vmatprep.subr.bf16.mxu0 %v1491
    %4157 = vmatpush1.bf16.msra.mxu0 %v1490
    %4158 = vmatprep.subr.bf16.mxu0 %v1503
    %4159 = vmatpush1.bf16.msra.mxu0 %v1502
    %4160 = vmatprep.subr.bf16.mxu0 %v1515
    %4161 = vmatpush1.bf16.msra.mxu0 %v1514
    %4162 = vmatprep.subr.bf16.mxu0 0
    %4163 = vmatpush1.bf16.msra.mxu0 0
    %4164 = vmatprep.subr.bf16.mxu0 0
    %4165 = vmatpush1.bf16.msra.mxu0 0
    %4166 = vmatprep.subr.bf16.mxu0 0
    %4167 = vmatpush1.bf16.msra.mxu0 0
    %4168 = vmatprep.subr.bf16.mxu0 0
    %4169 = vmatpush1.bf16.msra.mxu0 0
    %4170 = vmatprep.subr.bf16.mxu0 0
    %4171 = vmatpush1.bf16.msra.mxu0 0
    %4172 = vmatprep.subr.bf16.mxu0 0
    %4173 = vmatpush1.bf16.msra.mxu0 0
    %4174 = vmatprep.subr.bf16.mxu0 0
    %4175 = vmatpush1.bf16.msra.mxu0 0
    %4176 = vmatprep.subr.bf16.mxu0 0
    %4177 = vmatpush1.bf16.msra.mxu0 0
    %4178 = vmatprep.mubr.bf16.mxu0 0
    %4179 = vmatmul.mubr.bf16.gmra.mrb[0].mxu0 %v3694
    %v4180 = vpop.f32.mrb[0].mxu0
    %v4181 = vadd.f32 %v4140, %v4180
    %v4182 = vpop.f32.mrb[0].mxu0
    %v4183 = vadd.f32 %v4142, %v4182
    %v4184 = vpop.f32.mrb[0].mxu0
    %v4185 = vpop.f32.mrb[0].mxu0
    %4186 = vdwg.mxu0
    %v4188 = vsel %vm2416, %v3691, 0
    %4190 = vmatprep.subr.bf16.mxu0 %v2369
    %4191 = vmatpush1.bf16.msra.mxu0 %v2368
    %4192 = vmatprep.subr.bf16.mxu0 %v2381
    %4193 = vmatpush1.bf16.msra.mxu0 %v2380
    %4194 = vmatprep.subr.bf16.mxu0 0
    %4195 = vmatpush1.bf16.msra.mxu0 0
    %4196 = vmatprep.subr.bf16.mxu0 0
    %4197 = vmatpush1.bf16.msra.mxu0 0
    %4198 = vmatprep.subr.bf16.mxu0 0
    %4199 = vmatpush1.bf16.msra.mxu0 0
    %4200 = vmatprep.subr.bf16.mxu0 0
    %4201 = vmatpush1.bf16.msra.mxu0 0
    %4202 = vmatprep.subr.bf16.mxu0 0
    %4203 = vmatpush1.bf16.msra.mxu0 0
    %4204 = vmatprep.subr.bf16.mxu0 0
    %4205 = vmatpush1.bf16.msra.mxu0 0
    %4206 = vmatprep.subr.bf16.mxu0 0
    %4207 = vmatpush1.bf16.msra.mxu0 0
    %4208 = vmatprep.subr.bf16.mxu0 0
    %4209 = vmatpush1.bf16.msra.mxu0 0
    %4210 = vmatprep.subr.bf16.mxu0 0
    %4211 = vmatpush1.bf16.msra.mxu0 0
    %4212 = vmatprep.subr.bf16.mxu0 0
    %4213 = vmatpush1.bf16.msra.mxu0 0
    %4214 = vmatprep.subr.bf16.mxu0 0
    %4215 = vmatpush1.bf16.msra.mxu0 0
    %4216 = vmatprep.subr.bf16.mxu0 0
    %4217 = vmatpush1.bf16.msra.mxu0 0
    %4218 = vmatprep.subr.bf16.mxu0 0
    %4219 = vmatpush1.bf16.msra.mxu0 0
    %4220 = vmatprep.subr.bf16.mxu0 0
    %4221 = vmatpush1.bf16.msra.mxu0 0
    %4222 = vmatprep.mubr.bf16.mxu0 0
    %4223 = vmatmul.mubr.bf16.gmra.mrb[0].mxu0 %v4188
    %v4224 = vpop.f32.mrb[0].mxu0
    %v4225 = vadd.f32 %v3771, %v4224
    %v4226 = vpop.f32.mrb[0].mxu0
    %v4227 = vadd.f32 %v3773, %v4226
    %v4228 = vpop.f32.mrb[0].mxu0
    %v4229 = vpop.f32.mrb[0].mxu0
    %4230 = vdwg.mxu0
    %4231 = vmatprep.subr.bf16.mxu0 %v2371
    %4232 = vmatpush1.bf16.msra.mxu0 %v2370
    %4233 = vmatprep.subr.bf16.mxu0 %v2383
    %4234 = vmatpush1.bf16.msra.mxu0 %v2382
    %4235 = vmatprep.subr.bf16.mxu0 0
    %4236 = vmatpush1.bf16.msra.mxu0 0
    %4237 = vmatprep.subr.bf16.mxu0 0
    %4238 = vmatpush1.bf16.msra.mxu0 0
    %4239 = vmatprep.subr.bf16.mxu0 0
    %4240 = vmatpush1.bf16.msra.mxu0 0
    %4241 = vmatprep.subr.bf16.mxu0 0
    %4242 = vmatpush1.bf16.msra.mxu0 0
    %4243 = vmatprep.subr.bf16.mxu0 0
    %4244 = vmatpush1.bf16.msra.mxu0 0
    %4245 = vmatprep.subr.bf16.mxu0 0
    %4246 = vmatpush1.bf16.msra.mxu0 0
    %4247 = vmatprep.subr.bf16.mxu0 0
    %4248 = vmatpush1.bf16.msra.mxu0 0
    %4249 = vmatprep.subr.bf16.mxu0 0
    %4250 = vmatpush1.bf16.msra.mxu0 0
    %4251 = vmatprep.subr.bf16.mxu0 0
    %4252 = vmatpush1.bf16.msra.mxu0 0
    %4253 = vmatprep.subr.bf16.mxu0 0
    %4254 = vmatpush1.bf16.msra.mxu0 0
    %4255 = vmatprep.subr.bf16.mxu0 0
    %4256 = vmatpush1.bf16.msra.mxu0 0
    %4257 = vmatprep.subr.bf16.mxu0 0
    %4258 = vmatpush1.bf16.msra.mxu0 0
    %4259 = vmatprep.subr.bf16.mxu0 0
    %4260 = vmatpush1.bf16.msra.mxu0 0
    %4261 = vmatprep.subr.bf16.mxu0 0
    %4262 = vmatpush1.bf16.msra.mxu0 0
    %4263 = vmatprep.mubr.bf16.mxu0 0
    %4264 = vmatmul.mubr.bf16.gmra.mrb[0].mxu0 %v4188
    %v4265 = vpop.f32.mrb[0].mxu0
    %v4266 = vadd.f32 %v3853, %v4265
    %v4267 = vpop.f32.mrb[0].mxu0
    %v4268 = vadd.f32 %v3855, %v4267
    %v4269 = vpop.f32.mrb[0].mxu0
    %v4270 = vpop.f32.mrb[0].mxu0
    %4271 = vdwg.mxu0
    %4272 = vmatprep.subr.bf16.mxu0 %v2373
    %4273 = vmatpush1.bf16.msra.mxu0 %v2372
    %4274 = vmatprep.subr.bf16.mxu0 %v2385
    %4275 = vmatpush1.bf16.msra.mxu0 %v2384
    %4276 = vmatprep.subr.bf16.mxu0 0
    %4277 = vmatpush1.bf16.msra.mxu0 0
    %4278 = vmatprep.subr.bf16.mxu0 0
    %4279 = vmatpush1.bf16.msra.mxu0 0
    %4280 = vmatprep.subr.bf16.mxu0 0
    %4281 = vmatpush1.bf16.msra.mxu0 0
    %4282 = vmatprep.subr.bf16.mxu0 0
    %4283 = vmatpush1.bf16.msra.mxu0 0
    %4284 = vmatprep.subr.bf16.mxu0 0
    %4285 = vmatpush1.bf16.msra.mxu0 0
    %4286 = vmatprep.subr.bf16.mxu0 0
    %4287 = vmatpush1.bf16.msra.mxu0 0
    %4288 = vmatprep.subr.bf16.mxu0 0
    %4289 = vmatpush1.bf16.msra.mxu0 0
    %4290 = vmatprep.subr.bf16.mxu0 0
    %4291 = vmatpush1.bf16.msra.mxu0 0
    %4292 = vmatprep.subr.bf16.mxu0 0
    %4293 = vmatpush1.bf16.msra.mxu0 0
    %4294 = vmatprep.subr.bf16.mxu0 0
    %4295 = vmatpush1.bf16.msra.mxu0 0
    %4296 = vmatprep.subr.bf16.mxu0 0
    %4297 = vmatpush1.bf16.msra.mxu0 0
    %4298 = vmatprep.subr.bf16.mxu0 0
    %4299 = vmatpush1.bf16.msra.mxu0 0
    %4300 = vmatprep.subr.bf16.mxu0 0
    %4301 = vmatpush1.bf16.msra.mxu0 0
    %4302 = vmatprep.subr.bf16.mxu0 0
    %4303 = vmatpush1.bf16.msra.mxu0 0
    %4304 = vmatprep.mubr.bf16.mxu0 0
    %4305 = vmatmul.mubr.bf16.gmra.mrb[0].mxu0 %v4188
    %v4306 = vpop.f32.mrb[0].mxu0
    %v4307 = vadd.f32 %v3935, %v4306
    %v4308 = vpop.f32.mrb[0].mxu0
    %v4309 = vadd.f32 %v3937, %v4308
    %v4310 = vpop.f32.mrb[0].mxu0
    %v4311 = vpop.f32.mrb[0].mxu0
    %4312 = vdwg.mxu0
    %4313 = vmatprep.subr.bf16.mxu0 %v2375
    %4314 = vmatpush1.bf16.msra.mxu0 %v2374
    %4315 = vmatprep.subr.bf16.mxu0 %v2387
    %4316 = vmatpush1.bf16.msra.mxu0 %v2386
    %4317 = vmatprep.subr.bf16.mxu0 0
    %4318 = vmatpush1.bf16.msra.mxu0 0
    %4319 = vmatprep.subr.bf16.mxu0 0
    %4320 = vmatpush1.bf16.msra.mxu0 0
    %4321 = vmatprep.subr.bf16.mxu0 0
    %4322 = vmatpush1.bf16.msra.mxu0 0
    %4323 = vmatprep.subr.bf16.mxu0 0
    %4324 = vmatpush1.bf16.msra.mxu0 0
    %4325 = vmatprep.subr.bf16.mxu0 0
    %4326 = vmatpush1.bf16.msra.mxu0 0
    %4327 = vmatprep.subr.bf16.mxu0 0
    %4328 = vmatpush1.bf16.msra.mxu0 0
    %4329 = vmatprep.subr.bf16.mxu0 0
    %4330 = vmatpush1.bf16.msra.mxu0 0
    %4331 = vmatprep.subr.bf16.mxu0 0
    %4332 = vmatpush1.bf16.msra.mxu0 0
    %4333 = vmatprep.subr.bf16.mxu0 0
    %4334 = vmatpush1.bf16.msra.mxu0 0
    %4335 = vmatprep.subr.bf16.mxu0 0
    %4336 = vmatpush1.bf16.msra.mxu0 0
    %4337 = vmatprep.subr.bf16.mxu0 0
    %4338 = vmatpush1.bf16.msra.mxu0 0
    %4339 = vmatprep.subr.bf16.mxu0 0
    %4340 = vmatpush1.bf16.msra.mxu0 0
    %4341 = vmatprep.subr.bf16.mxu0 0
    %4342 = vmatpush1.bf16.msra.mxu0 0
    %4343 = vmatprep.subr.bf16.mxu0 0
    %4344 = vmatpush1.bf16.msra.mxu0 0
    %4345 = vmatprep.mubr.bf16.mxu0 0
    %4346 = vmatmul.mubr.bf16.gmra.mrb[0].mxu0 %v4188
    %v4347 = vpop.f32.mrb[0].mxu0
    %v4348 = vadd.f32 %v4017, %v4347
    %v4349 = vpop.f32.mrb[0].mxu0
    %v4350 = vadd.f32 %v4019, %v4349
    %v4351 = vpop.f32.mrb[0].mxu0
    %v4352 = vpop.f32.mrb[0].mxu0
    %4353 = vdwg.mxu0
    %4354 = vmatprep.subr.bf16.mxu0 %v2377
    %4355 = vmatpush1.bf16.msra.mxu0 %v2376
    %4356 = vmatprep.subr.bf16.mxu0 %v2389
    %4357 = vmatpush1.bf16.msra.mxu0 %v2388
    %4358 = vmatprep.subr.bf16.mxu0 0
    %4359 = vmatpush1.bf16.msra.mxu0 0
    %4360 = vmatprep.subr.bf16.mxu0 0
    %4361 = vmatpush1.bf16.msra.mxu0 0
    %4362 = vmatprep.subr.bf16.mxu0 0
    %4363 = vmatpush1.bf16.msra.mxu0 0
    %4364 = vmatprep.subr.bf16.mxu0 0
    %4365 = vmatpush1.bf16.msra.mxu0 0
    %4366 = vmatprep.subr.bf16.mxu0 0
    %4367 = vmatpush1.bf16.msra.mxu0 0
    %4368 = vmatprep.subr.bf16.mxu0 0
    %4369 = vmatpush1.bf16.msra.mxu0 0
    %4370 = vmatprep.subr.bf16.mxu0 0
    %4371 = vmatpush1.bf16.msra.mxu0 0
    %4372 = vmatprep.subr.bf16.mxu0 0
    %4373 = vmatpush1.bf16.msra.mxu0 0
    %4374 = vmatprep.subr.bf16.mxu0 0
    %4375 = vmatpush1.bf16.msra.mxu0 0
    %4376 = vmatprep.subr.bf16.mxu0 0
    %4377 = vmatpush1.bf16.msra.mxu0 0
    %4378 = vmatprep.subr.bf16.mxu0 0
    %4379 = vmatpush1.bf16.msra.mxu0 0
    %4380 = vmatprep.subr.bf16.mxu0 0
    %4381 = vmatpush1.bf16.msra.mxu0 0
    %4382 = vmatprep.subr.bf16.mxu0 0
    %4383 = vmatpush1.bf16.msra.mxu0 0
    %4384 = vmatprep.subr.bf16.mxu0 0
    %4385 = vmatpush1.bf16.msra.mxu0 0
    %4386 = vmatprep.mubr.bf16.mxu0 0
    %4387 = vmatmul.mubr.bf16.gmra.mrb[0].mxu0 %v4188
    %v4388 = vpop.f32.mrb[0].mxu0
    %v4389 = vadd.f32 %v4099, %v4388
    %v4390 = vpop.f32.mrb[0].mxu0
    %v4391 = vadd.f32 %v4101, %v4390
    %v4392 = vpop.f32.mrb[0].mxu0
    %v4393 = vpop.f32.mrb[0].mxu0
    %4394 = vdwg.mxu0
    %4395 = vmatprep.subr.bf16.mxu0 %v2379
    %4396 = vmatpush1.bf16.msra.mxu0 %v2378
    %4397 = vmatprep.subr.bf16.mxu0 %v2391
    %4398 = vmatpush1.bf16.msra.mxu0 %v2390
    %4399 = vmatprep.subr.bf16.mxu0 0
    %4400 = vmatpush1.bf16.msra.mxu0 0
    %4401 = vmatprep.subr.bf16.mxu0 0
    %4402 = vmatpush1.bf16.msra.mxu0 0
    %4403 = vmatprep.subr.bf16.mxu0 0
    %4404 = vmatpush1.bf16.msra.mxu0 0
    %4405 = vmatprep.subr.bf16.mxu0 0
    %4406 = vmatpush1.bf16.msra.mxu0 0
    %4407 = vmatprep.subr.bf16.mxu0 0
    %4408 = vmatpush1.bf16.msra.mxu0 0
    %4409 = vmatprep.subr.bf16.mxu0 0
    %4410 = vmatpush1.bf16.msra.mxu0 0
    %4411 = vmatprep.subr.bf16.mxu0 0
    %4412 = vmatpush1.bf16.msra.mxu0 0
    %4413 = vmatprep.subr.bf16.mxu0 0
    %4414 = vmatpush1.bf16.msra.mxu0 0
    %4415 = vmatprep.subr.bf16.mxu0 0
    %4416 = vmatpush1.bf16.msra.mxu0 0
    %4417 = vmatprep.subr.bf16.mxu0 0
    %4418 = vmatpush1.bf16.msra.mxu0 0
    %4419 = vmatprep.subr.bf16.mxu0 0
    %4420 = vmatpush1.bf16.msra.mxu0 0
    %4421 = vmatprep.subr.bf16.mxu0 0
    %4422 = vmatpush1.bf16.msra.mxu0 0
    %4423 = vmatprep.subr.bf16.mxu0 0
    %4424 = vmatpush1.bf16.msra.mxu0 0
    %4425 = vmatprep.subr.bf16.mxu0 0
    %4426 = vmatpush1.bf16.msra.mxu0 0
    %4427 = vmatprep.mubr.bf16.mxu0 0
    %4428 = vmatmul.mubr.bf16.gmra.mrb[0].mxu0 %v4188
    %v4429 = vpop.f32.mrb[0].mxu0
    %v4430 = vadd.f32 %v4181, %v4429
    %v4431 = vpop.f32.mrb[0].mxu0
    %v4432 = vadd.f32 %v4183, %v4431
    %v4433 = vpop.f32.mrb[0].mxu0
    %v4434 = vpop.f32.mrb[0].mxu0
    %4435 = vdwg.mxu0
    %v4436 = vadd.f32 %v4225, %v2671
    %v4437 = vadd.f32 %v4227, %v2675
    %v4438 = vadd.f32 %v4266, %v2679
    %v4439 = vadd.f32 %v4268, %v2683
    %v4440 = vadd.f32 %v4307, %v2687
    %v4441 = vadd.f32 %v4309, %v2691
    %v4442 = vadd.f32 %v4348, %v2695
    %v4443 = vadd.f32 %v4350, %v2699
    %v4444 = vadd.f32 %v4389, %v2703
    %v4445 = vadd.f32 %v4391, %v2707
    %v4446 = vadd.f32 %v4430, %v2711
    %v4447 = vadd.f32 %v4432, %v2715
    %v4448 = vmul.f32 %v4436, 0.5
    %v4449 = vmul.f32 %v4437, 0.5
    %v4450 = vmul.f32 %v4438, 0.5
    %v4451 = vtanh.pop %v4448
    %v4452 = vtanh.pop %v4449
    %v4453 = vtanh.pop %v4450
    %v4454 = vmul.f32 %v4451, 0.5
    %v4455 = vmul.f32 %v4452, 0.5
    %v4456 = vmul.f32 %v4453, 0.5
    %v4457 = vadd.f32 %v4454, 0.5
    %v4458 = vadd.f32 %v4455, 0.5
    %v4459 = vadd.f32 %v4456, 0.5
    %v4460 = vmul.f32 %v4439, 0.5
    %v4461 = vmul.f32 %v4440, 0.5
    %v4462 = vmul.f32 %v4441, 0.5
    %v4463 = vtanh.pop %v4460
    %v4464 = vtanh.pop %v4461
    %v4465 = vtanh.pop %v4462
    %v4466 = vmul.f32 %v4463, 0.5
    %v4467 = vmul.f32 %v4464, 0.5
    %v4468 = vmul.f32 %v4465, 0.5
    %v4469 = vadd.f32 %v4466, 0.5
    %v4470 = vadd.f32 %v4467, 0.5
    %v4471 = vadd.f32 %v4468, 0.5
    %v4472 = vtanh.pop %v4442
    %v4473 = vtanh.pop %v4443
    %v4474 = vtanh.pop %v4444
    %v4475 = vmul.f32 %v4445, 0.5
    %v4476 = vmul.f32 %v4446, 0.5
    %v4477 = vmul.f32 %v4447, 0.5
    %v4478 = vtanh.pop %v4475
    %v4479 = vtanh.pop %v4476
    %v4480 = vtanh.pop %v4477
    %v4481 = vmul.f32 %v4478, 0.5
    %v4482 = vmul.f32 %v4479, 0.5
    %v4483 = vmul.f32 %v4480, 0.5
    %v4484 = vadd.f32 %v4481, 0.5
    %v4485 = vadd.f32 %v4482, 0.5
    %v4486 = vadd.f32 %v4483, 0.5
    %v4487 = vmul.f32 %v4469, %v3639
    %v4488 = vmul.f32 %v4470, %v3640
    %v4489 = vmul.f32 %v4471, %v3641
    %v4490 = vmul.f32 %v4457, %v4472
    %v4491 = vmul.f32 %v4458, %v4473
    %v4492 = vmul.f32 %v4459, %v4474
    %v4493 = vadd.f32 %v4487, %v4490
    %v4494 = vadd.f32 %v4488, %v4491
    %v4495 = vadd.f32 %v4489, %v4492
    %v4496 = vtanh.pop %v4493
    %v4497 = vtanh.pop %v4494
    %v4498 = vtanh.pop %v4495
    %v4499 = vmul.f32 %v4484, %v4496
    %v4500 = vmul.f32 %v4485, %v4497
    %v4501 = vmul.f32 %v4486, %v4498
    %v4502 = vtanh.pop %v4499
    %v4503 = vtanh.pop %v4500
    %v4504 = vtanh.pop %v4501
    %v4505 = vmax.f32 %v4502, 0.0
    %v4506 = vmax.f32 %v4503, 0.0
    %v4507 = vmax.f32 %v4504, 0.0
    %s4508 = sld [smem:[#allocation2 + $0x6]]
    %v4509 = vstv %s4508
    %v4510 = vmul.f32 %v4505, %v4509
    %v4511 = vadd.f32 %v3681, %v4510
    %s4512 = sld [smem:[#allocation2 + $0x7]]
    %v4513 = vstv %s4512
    %v4514 = vmul.f32 %v4505, %v4513
    %v4515 = vadd.f32 %v3685, %v4514
    %s4516 = sld [smem:[#allocation2 + $0x8]]
    %v4517 = vstv %s4516
    %v4518 = vmul.f32 %v4505, %v4517
    %v4519 = vadd.f32 %v3689, %v4518
    %s4520 = sld [smem:[#allocation2 + $0x12]]
    %v4521 = vstv %s4520
    %v4522 = vmul.f32 %v4506, %v4521
    %v4523 = vadd.f32 %v4511, %v4522
    %s4524 = sld [smem:[#allocation2 + $0x13]]
    %v4525 = vstv %s4524
    %v4526 = vmul.f32 %v4506, %v4525
    %v4527 = vadd.f32 %v4515, %v4526
    %s4528 = sld [smem:[#allocation2 + $0x14]]
    %v4529 = vstv %s4528
    %v4530 = vmul.f32 %v4506, %v4529
    %v4531 = vadd.f32 %v4519, %v4530
    %s4532 = sld [smem:[#allocation2 + $0x1e]]
    %v4533 = vstv %s4532
    %v4534 = vmul.f32 %v4507, %v4533
    %v4535 = vadd.f32 %v4523, %v4534
    %s4536 = sld [smem:[#allocation2 + $0x1f]]
    %v4537 = vstv %s4536
    %v4538 = vmul.f32 %v4507, %v4537
    %v4539 = vadd.f32 %v4527, %v4538
    %s4540 = sld [smem:[#allocation2 + $0x20]]
    %v4541 = vstv %s4540
    %v4542 = vmul.f32 %v4507, %v4541
    %v4543 = vadd.f32 %v4531, %v4542
    %s4544 = scalar_lea.vmem %s0, 12
    %v4545 = vld [vmem:[%s4544] sm:$0xf]
    %v4546 = vpack.c.bf16 %v4502, %v4502
    %v4547 = vpack.c.bf16 %v4503, %v4503
    %v4548 = vpack.c.bf16 %v4504, %v4504
    %4549 = vmatprep.subr.bf16.mxu0 %v1229
    %4550 = vmatpush1.bf16.msra.mxu0 %v1228
    %4551 = vmatprep.subr.bf16.mxu0 %v1241
    %4552 = vmatpush1.bf16.msra.mxu0 %v1240
    %4553 = vmatprep.subr.bf16.mxu0 %v1253
    %4554 = vmatpush1.bf16.msra.mxu0 %v1252
    %4555 = vmatprep.subr.bf16.mxu0 %v1265
    %4556 = vmatpush1.bf16.msra.mxu0 %v1264
    %4557 = vmatprep.subr.bf16.mxu0 %v1277
    %4558 = vmatpush1.bf16.msra.mxu0 %v1276
    %4559 = vmatprep.subr.bf16.mxu0 %v1289
    %4560 = vmatpush1.bf16.msra.mxu0 %v1288
    %4561 = vmatprep.subr.bf16.mxu0 %v1301
    %4562 = vmatpush1.bf16.msra.mxu0 %v1300
    %4563 = vmatprep.subr.bf16.mxu0 %v1313
    %4564 = vmatpush1.bf16.msra.mxu0 %v1312
    %4565 = vmatprep.subr.bf16.mxu0 %v1325
    %4566 = vmatpush1.bf16.msra.mxu0 %v1324
    %4567 = vmatprep.subr.bf16.mxu0 %v1337
    %4568 = vmatpush1.bf16.msra.mxu0 %v1336
    %4569 = vmatprep.subr.bf16.mxu0 %v1349
    %4570 = vmatpush1.bf16.msra.mxu0 %v1348
    %4571 = vmatprep.subr.bf16.mxu0 %v1361
    %4572 = vmatpush1.bf16.msra.mxu0 %v1360
    %4573 = vmatprep.subr.bf16.mxu0 %v1373
    %4574 = vmatpush1.bf16.msra.mxu0 %v1372
    %4575 = vmatprep.subr.bf16.mxu0 %v1385
    %4576 = vmatpush1.bf16.msra.mxu0 %v1384
    %4577 = vmatprep.subr.bf16.mxu0 %v1397
    %4578 = vmatpush1.bf16.msra.mxu0 %v1396
    %4579 = vmatprep.subr.bf16.mxu0 %v1409
    %4580 = vmatpush1.bf16.msra.mxu0 %v1408
    %4581 = vmatprep.mubr.bf16.mxu0 %v4547
    %4582 = vmatmul.mubr.bf16.gmra.mrb[0].mxu0 %v4546
    %v4583 = vpop.f32.mrb[0].mxu0
    %v4584 = vadd.f32 0.0, %v4583
    %v4585 = vpop.f32.mrb[0].mxu0
    %v4586 = vadd.f32 0.0, %v4585
    %v4587 = vpop.f32.mrb[0].mxu0
    %v4588 = vpop.f32.mrb[0].mxu0
    %4589 = vdwg.mxu0
    %4590 = vmatprep.subr.bf16.mxu0 %v1421
    %4591 = vmatpush1.bf16.msra.mxu0 %v1420
    %4592 = vmatprep.subr.bf16.mxu0 %v1433
    %4593 = vmatpush1.bf16.msra.mxu0 %v1432
    %4594 = vmatprep.subr.bf16.mxu0 %v1445
    %4595 = vmatpush1.bf16.msra.mxu0 %v1444
    %4596 = vmatprep.subr.bf16.mxu0 %v1457
    %4597 = vmatpush1.bf16.msra.mxu0 %v1456
    %4598 = vmatprep.subr.bf16.mxu0 %v1469
    %4599 = vmatpush1.bf16.msra.mxu0 %v1468
    %4600 = vmatprep.subr.bf16.mxu0 %v1481
    %4601 = vmatpush1.bf16.msra.mxu0 %v1480
    %4602 = vmatprep.subr.bf16.mxu0 %v1493
    %4603 = vmatpush1.bf16.msra.mxu0 %v1492
    %4604 = vmatprep.subr.bf16.mxu0 %v1505
    %4605 = vmatpush1.bf16.msra.mxu0 %v1504
    %4606 = vmatprep.subr.bf16.mxu0 0
    %4607 = vmatpush1.bf16.msra.mxu0 0
    %4608 = vmatprep.subr.bf16.mxu0 0
    %4609 = vmatpush1.bf16.msra.mxu0 0
    %4610 = vmatprep.subr.bf16.mxu0 0
    %4611 = vmatpush1.bf16.msra.mxu0 0
    %4612 = vmatprep.subr.bf16.mxu0 0
    %4613 = vmatpush1.bf16.msra.mxu0 0
    %4614 = vmatprep.subr.bf16.mxu0 0
    %4615 = vmatpush1.bf16.msra.mxu0 0
    %4616 = vmatprep.subr.bf16.mxu0 0
    %4617 = vmatpush1.bf16.msra.mxu0 0
    %4618 = vmatprep.subr.bf16.mxu0 0
    %4619 = vmatpush1.bf16.msra.mxu0 0
    %4620 = vmatprep.subr.bf16.mxu0 0
    %4621 = vmatpush1.bf16.msra.mxu0 0
    %4622 = vmatprep.mubr.bf16.mxu0 0
    %4623 = vmatmul.mubr.bf16.gmra.mrb[0].mxu0 %v4548
    %v4624 = vpop.f32.mrb[0].mxu0
    %v4625 = vadd.f32 %v4584, %v4624
    %v4626 = vpop.f32.mrb[0].mxu0
    %v4627 = vadd.f32 %v4586, %v4626
    %v4628 = vpop.f32.mrb[0].mxu0
    %v4629 = vpop.f32.mrb[0].mxu0
    %4630 = vdwg.mxu0
    %4631 = vmatprep.subr.bf16.mxu0 %v1231
    %4632 = vmatpush1.bf16.msra.mxu0 %v1230
    %4633 = vmatprep.subr.bf16.mxu0 %v1243
    %4634 = vmatpush1.bf16.msra.mxu0 %v1242
    %4635 = vmatprep.subr.bf16.mxu0 %v1255
    %4636 = vmatpush1.bf16.msra.mxu0 %v1254
    %4637 = vmatprep.subr.bf16.mxu0 %v1267
    %4638 = vmatpush1.bf16.msra.mxu0 %v1266
    %4639 = vmatprep.subr.bf16.mxu0 %v1279
    %4640 = vmatpush1.bf16.msra.mxu0 %v1278
    %4641 = vmatprep.subr.bf16.mxu0 %v1291
    %4642 = vmatpush1.bf16.msra.mxu0 %v1290
    %4643 = vmatprep.subr.bf16.mxu0 %v1303
    %4644 = vmatpush1.bf16.msra.mxu0 %v1302
    %4645 = vmatprep.subr.bf16.mxu0 %v1315
    %4646 = vmatpush1.bf16.msra.mxu0 %v1314
    %4647 = vmatprep.subr.bf16.mxu0 %v1327
    %4648 = vmatpush1.bf16.msra.mxu0 %v1326
    %4649 = vmatprep.subr.bf16.mxu0 %v1339
    %4650 = vmatpush1.bf16.msra.mxu0 %v1338
    %4651 = vmatprep.subr.bf16.mxu0 %v1351
    %4652 = vmatpush1.bf16.msra.mxu0 %v1350
    %4653 = vmatprep.subr.bf16.mxu0 %v1363
    %4654 = vmatpush1.bf16.msra.mxu0 %v1362
    %4655 = vmatprep.subr.bf16.mxu0 %v1375
    %4656 = vmatpush1.bf16.msra.mxu0 %v1374
    %4657 = vmatprep.subr.bf16.mxu0 %v1387
    %4658 = vmatpush1.bf16.msra.mxu0 %v1386
    %4659 = vmatprep.subr.bf16.mxu0 %v1399
    %4660 = vmatpush1.bf16.msra.mxu0 %v1398
    %4661 = vmatprep.subr.bf16.mxu0 %v1411
    %4662 = vmatpush1.bf16.msra.mxu0 %v1410
    %4663 = vmatprep.mubr.bf16.mxu0 %v4547
    %4664 = vmatmul.mubr.bf16.gmra.mrb[0].mxu0 %v4546
    %v4665 = vpop.f32.mrb[0].mxu0
    %v4666 = vadd.f32 0.0, %v4665
    %v4667 = vpop.f32.mrb[0].mxu0
    %v4668 = vadd.f32 0.0, %v4667
    %v4669 = vpop.f32.mrb[0].mxu0
    %v4670 = vpop.f32.mrb[0].mxu0
    %4671 = vdwg.mxu0
    %4672 = vmatprep.subr.bf16.mxu0 %v1423
    %4673 = vmatpush1.bf16.msra.mxu0 %v1422
    %4674 = vmatprep.subr.bf16.mxu0 %v1435
    %4675 = vmatpush1.bf16.msra.mxu0 %v1434
    %4676 = vmatprep.subr.bf16.mxu0 %v1447
    %4677 = vmatpush1.bf16.msra.mxu0 %v1446
    %4678 = vmatprep.subr.bf16.mxu0 %v1459
    %4679 = vmatpush1.bf16.msra.mxu0 %v1458
    %4680 = vmatprep.subr.bf16.mxu0 %v1471
    %4681 = vmatpush1.bf16.msra.mxu0 %v1470
    %4682 = vmatprep.subr.bf16.mxu0 %v1483
    %4683 = vmatpush1.bf16.msra.mxu0 %v1482
    %4684 = vmatprep.subr.bf16.mxu0 %v1495
    %4685 = vmatpush1.bf16.msra.mxu0 %v1494
    %4686 = vmatprep.subr.bf16.mxu0 %v1507
    %4687 = vmatpush1.bf16.msra.mxu0 %v1506
    %4688 = vmatprep.subr.bf16.mxu0 0
    %4689 = vmatpush1.bf16.msra.mxu0 0
    %4690 = vmatprep.subr.bf16.mxu0 0
    %4691 = vmatpush1.bf16.msra.mxu0 0
    %4692 = vmatprep.subr.bf16.mxu0 0
    %4693 = vmatpush1.bf16.msra.mxu0 0
    %4694 = vmatprep.subr.bf16.mxu0 0
    %4695 = vmatpush1.bf16.msra.mxu0 0
    %4696 = vmatprep.subr.bf16.mxu0 0
    %4697 = vmatpush1.bf16.msra.mxu0 0
    %4698 = vmatprep.subr.bf16.mxu0 0
    %4699 = vmatpush1.bf16.msra.mxu0 0
    %4700 = vmatprep.subr.bf16.mxu0 0
    %4701 = vmatpush1.bf16.msra.mxu0 0
    %4702 = vmatprep.subr.bf16.mxu0 0
    %4703 = vmatpush1.bf16.msra.mxu0 0
    %4704 = vmatprep.mubr.bf16.mxu0 0
    %4705 = vmatmul.mubr.bf16.gmra.mrb[0].mxu0 %v4548
    %v4706 = vpop.f32.mrb[0].mxu0
    %v4707 = vadd.f32 %v4666, %v4706
    %v4708 = vpop.f32.mrb[0].mxu0
    %v4709 = vadd.f32 %v4668, %v4708
    %v4710 = vpop.f32.mrb[0].mxu0
    %v4711 = vpop.f32.mrb[0].mxu0
    %4712 = vdwg.mxu0
    %4713 = vmatprep.subr.bf16.mxu0 %v1233
    %4714 = vmatpush1.bf16.msra.mxu0 %v1232
    %4715 = vmatprep.subr.bf16.mxu0 %v1245
    %4716 = vmatpush1.bf16.msra.mxu0 %v1244
    %4717 = vmatprep.subr.bf16.mxu0 %v1257
    %4718 = vmatpush1.bf16.msra.mxu0 %v1256
    %4719 = vmatprep.subr.bf16.mxu0 %v1269
    %4720 = vmatpush1.bf16.msra.mxu0 %v1268
    %4721 = vmatprep.subr.bf16.mxu0 %v1281
    %4722 = vmatpush1.bf16.msra.mxu0 %v1280
    %4723 = vmatprep.subr.bf16.mxu0 %v1293
    %4724 = vmatpush1.bf16.msra.mxu0 %v1292
    %4725 = vmatprep.subr.bf16.mxu0 %v1305
    %4726 = vmatpush1.bf16.msra.mxu0 %v1304
    %4727 = vmatprep.subr.bf16.mxu0 %v1317
    %4728 = vmatpush1.bf16.msra.mxu0 %v1316
    %4729 = vmatprep.subr.bf16.mxu0 %v1329
    %4730 = vmatpush1.bf16.msra.mxu0 %v1328
    %4731 = vmatprep.subr.bf16.mxu0 %v1341
    %4732 = vmatpush1.bf16.msra.mxu0 %v1340
    %4733 = vmatprep.subr.bf16.mxu0 %v1353
    %4734 = vmatpush1.bf16.msra.mxu0 %v1352
    %4735 = vmatprep.subr.bf16.mxu0 %v1365
    %4736 = vmatpush1.bf16.msra.mxu0 %v1364
    %4737 = vmatprep.subr.bf16.mxu0 %v1377
    %4738 = vmatpush1.bf16.msra.mxu0 %v1376
    %4739 = vmatprep.subr.bf16.mxu0 %v1389
    %4740 = vmatpush1.bf16.msra.mxu0 %v1388
    %4741 = vmatprep.subr.bf16.mxu0 %v1401
    %4742 = vmatpush1.bf16.msra.mxu0 %v1400
    %4743 = vmatprep.subr.bf16.mxu0 %v1413
    %4744 = vmatpush1.bf16.msra.mxu0 %v1412
    %4745 = vmatprep.mubr.bf16.mxu0 %v4547
    %4746 = vmatmul.mubr.bf16.gmra.mrb[0].mxu0 %v4546
    %v4747 = vpop.f32.mrb[0].mxu0
    %v4748 = vadd.f32 0.0, %v4747
    %v4749 = vpop.f32.mrb[0].mxu0
    %v4750 = vadd.f32 0.0, %v4749
    %v4751 = vpop.f32.mrb[0].mxu0
    %v4752 = vpop.f32.mrb[0].mxu0
    %4753 = vdwg.mxu0
    %4754 = vmatprep.subr.bf16.mxu0 %v1425
    %4755 = vmatpush1.bf16.msra.mxu0 %v1424
    %4756 = vmatprep.subr.bf16.mxu0 %v1437
    %4757 = vmatpush1.bf16.msra.mxu0 %v1436
    %4758 = vmatprep.subr.bf16.mxu0 %v1449
    %4759 = vmatpush1.bf16.msra.mxu0 %v1448
    %4760 = vmatprep.subr.bf16.mxu0 %v1461
    %4761 = vmatpush1.bf16.msra.mxu0 %v1460
    %4762 = vmatprep.subr.bf16.mxu0 %v1473
    %4763 = vmatpush1.bf16.msra.mxu0 %v1472
    %4764 = vmatprep.subr.bf16.mxu0 %v1485
    %4765 = vmatpush1.bf16.msra.mxu0 %v1484
    %4766 = vmatprep.subr.bf16.mxu0 %v1497
    %4767 = vmatpush1.bf16.msra.mxu0 %v1496
    %4768 = vmatprep.subr.bf16.mxu0 %v1509
    %4769 = vmatpush1.bf16.msra.mxu0 %v1508
    %4770 = vmatprep.subr.bf16.mxu0 0
    %4771 = vmatpush1.bf16.msra.mxu0 0
    %4772 = vmatprep.subr.bf16.mxu0 0
    %4773 = vmatpush1.bf16.msra.mxu0 0
    %4774 = vmatprep.subr.bf16.mxu0 0
    %4775 = vmatpush1.bf16.msra.mxu0 0
    %4776 = vmatprep.subr.bf16.mxu0 0
    %4777 = vmatpush1.bf16.msra.mxu0 0
    %4778 = vmatprep.subr.bf16.mxu0 0
    %4779 = vmatpush1.bf16.msra.mxu0 0
    %4780 = vmatprep.subr.bf16.mxu0 0
    %4781 = vmatpush1.bf16.msra.mxu0 0
    %4782 = vmatprep.subr.bf16.mxu0 0
    %4783 = vmatpush1.bf16.msra.mxu0 0
    %4784 = vmatprep.subr.bf16.mxu0 0
    %4785 = vmatpush1.bf16.msra.mxu0 0
    %4786 = vmatprep.mubr.bf16.mxu0 0
    %4787 = vmatmul.mubr.bf16.gmra.mrb[0].mxu0 %v4548
    %v4788 = vpop.f32.mrb[0].mxu0
    %v4789 = vadd.f32 %v4748, %v4788
    %v4790 = vpop.f32.mrb[0].mxu0
    %v4791 = vadd.f32 %v4750, %v4790
    %v4792 = vpop.f32.mrb[0].mxu0
    %v4793 = vpop.f32.mrb[0].mxu0
    %4794 = vdwg.mxu0
    %4795 = vmatprep.subr.bf16.mxu0 %v1235
    %4796 = vmatpush1.bf16.msra.mxu0 %v1234
    %4797 = vmatprep.subr.bf16.mxu0 %v1247
    %4798 = vmatpush1.bf16.msra.mxu0 %v1246
    %4799 = vmatprep.subr.bf16.mxu0 %v1259
    %4800 = vmatpush1.bf16.msra.mxu0 %v1258
    %4801 = vmatprep.subr.bf16.mxu0 %v1271
    %4802 = vmatpush1.bf16.msra.mxu0 %v1270
    %4803 = vmatprep.subr.bf16.mxu0 %v1283
    %4804 = vmatpush1.bf16.msra.mxu0 %v1282
    %4805 = vmatprep.subr.bf16.mxu0 %v1295
    %4806 = vmatpush1.bf16.msra.mxu0 %v1294
    %4807 = vmatprep.subr.bf16.mxu0 %v1307
    %4808 = vmatpush1.bf16.msra.mxu0 %v1306
    %4809 = vmatprep.subr.bf16.mxu0 %v1319
    %4810 = vmatpush1.bf16.msra.mxu0 %v1318
    %4811 = vmatprep.subr.bf16.mxu0 %v1331
    %4812 = vmatpush1.bf16.msra.mxu0 %v1330
    %4813 = vmatprep.subr.bf16.mxu0 %v1343
    %4814 = vmatpush1.bf16.msra.mxu0 %v1342
    %4815 = vmatprep.subr.bf16.mxu0 %v1355
    %4816 = vmatpush1.bf16.msra.mxu0 %v1354
    %4817 = vmatprep.subr.bf16.mxu0 %v1367
    %4818 = vmatpush1.bf16.msra.mxu0 %v1366
    %4819 = vmatprep.subr.bf16.mxu0 %v1379
    %4820 = vmatpush1.bf16.msra.mxu0 %v1378
    %4821 = vmatprep.subr.bf16.mxu0 %v1391
    %4822 = vmatpush1.bf16.msra.mxu0 %v1390
    %4823 = vmatprep.subr.bf16.mxu0 %v1403
    %4824 = vmatpush1.bf16.msra.mxu0 %v1402
    %4825 = vmatprep.subr.bf16.mxu0 %v1415
    %4826 = vmatpush1.bf16.msra.mxu0 %v1414
    %4827 = vmatprep.mubr.bf16.mxu0 %v4547
    %4828 = vmatmul.mubr.bf16.gmra.mrb[0].mxu0 %v4546
    %v4829 = vpop.f32.mrb[0].mxu0
    %v4830 = vadd.f32 0.0, %v4829
    %v4831 = vpop.f32.mrb[0].mxu0
    %v4832 = vadd.f32 0.0, %v4831
    %v4833 = vpop.f32.mrb[0].mxu0
    %v4834 = vpop.f32.mrb[0].mxu0
    %4835 = vdwg.mxu0
    %4836 = vmatprep.subr.bf16.mxu0 %v1427
    %4837 = vmatpush1.bf16.msra.mxu0 %v1426
    %4838 = vmatprep.subr.bf16.mxu0 %v1439
    %4839 = vmatpush1.bf16.msra.mxu0 %v1438
    %4840 = vmatprep.subr.bf16.mxu0 %v1451
    %4841 = vmatpush1.bf16.msra.mxu0 %v1450
    %4842 = vmatprep.subr.bf16.mxu0 %v1463
    %4843 = vmatpush1.bf16.msra.mxu0 %v1462
    %4844 = vmatprep.subr.bf16.mxu0 %v1475
    %4845 = vmatpush1.bf16.msra.mxu0 %v1474
    %4846 = vmatprep.subr.bf16.mxu0 %v1487
    %4847 = vmatpush1.bf16.msra.mxu0 %v1486
    %4848 = vmatprep.subr.bf16.mxu0 %v1499
    %4849 = vmatpush1.bf16.msra.mxu0 %v1498
    %4850 = vmatprep.subr.bf16.mxu0 %v1511
    %4851 = vmatpush1.bf16.msra.mxu0 %v1510
    %4852 = vmatprep.subr.bf16.mxu0 0
    %4853 = vmatpush1.bf16.msra.mxu0 0
    %4854 = vmatprep.subr.bf16.mxu0 0
    %4855 = vmatpush1.bf16.msra.mxu0 0
    %4856 = vmatprep.subr.bf16.mxu0 0
    %4857 = vmatpush1.bf16.msra.mxu0 0
    %4858 = vmatprep.subr.bf16.mxu0 0
    %4859 = vmatpush1.bf16.msra.mxu0 0
    %4860 = vmatprep.subr.bf16.mxu0 0
    %4861 = vmatpush1.bf16.msra.mxu0 0
    %4862 = vmatprep.subr.bf16.mxu0 0
    %4863 = vmatpush1.bf16.msra.mxu0 0
    %4864 = vmatprep.subr.bf16.mxu0 0
    %4865 = vmatpush1.bf16.msra.mxu0 0
    %4866 = vmatprep.subr.bf16.mxu0 0
    %4867 = vmatpush1.bf16.msra.mxu0 0
    %4868 = vmatprep.mubr.bf16.mxu0 0
    %4869 = vmatmul.mubr.bf16.gmra.mrb[0].mxu0 %v4548
    %v4870 = vpop.f32.mrb[0].mxu0
    %v4871 = vadd.f32 %v4830, %v4870
    %v4872 = vpop.f32.mrb[0].mxu0
    %v4873 = vadd.f32 %v4832, %v4872
    %v4874 = vpop.f32.mrb[0].mxu0
    %v4875 = vpop.f32.mrb[0].mxu0
    %4876 = vdwg.mxu0
    %4877 = vmatprep.subr.bf16.mxu0 %v1237
    %4878 = vmatpush1.bf16.msra.mxu0 %v1236
    %4879 = vmatprep.subr.bf16.mxu0 %v1249
    %4880 = vmatpush1.bf16.msra.mxu0 %v1248
    %4881 = vmatprep.subr.bf16.mxu0 %v1261
    %4882 = vmatpush1.bf16.msra.mxu0 %v1260
    %4883 = vmatprep.subr.bf16.mxu0 %v1273
    %4884 = vmatpush1.bf16.msra.mxu0 %v1272
    %4885 = vmatprep.subr.bf16.mxu0 %v1285
    %4886 = vmatpush1.bf16.msra.mxu0 %v1284
    %4887 = vmatprep.subr.bf16.mxu0 %v1297
    %4888 = vmatpush1.bf16.msra.mxu0 %v1296
    %4889 = vmatprep.subr.bf16.mxu0 %v1309
    %4890 = vmatpush1.bf16.msra.mxu0 %v1308
    %4891 = vmatprep.subr.bf16.mxu0 %v1321
    %4892 = vmatpush1.bf16.msra.mxu0 %v1320
    %4893 = vmatprep.subr.bf16.mxu0 %v1333
    %4894 = vmatpush1.bf16.msra.mxu0 %v1332
    %4895 = vmatprep.subr.bf16.mxu0 %v1345
    %4896 = vmatpush1.bf16.msra.mxu0 %v1344
    %4897 = vmatprep.subr.bf16.mxu0 %v1357
    %4898 = vmatpush1.bf16.msra.mxu0 %v1356
    %4899 = vmatprep.subr.bf16.mxu0 %v1369
    %4900 = vmatpush1.bf16.msra.mxu0 %v1368
    %4901 = vmatprep.subr.bf16.mxu0 %v1381
    %4902 = vmatpush1.bf16.msra.mxu0 %v1380
    %4903 = vmatprep.subr.bf16.mxu0 %v1393
    %4904 = vmatpush1.bf16.msra.mxu0 %v1392
    %4905 = vmatprep.subr.bf16.mxu0 %v1405
    %4906 = vmatpush1.bf16.msra.mxu0 %v1404
    %4907 = vmatprep.subr.bf16.mxu0 %v1417
    %4908 = vmatpush1.bf16.msra.mxu0 %v1416
    %4909 = vmatprep.mubr.bf16.mxu0 %v4547
    %4910 = vmatmul.mubr.bf16.gmra.mrb[0].mxu0 %v4546
    %v4911 = vpop.f32.mrb[0].mxu0
    %v4912 = vadd.f32 0.0, %v4911
    %v4913 = vpop.f32.mrb[0].mxu0
    %v4914 = vadd.f32 0.0, %v4913
    %v4915 = vpop.f32.mrb[0].mxu0
    %v4916 = vpop.f32.mrb[0].mxu0
    %4917 = vdwg.mxu0
    %4918 = vmatprep.subr.bf16.mxu0 %v1429
    %4919 = vmatpush1.bf16.msra.mxu0 %v1428
    %4920 = vmatprep.subr.bf16.mxu0 %v1441
    %4921 = vmatpush1.bf16.msra.mxu0 %v1440
    %4922 = vmatprep.subr.bf16.mxu0 %v1453
    %4923 = vmatpush1.bf16.msra.mxu0 %v1452
    %4924 = vmatprep.subr.bf16.mxu0 %v1465
    %4925 = vmatpush1.bf16.msra.mxu0 %v1464
    %4926 = vmatprep.subr.bf16.mxu0 %v1477
    %4927 = vmatpush1.bf16.msra.mxu0 %v1476
    %4928 = vmatprep.subr.bf16.mxu0 %v1489
    %4929 = vmatpush1.bf16.msra.mxu0 %v1488
    %4930 = vmatprep.subr.bf16.mxu0 %v1501
    %4931 = vmatpush1.bf16.msra.mxu0 %v1500
    %4932 = vmatprep.subr.bf16.mxu0 %v1513
    %4933 = vmatpush1.bf16.msra.mxu0 %v1512
    %4934 = vmatprep.subr.bf16.mxu0 0
    %4935 = vmatpush1.bf16.msra.mxu0 0
    %4936 = vmatprep.subr.bf16.mxu0 0
    %4937 = vmatpush1.bf16.msra.mxu0 0
    %4938 = vmatprep.subr.bf16.mxu0 0
    %4939 = vmatpush1.bf16.msra.mxu0 0
    %4940 = vmatprep.subr.bf16.mxu0 0
    %4941 = vmatpush1.bf16.msra.mxu0 0
    %4942 = vmatprep.subr.bf16.mxu0 0
    %4943 = vmatpush1.bf16.msra.mxu0 0
    %4944 = vmatprep.subr.bf16.mxu0 0
    %4945 = vmatpush1.bf16.msra.mxu0 0
    %4946 = vmatprep.subr.bf16.mxu0 0
    %4947 = vmatpush1.bf16.msra.mxu0 0
    %4948 = vmatprep.subr.bf16.mxu0 0
    %4949 = vmatpush1.bf16.msra.mxu0 0
    %4950 = vmatprep.mubr.bf16.mxu0 0
    %4951 = vmatmul.mubr.bf16.gmra.mrb[0].mxu0 %v4548
    %v4952 = vpop.f32.mrb[0].mxu0
    %v4953 = vadd.f32 %v4912, %v4952
    %v4954 = vpop.f32.mrb[0].mxu0
    %v4955 = vadd.f32 %v4914, %v4954
    %v4956 = vpop.f32.mrb[0].mxu0
    %v4957 = vpop.f32.mrb[0].mxu0
    %4958 = vdwg.mxu0
    %4959 = vmatprep.subr.bf16.mxu0 %v1239
    %4960 = vmatpush1.bf16.msra.mxu0 %v1238
    %4961 = vmatprep.subr.bf16.mxu0 %v1251
    %4962 = vmatpush1.bf16.msra.mxu0 %v1250
    %4963 = vmatprep.subr.bf16.mxu0 %v1263
    %4964 = vmatpush1.bf16.msra.mxu0 %v1262
    %4965 = vmatprep.subr.bf16.mxu0 %v1275
    %4966 = vmatpush1.bf16.msra.mxu0 %v1274
    %4967 = vmatprep.subr.bf16.mxu0 %v1287
    %4968 = vmatpush1.bf16.msra.mxu0 %v1286
    %4969 = vmatprep.subr.bf16.mxu0 %v1299
    %4970 = vmatpush1.bf16.msra.mxu0 %v1298
    %4971 = vmatprep.subr.bf16.mxu0 %v1311
    %4972 = vmatpush1.bf16.msra.mxu0 %v1310
    %4973 = vmatprep.subr.bf16.mxu0 %v1323
    %4974 = vmatpush1.bf16.msra.mxu0 %v1322
    %4975 = vmatprep.subr.bf16.mxu0 %v1335
    %4976 = vmatpush1.bf16.msra.mxu0 %v1334
    %4977 = vmatprep.subr.bf16.mxu0 %v1347
    %4978 = vmatpush1.bf16.msra.mxu0 %v1346
    %4979 = vmatprep.subr.bf16.mxu0 %v1359
    %4980 = vmatpush1.bf16.msra.mxu0 %v1358
    %4981 = vmatprep.subr.bf16.mxu0 %v1371
    %4982 = vmatpush1.bf16.msra.mxu0 %v1370
    %4983 = vmatprep.subr.bf16.mxu0 %v1383
    %4984 = vmatpush1.bf16.msra.mxu0 %v1382
    %4985 = vmatprep.subr.bf16.mxu0 %v1395
    %4986 = vmatpush1.bf16.msra.mxu0 %v1394
    %4987 = vmatprep.subr.bf16.mxu0 %v1407
    %4988 = vmatpush1.bf16.msra.mxu0 %v1406
    %4989 = vmatprep.subr.bf16.mxu0 %v1419
    %4990 = vmatpush1.bf16.msra.mxu0 %v1418
    %4991 = vmatprep.mubr.bf16.mxu0 %v4547
    %4992 = vmatmul.mubr.bf16.gmra.mrb[0].mxu0 %v4546
    %v4993 = vpop.f32.mrb[0].mxu0
    %v4994 = vadd.f32 0.0, %v4993
    %v4995 = vpop.f32.mrb[0].mxu0
    %v4996 = vadd.f32 0.0, %v4995
    %v4997 = vpop.f32.mrb[0].mxu0
    %v4998 = vpop.f32.mrb[0].mxu0
    %4999 = vdwg.mxu0
    %5000 = vmatprep.subr.bf16.mxu0 %v1431
    %5001 = vmatpush1.bf16.msra.mxu0 %v1430
    %5002 = vmatprep.subr.bf16.mxu0 %v1443
    %5003 = vmatpush1.bf16.msra.mxu0 %v1442
    %5004 = vmatprep.subr.bf16.mxu0 %v1455
    %5005 = vmatpush1.bf16.msra.mxu0 %v1454
    %5006 = vmatprep.subr.bf16.mxu0 %v1467
    %5007 = vmatpush1.bf16.msra.mxu0 %v1466
    %5008 = vmatprep.subr.bf16.mxu0 %v1479
    %5009 = vmatpush1.bf16.msra.mxu0 %v1478
    %5010 = vmatprep.subr.bf16.mxu0 %v1491
    %5011 = vmatpush1.bf16.msra.mxu0 %v1490
    %5012 = vmatprep.subr.bf16.mxu0 %v1503
    %5013 = vmatpush1.bf16.msra.mxu0 %v1502
    %5014 = vmatprep.subr.bf16.mxu0 %v1515
    %5015 = vmatpush1.bf16.msra.mxu0 %v1514
    %5016 = vmatprep.subr.bf16.mxu0 0
    %5017 = vmatpush1.bf16.msra.mxu0 0
    %5018 = vmatprep.subr.bf16.mxu0 0
    %5019 = vmatpush1.bf16.msra.mxu0 0
    %5020 = vmatprep.subr.bf16.mxu0 0
    %5021 = vmatpush1.bf16.msra.mxu0 0
    %5022 = vmatprep.subr.bf16.mxu0 0
    %5023 = vmatpush1.bf16.msra.mxu0 0
    %5024 = vmatprep.subr.bf16.mxu0 0
    %5025 = vmatpush1.bf16.msra.mxu0 0
    %5026 = vmatprep.subr.bf16.mxu0 0
    %5027 = vmatpush1.bf16.msra.mxu0 0
    %5028 = vmatprep.subr.bf16.mxu0 0
    %5029 = vmatpush1.bf16.msra.mxu0 0
    %5030 = vmatprep.subr.bf16.mxu0 0
    %5031 = vmatpush1.bf16.msra.mxu0 0
    %5032 = vmatprep.mubr.bf16.mxu0 0
    %5033 = vmatmul.mubr.bf16.gmra.mrb[0].mxu0 %v4548
    %v5034 = vpop.f32.mrb[0].mxu0
    %v5035 = vadd.f32 %v4994, %v5034
    %v5036 = vpop.f32.mrb[0].mxu0
    %v5037 = vadd.f32 %v4996, %v5036
    %v5038 = vpop.f32.mrb[0].mxu0
    %v5039 = vpop.f32.mrb[0].mxu0
    %5040 = vdwg.mxu0
    %v5042 = vsel %vm2416, %v4545, 0
    %5044 = vmatprep.subr.bf16.mxu0 %v2369
    %5045 = vmatpush1.bf16.msra.mxu0 %v2368
    %5046 = vmatprep.subr.bf16.mxu0 %v2381
    %5047 = vmatpush1.bf16.msra.mxu0 %v2380
    %5048 = vmatprep.subr.bf16.mxu0 0
    %5049 = vmatpush1.bf16.msra.mxu0 0
    %5050 = vmatprep.subr.bf16.mxu0 0
    %5051 = vmatpush1.bf16.msra.mxu0 0
    %5052 = vmatprep.subr.bf16.mxu0 0
    %5053 = vmatpush1.bf16.msra.mxu0 0
    %5054 = vmatprep.subr.bf16.mxu0 0
    %5055 = vmatpush1.bf16.msra.mxu0 0
    %5056 = vmatprep.subr.bf16.mxu0 0
    %5057 = vmatpush1.bf16.msra.mxu0 0
    %5058 = vmatprep.subr.bf16.mxu0 0
    %5059 = vmatpush1.bf16.msra.mxu0 0
    %5060 = vmatprep.subr.bf16.mxu0 0
    %5061 = vmatpush1.bf16.msra.mxu0 0
    %5062 = vmatprep.subr.bf16.mxu0 0
    %5063 = vmatpush1.bf16.msra.mxu0 0
    %5064 = vmatprep.subr.bf16.mxu0 0
    %5065 = vmatpush1.bf16.msra.mxu0 0
    %5066 = vmatprep.subr.bf16.mxu0 0
    %5067 = vmatpush1.bf16.msra.mxu0 0
    %5068 = vmatprep.subr.bf16.mxu0 0
    %5069 = vmatpush1.bf16.msra.mxu0 0
    %5070 = vmatprep.subr.bf16.mxu0 0
    %5071 = vmatpush1.bf16.msra.mxu0 0
    %5072 = vmatprep.subr.bf16.mxu0 0
    %5073 = vmatpush1.bf16.msra.mxu0 0
    %5074 = vmatprep.subr.bf16.mxu0 0
    %5075 = vmatpush1.bf16.msra.mxu0 0
    %5076 = vmatprep.mubr.bf16.mxu0 0
    %5077 = vmatmul.mubr.bf16.gmra.mrb[0].mxu0 %v5042
    %v5078 = vpop.f32.mrb[0].mxu0
    %v5079 = vadd.f32 %v4625, %v5078
    %v5080 = vpop.f32.mrb[0].mxu0
    %v5081 = vadd.f32 %v4627, %v5080
    %v5082 = vpop.f32.mrb[0].mxu0
    %v5083 = vpop.f32.mrb[0].mxu0
    %5084 = vdwg.mxu0
    %5085 = vmatprep.subr.bf16.mxu0 %v2371
    %5086 = vmatpush1.bf16.msra.mxu0 %v2370
    %5087 = vmatprep.subr.bf16.mxu0 %v2383
    %5088 = vmatpush1.bf16.msra.mxu0 %v2382
    %5089 = vmatprep.subr.bf16.mxu0 0
    %5090 = vmatpush1.bf16.msra.mxu0 0
    %5091 = vmatprep.subr.bf16.mxu0 0
    %5092 = vmatpush1.bf16.msra.mxu0 0
    %5093 = vmatprep.subr.bf16.mxu0 0
    %5094 = vmatpush1.bf16.msra.mxu0 0
    %5095 = vmatprep.subr.bf16.mxu0 0
    %5096 = vmatpush1.bf16.msra.mxu0 0
    %5097 = vmatprep.subr.bf16.mxu0 0
    %5098 = vmatpush1.bf16.msra.mxu0 0
    %5099 = vmatprep.subr.bf16.mxu0 0
    %5100 = vmatpush1.bf16.msra.mxu0 0
    %5101 = vmatprep.subr.bf16.mxu0 0
    %5102 = vmatpush1.bf16.msra.mxu0 0
    %5103 = vmatprep.subr.bf16.mxu0 0
    %5104 = vmatpush1.bf16.msra.mxu0 0
    %5105 = vmatprep.subr.bf16.mxu0 0
    %5106 = vmatpush1.bf16.msra.mxu0 0
    %5107 = vmatprep.subr.bf16.mxu0 0
    %5108 = vmatpush1.bf16.msra.mxu0 0
    %5109 = vmatprep.subr.bf16.mxu0 0
    %5110 = vmatpush1.bf16.msra.mxu0 0
    %5111 = vmatprep.subr.bf16.mxu0 0
    %5112 = vmatpush1.bf16.msra.mxu0 0
    %5113 = vmatprep.subr.bf16.mxu0 0
    %5114 = vmatpush1.bf16.msra.mxu0 0
    %5115 = vmatprep.subr.bf16.mxu0 0
    %5116 = vmatpush1.bf16.msra.mxu0 0
    %5117 = vmatprep.mubr.bf16.mxu0 0
    %5118 = vmatmul.mubr.bf16.gmra.mrb[0].mxu0 %v5042
    %v5119 = vpop.f32.mrb[0].mxu0
    %v5120 = vadd.f32 %v4707, %v5119
    %v5121 = vpop.f32.mrb[0].mxu0
    %v5122 = vadd.f32 %v4709, %v5121
    %v5123 = vpop.f32.mrb[0].mxu0
    %v5124 = vpop.f32.mrb[0].mxu0
    %5125 = vdwg.mxu0
    %5126 = vmatprep.subr.bf16.mxu0 %v2373
    %5127 = vmatpush1.bf16.msra.mxu0 %v2372
    %5128 = vmatprep.subr.bf16.mxu0 %v2385
    %5129 = vmatpush1.bf16.msra.mxu0 %v2384
    %5130 = vmatprep.subr.bf16.mxu0 0
    %5131 = vmatpush1.bf16.msra.mxu0 0
    %5132 = vmatprep.subr.bf16.mxu0 0
    %5133 = vmatpush1.bf16.msra.mxu0 0
    %5134 = vmatprep.subr.bf16.mxu0 0
    %5135 = vmatpush1.bf16.msra.mxu0 0
    %5136 = vmatprep.subr.bf16.mxu0 0
    %5137 = vmatpush1.bf16.msra.mxu0 0
    %5138 = vmatprep.subr.bf16.mxu0 0
    %5139 = vmatpush1.bf16.msra.mxu0 0
    %5140 = vmatprep.subr.bf16.mxu0 0
    %5141 = vmatpush1.bf16.msra.mxu0 0
    %5142 = vmatprep.subr.bf16.mxu0 0
    %5143 = vmatpush1.bf16.msra.mxu0 0
    %5144 = vmatprep.subr.bf16.mxu0 0
    %5145 = vmatpush1.bf16.msra.mxu0 0
    %5146 = vmatprep.subr.bf16.mxu0 0
    %5147 = vmatpush1.bf16.msra.mxu0 0
    %5148 = vmatprep.subr.bf16.mxu0 0
    %5149 = vmatpush1.bf16.msra.mxu0 0
    %5150 = vmatprep.subr.bf16.mxu0 0
    %5151 = vmatpush1.bf16.msra.mxu0 0
    %5152 = vmatprep.subr.bf16.mxu0 0
    %5153 = vmatpush1.bf16.msra.mxu0 0
    %5154 = vmatprep.subr.bf16.mxu0 0
    %5155 = vmatpush1.bf16.msra.mxu0 0
    %5156 = vmatprep.subr.bf16.mxu0 0
    %5157 = vmatpush1.bf16.msra.mxu0 0
    %5158 = vmatprep.mubr.bf16.mxu0 0
    %5159 = vmatmul.mubr.bf16.gmra.mrb[0].mxu0 %v5042
    %v5160 = vpop.f32.mrb[0].mxu0
    %v5161 = vadd.f32 %v4789, %v5160
    %v5162 = vpop.f32.mrb[0].mxu0
    %v5163 = vadd.f32 %v4791, %v5162
    %v5164 = vpop.f32.mrb[0].mxu0
    %v5165 = vpop.f32.mrb[0].mxu0
    %5166 = vdwg.mxu0
    %5167 = vmatprep.subr.bf16.mxu0 %v2375
    %5168 = vmatpush1.bf16.msra.mxu0 %v2374
    %5169 = vmatprep.subr.bf16.mxu0 %v2387
    %5170 = vmatpush1.bf16.msra.mxu0 %v2386
    %5171 = vmatprep.subr.bf16.mxu0 0
    %5172 = vmatpush1.bf16.msra.mxu0 0
    %5173 = vmatprep.subr.bf16.mxu0 0
    %5174 = vmatpush1.bf16.msra.mxu0 0
    %5175 = vmatprep.subr.bf16.mxu0 0
    %5176 = vmatpush1.bf16.msra.mxu0 0
    %5177 = vmatprep.subr.bf16.mxu0 0
    %5178 = vmatpush1.bf16.msra.mxu0 0
    %5179 = vmatprep.subr.bf16.mxu0 0
    %5180 = vmatpush1.bf16.msra.mxu0 0
    %5181 = vmatprep.subr.bf16.mxu0 0
    %5182 = vmatpush1.bf16.msra.mxu0 0
    %5183 = vmatprep.subr.bf16.mxu0 0
    %5184 = vmatpush1.bf16.msra.mxu0 0
    %5185 = vmatprep.subr.bf16.mxu0 0
    %5186 = vmatpush1.bf16.msra.mxu0 0
    %5187 = vmatprep.subr.bf16.mxu0 0
    %5188 = vmatpush1.bf16.msra.mxu0 0
    %5189 = vmatprep.subr.bf16.mxu0 0
    %5190 = vmatpush1.bf16.msra.mxu0 0
    %5191 = vmatprep.subr.bf16.mxu0 0
    %5192 = vmatpush1.bf16.msra.mxu0 0
    %5193 = vmatprep.subr.bf16.mxu0 0
    %5194 = vmatpush1.bf16.msra.mxu0 0
    %5195 = vmatprep.subr.bf16.mxu0 0
    %5196 = vmatpush1.bf16.msra.mxu0 0
    %5197 = vmatprep.subr.bf16.mxu0 0
    %5198 = vmatpush1.bf16.msra.mxu0 0
    %5199 = vmatprep.mubr.bf16.mxu0 0
    %5200 = vmatmul.mubr.bf16.gmra.mrb[0].mxu0 %v5042
    %v5201 = vpop.f32.mrb[0].mxu0
    %v5202 = vadd.f32 %v4871, %v5201
    %v5203 = vpop.f32.mrb[0].mxu0
    %v5204 = vadd.f32 %v4873, %v5203
    %v5205 = vpop.f32.mrb[0].mxu0
    %v5206 = vpop.f32.mrb[0].mxu0
    %5207 = vdwg.mxu0
    %5208 = vmatprep.subr.bf16.mxu0 %v2377
    %5209 = vmatpush1.bf16.msra.mxu0 %v2376
    %5210 = vmatprep.subr.bf16.mxu0 %v2389
    %5211 = vmatpush1.bf16.msra.mxu0 %v2388
    %5212 = vmatprep.subr.bf16.mxu0 0
    %5213 = vmatpush1.bf16.msra.mxu0 0
    %5214 = vmatprep.subr.bf16.mxu0 0
    %5215 = vmatpush1.bf16.msra.mxu0 0
    %5216 = vmatprep.subr.bf16.mxu0 0
    %5217 = vmatpush1.bf16.msra.mxu0 0
    %5218 = vmatprep.subr.bf16.mxu0 0
    %5219 = vmatpush1.bf16.msra.mxu0 0
    %5220 = vmatprep.subr.bf16.mxu0 0
    %5221 = vmatpush1.bf16.msra.mxu0 0
    %5222 = vmatprep.subr.bf16.mxu0 0
    %5223 = vmatpush1.bf16.msra.mxu0 0
    %5224 = vmatprep.subr.bf16.mxu0 0
    %5225 = vmatpush1.bf16.msra.mxu0 0
    %5226 = vmatprep.subr.bf16.mxu0 0
    %5227 = vmatpush1.bf16.msra.mxu0 0
    %5228 = vmatprep.subr.bf16.mxu0 0
    %5229 = vmatpush1.bf16.msra.mxu0 0
    %5230 = vmatprep.subr.bf16.mxu0 0
    %5231 = vmatpush1.bf16.msra.mxu0 0
    %5232 = vmatprep.subr.bf16.mxu0 0
    %5233 = vmatpush1.bf16.msra.mxu0 0
    %5234 = vmatprep.subr.bf16.mxu0 0
    %5235 = vmatpush1.bf16.msra.mxu0 0
    %5236 = vmatprep.subr.bf16.mxu0 0
    %5237 = vmatpush1.bf16.msra.mxu0 0
    %5238 = vmatprep.subr.bf16.mxu0 0
    %5239 = vmatpush1.bf16.msra.mxu0 0
    %5240 = vmatprep.mubr.bf16.mxu0 0
    %5241 = vmatmul.mubr.bf16.gmra.mrb[0].mxu0 %v5042
    %v5242 = vpop.f32.mrb[0].mxu0
    %v5243 = vadd.f32 %v4953, %v5242
    %v5244 = vpop.f32.mrb[0].mxu0
    %v5245 = vadd.f32 %v4955, %v5244
    %v5246 = vpop.f32.mrb[0].mxu0
    %v5247 = vpop.f32.mrb[0].mxu0
    %5248 = vdwg.mxu0
    %5249 = vmatprep.subr.bf16.mxu0 %v2379
    %5250 = vmatpush1.bf16.msra.mxu0 %v2378
    %5251 = vmatprep.subr.bf16.mxu0 %v2391
    %5252 = vmatpush1.bf16.msra.mxu0 %v2390
    %5253 = vmatprep.subr.bf16.mxu0 0
    %5254 = vmatpush1.bf16.msra.mxu0 0
    %5255 = vmatprep.subr.bf16.mxu0 0
    %5256 = vmatpush1.bf16.msra.mxu0 0
    %5257 = vmatprep.subr.bf16.mxu0 0
    %5258 = vmatpush1.bf16.msra.mxu0 0
    %5259 = vmatprep.subr.bf16.mxu0 0
    %5260 = vmatpush1.bf16.msra.mxu0 0
    %5261 = vmatprep.subr.bf16.mxu0 0
    %5262 = vmatpush1.bf16.msra.mxu0 0
    %5263 = vmatprep.subr.bf16.mxu0 0
    %5264 = vmatpush1.bf16.msra.mxu0 0
    %5265 = vmatprep.subr.bf16.mxu0 0
    %5266 = vmatpush1.bf16.msra.mxu0 0
    %5267 = vmatprep.subr.bf16.mxu0 0
    %5268 = vmatpush1.bf16.msra.mxu0 0
    %5269 = vmatprep.subr.bf16.mxu0 0
    %5270 = vmatpush1.bf16.msra.mxu0 0
    %5271 = vmatprep.subr.bf16.mxu0 0
    %5272 = vmatpush1.bf16.msra.mxu0 0
    %5273 = vmatprep.subr.bf16.mxu0 0
    %5274 = vmatpush1.bf16.msra.mxu0 0
    %5275 = vmatprep.subr.bf16.mxu0 0
    %5276 = vmatpush1.bf16.msra.mxu0 0
    %5277 = vmatprep.subr.bf16.mxu0 0
    %5278 = vmatpush1.bf16.msra.mxu0 0
    %5279 = vmatprep.subr.bf16.mxu0 0
    %5280 = vmatpush1.bf16.msra.mxu0 0
    %5281 = vmatprep.mubr.bf16.mxu0 0
    %5282 = vmatmul.mubr.bf16.gmra.mrb[0].mxu0 %v5042
    %v5283 = vpop.f32.mrb[0].mxu0
    %v5284 = vadd.f32 %v5035, %v5283
    %v5285 = vpop.f32.mrb[0].mxu0
    %v5286 = vadd.f32 %v5037, %v5285
    %v5287 = vpop.f32.mrb[0].mxu0
    %v5288 = vpop.f32.mrb[0].mxu0
    %5289 = vdwg.mxu0
    %v5290 = vadd.f32 %v5079, %v2671
    %v5291 = vadd.f32 %v5081, %v2675
    %v5292 = vadd.f32 %v5120, %v2679
    %v5293 = vadd.f32 %v5122, %v2683
    %v5294 = vadd.f32 %v5161, %v2687
    %v5295 = vadd.f32 %v5163, %v2691
    %v5296 = vadd.f32 %v5202, %v2695
    %v5297 = vadd.f32 %v5204, %v2699
    %v5298 = vadd.f32 %v5243, %v2703
    %v5299 = vadd.f32 %v5245, %v2707
    %v5300 = vadd.f32 %v5284, %v2711
    %v5301 = vadd.f32 %v5286, %v2715
    %v5302 = vmul.f32 %v5290, 0.5
    %v5303 = vmul.f32 %v5291, 0.5
    %v5304 = vmul.f32 %v5292, 0.5
    %v5305 = vtanh.pop %v5302
    %v5306 = vtanh.pop %v5303
    %v5307 = vtanh.pop %v5304
    %v5308 = vmul.f32 %v5305, 0.5
    %v5309 = vmul.f32 %v5306, 0.5
    %v5310 = vmul.f32 %v5307, 0.5
    %v5311 = vadd.f32 %v5308, 0.5
    %v5312 = vadd.f32 %v5309, 0.5
    %v5313 = vadd.f32 %v5310, 0.5
    %v5314 = vmul.f32 %v5293, 0.5
    %v5315 = vmul.f32 %v5294, 0.5
    %v5316 = vmul.f32 %v5295, 0.5
    %v5317 = vtanh.pop %v5314
    %v5318 = vtanh.pop %v5315
    %v5319 = vtanh.pop %v5316
    %v5320 = vmul.f32 %v5317, 0.5
    %v5321 = vmul.f32 %v5318, 0.5
    %v5322 = vmul.f32 %v5319, 0.5
    %v5323 = vadd.f32 %v5320, 0.5
    %v5324 = vadd.f32 %v5321, 0.5
    %v5325 = vadd.f32 %v5322, 0.5
    %v5326 = vtanh.pop %v5296
    %v5327 = vtanh.pop %v5297
    %v5328 = vtanh.pop %v5298
    %v5329 = vmul.f32 %v5299, 0.5
    %v5330 = vmul.f32 %v5300, 0.5
    %v5331 = vmul.f32 %v5301, 0.5
    %v5332 = vtanh.pop %v5329
    %v5333 = vtanh.pop %v5330
    %v5334 = vtanh.pop %v5331
    %v5335 = vmul.f32 %v5332, 0.5
    %v5336 = vmul.f32 %v5333, 0.5
    %v5337 = vmul.f32 %v5334, 0.5
    %v5338 = vadd.f32 %v5335, 0.5
    %v5339 = vadd.f32 %v5336, 0.5
    %v5340 = vadd.f32 %v5337, 0.5
    %v5341 = vmul.f32 %v5323, %v4493
    %v5342 = vmul.f32 %v5324, %v4494
    %v5343 = vmul.f32 %v5325, %v4495
    %v5344 = vmul.f32 %v5311, %v5326
    %v5345 = vmul.f32 %v5312, %v5327
    %v5346 = vmul.f32 %v5313, %v5328
    %v5347 = vadd.f32 %v5341, %v5344
    %v5348 = vadd.f32 %v5342, %v5345
    %v5349 = vadd.f32 %v5343, %v5346
    %v5350 = vtanh.pop %v5347
    %v5351 = vtanh.pop %v5348
    %v5352 = vtanh.pop %v5349
    %v5353 = vmul.f32 %v5338, %v5350
    %v5354 = vmul.f32 %v5339, %v5351
    %v5355 = vmul.f32 %v5340, %v5352
    %v5356 = vtanh.pop %v5353
    %v5357 = vtanh.pop %v5354
    %v5358 = vtanh.pop %v5355
    %v5359 = vmax.f32 %v5356, 0.0
    %v5360 = vmax.f32 %v5357, 0.0
    %v5361 = vmax.f32 %v5358, 0.0
    %s5362 = sld [smem:[#allocation2 + $0x9]]
    %v5363 = vstv %s5362
    %v5364 = vmul.f32 %v5359, %v5363
    %v5365 = vadd.f32 %v4535, %v5364
    %s5366 = sld [smem:[#allocation2 + $0xa]]
    %v5367 = vstv %s5366
    %v5368 = vmul.f32 %v5359, %v5367
    %v5369 = vadd.f32 %v4539, %v5368
    %s5370 = sld [smem:[#allocation2 + $0xb]]
    %v5371 = vstv %s5370
    %v5372 = vmul.f32 %v5359, %v5371
    %v5373 = vadd.f32 %v4543, %v5372
    %s5374 = sld [smem:[#allocation2 + $0x15]]
    %v5375 = vstv %s5374
    %v5376 = vmul.f32 %v5360, %v5375
    %v5377 = vadd.f32 %v5365, %v5376
    %s5378 = sld [smem:[#allocation2 + $0x16]]
    %v5379 = vstv %s5378
    %v5380 = vmul.f32 %v5360, %v5379
    %v5381 = vadd.f32 %v5369, %v5380
    %s5382 = sld [smem:[#allocation2 + $0x17]]
    %v5383 = vstv %s5382
    %v5384 = vmul.f32 %v5360, %v5383
    %v5385 = vadd.f32 %v5373, %v5384
    %s5386 = sld [smem:[#allocation2 + $0x21]]
    %v5387 = vstv %s5386
    %v5388 = vmul.f32 %v5361, %v5387
    %v5389 = vadd.f32 %v5377, %v5388
    %s5390 = sld [smem:[#allocation2 + $0x22]]
    %v5391 = vstv %s5390
    %v5392 = vmul.f32 %v5361, %v5391
    %v5393 = vadd.f32 %v5381, %v5392
    %s5394 = sld [smem:[#allocation2 + $0x23]]
    %v5395 = vstv %s5394
    %v5396 = vmul.f32 %v5361, %v5395
    %v5397 = vadd.f32 %v5385, %v5396
    %s5398 = sld [smem:[#allocation4]]
    %v5399 = vstv %s5398
    %v5400 = vadd.f32 %v5389, %v5399
    %5401 = vst [vmem:[%s6] sm:$0xff] %v5400
    %s5402 = sld [smem:[#allocation4 + $0x1]]
    %v5403 = vstv %s5402
    %v5404 = vadd.f32 %v5393, %v5403
    %5405 = vst [vmem:[%s6 + $0x8] sm:$0xff] %v5404
    %s5406 = sld [smem:[#allocation4 + $0x2]]
    %v5407 = vstv %s5406
    %v5408 = vadd.f32 %v5397, %v5407
    %5409 = vst [vmem:[%s6 + $0x10] sm:$0xff] %v5408
    // Predicated region
    $region34: #{stgcn_forward.1} parent=1 // pred_check
      _
    $region35: #{stgcn_forward.1} parent=1 // pred_check_branch
      %5411 = sbr.rel (0) target = $region37
    $region36: #{stgcn_forward.1} parent=1 // pred_region
      _
    $region37: #{stgcn_forward.1} parent=1 // pred_fallthru
      _
    // Predicated region
    $region38: #{stgcn_forward.1} parent=1 // pred_check
      _
    $region39: #{stgcn_forward.1} parent=1 // pred_check_branch
      %5413 = sbr.rel (0) target = $region41
    $region40: #{stgcn_forward.1} parent=1 // pred_region
      _
    $region41: #{stgcn_forward.1} parent=1 // pred_fallthru
      _
    %5414 = vsyncpa [#allocation3], 1
    %5415 = vsyncpa [#allocation5], 1

</llo_original>
